<compile_context>
chip_gen: v5e
topology: v5e:2x2
jax: 0.10.0
libtpu: 0.0.40
codegen_flags: <defaults>
</compile_context>

<pallas_src>
import jax
import jax.numpy as jnp
from jax.experimental import pallas as pl
from jax.experimental.pallas import tpu as pltpu

K = 11                    # kernel size
DIL = 2                   # dilation
EFF = 1 + (K - 1) * DIL   # effective receptive field = 21


def _conv_tanh_kernel(x_ref, w_ref, o_ref):
    # x_ref: (Bt, H, W) VMEM tile, w_ref: (K*K,) SMEM, o_ref: (Bt, Ho, Wo) VMEM tile
    Bt, Ho, Wo = o_ref.shape
    acc = jnp.zeros((Bt, Ho, Wo), jnp.float32)
    for q in range(K):
        # One cross-lane (XLU) shift of the whole tile per q; everything inside
        # the p loop is a sublane-row-offset load of this shifted tile.
        xq = x_ref[:, :, q * DIL:q * DIL + Wo]            # (Bt, H, Wo)
        part = xq[:, 0:Ho, :].astype(jnp.float32) * w_ref[q]   # p = 0
        for p in range(1, K):
            win = xq[:, p * DIL:p * DIL + Ho, :]
            part = part + win.astype(jnp.float32) * w_ref[p * K + q]
        acc = acc + part                                   # per-q partial: caps live set
    o_ref[...] = jnp.tanh(acc).astype(o_ref.dtype)


def _pick_batch_tile(B, H, W, Ho, Wo, vmem_budget_bytes=4 << 20):
    """Largest divisor of B whose double-buffered f32 in+out block fits the budget,
    while keeping >= 2 grid steps when B >= 2 (v7x megacore sharding)."""
    per_img = 2 * 4 * (H * W + Ho * Wo)          # double-buffered in + out, f32
    cap = max(1, vmem_budget_bytes // per_img)
    cap = min(cap, max(1, -(-B // 2)))           # leave >= 2 grid steps if possible
    bt = 1
    for d in range(1, B + 1):
        if B % d == 0 and d <= cap:
            bt = d
    return bt


def conv2d_tanh(x_nchw, weight, *, batch_tile=None):
    """x_nchw: (B, 1, H, W) float32; weight: (1, 1, 11, 11) float32."""
    B, C, H, W = x_nchw.shape
    assert C == 1, "module is Conv2d(1, 1, ...)"
    assert H >= EFF and W >= EFF, "spatial dims must be >= effective kernel (21)"
    Ho = H - EFF + 1
    Wo = W - EFF + 1

    x = x_nchw.reshape(B, H, W)
    w = weight.reshape(K * K)                    # 1-D SMEM: pads to 512 B, not ~8 KiB

    Bt = batch_tile if batch_tile is not None else _pick_batch_tile(B, H, W, Ho, Wo)
    Bp = -(-B // Bt) * Bt                        # pad batch to a multiple of Bt
    if Bp != B:
        x = jnp.pad(x, ((0, Bp - B), (0, 0), (0, 0)))
    grid = (Bp // Bt,)

    out = pl.pallas_call(
        _conv_tanh_kernel,
        out_shape=jax.ShapeDtypeStruct((Bp, Ho, Wo), x.dtype),
        grid_spec=pltpu.PrefetchScalarGridSpec(
            num_scalar_prefetch=0,
            grid=grid,
            in_specs=[
                pl.BlockSpec((Bt, H, W), lambda b: (b, 0, 0)),
                pl.BlockSpec(memory_space=pltpu.MemorySpace.SMEM),
            ],
            out_specs=pl.BlockSpec((Bt, Ho, Wo), lambda b: (b, 0, 0)),
        ),
        compiler_params=pltpu.CompilerParams(
            dimension_semantics=("parallel",)),
    )(x, w)
    return out[:B].reshape(B, 1, Ho, Wo)


if __name__ == "__main__":
    key = jax.random.PRNGKey(0)
    kx, kw = jax.random.split(key)
    # Small shapes consistent with the module (C_in = C_out = 1, spatial > 21);
    # W=148 keeps the output width Wo=128 lane-dense (unmasked stores).
    B, H, W = 2, 64, 148
    x = jax.random.uniform(kx, (B, 1, H, W), dtype=jnp.float32)
    # Deterministic Conv2d(1, 1, 11, dilation=2, bias=False)-style weight init.
    fan_in = 1 * K * K
    bound = 1.0 / (fan_in ** 0.5)
    weight = jax.random.uniform(
        kw, (1, 1, K, K), dtype=jnp.float32, minval=-bound, maxval=bound)

    z = conv2d_tanh(x, weight)
    jax.block_until_ready(z)

    # Reference check with XLA's dilated conv + tanh.
    ref = jnp.tanh(jax.lax.conv_general_dilated(
        x, weight, window_strides=(1, 1), padding="VALID",
        rhs_dilation=(DIL, DIL),
        dimension_numbers=("NCHW", "OIHW", "NCHW")))
    assert z.shape == ref.shape
    assert jnp.allclose(z, ref, rtol=1e-4, atol=1e-4)

    print("KERNEL_OK")
</pallas_src>

<mosaic_0001>
module attributes {stable_mosaic.version = 11 : i64} {
  func.func @_conv_tanh_kernel(%arg0: i32, %arg1: memref<1x64x148xf32, #tpu.memory_space<vmem>>, %arg2: memref<121xf32, #tpu.memory_space<smem>>, %arg3: memref<1x44x128xf32, #tpu.memory_space<vmem>>) attributes {dimension_semantics = [#tpu.dimension_semantics<parallel>], iteration_bounds = array<i64: 2>, scalar_prefetch = 0 : i64, scratch_operands = 0 : i64, tpu.core_type = #tpu.core_type<tc>, window_params = [{transform_indices = @transform_0, window_bounds = array<i64: 1, 64, 148>}, {transform_indices = @transform_1, window_bounds = array<i64: 121>}, {transform_indices = @transform_2, window_bounds = array<i64: 1, 44, 128>}]} {
    %cst = arith.constant 0.000000e+00 : f32
    %0 = vector.broadcast %cst : f32 to vector<1x44x128xf32>
    %c0 = arith.constant 0 : index
    %c0_0 = arith.constant 0 : index
    %c0_1 = arith.constant 0 : index
    %1 = vector.load %arg1[%c0, %c0_0, %c0_1] : memref<1x64x148xf32, #tpu.memory_space<vmem>>, vector<1x64x128xf32>
    %2 = vector.extract_strided_slice %1 {offsets = [0, 0, 0], sizes = [1, 44, 128], strides = [1, 1, 1]} : vector<1x64x128xf32> to vector<1x44x128xf32>
    %c0_2 = arith.constant 0 : index
    %3 = memref.load %arg2[%c0_2] : memref<121xf32, #tpu.memory_space<smem>>
    %4 = vector.broadcast %3 : f32 to vector<1x44x128xf32>
    %5 = arith.mulf %2, %4 : vector<1x44x128xf32>
    %6 = vector.extract_strided_slice %1 {offsets = [0, 2, 0], sizes = [1, 44, 128], strides = [1, 1, 1]} : vector<1x64x128xf32> to vector<1x44x128xf32>
    %c11 = arith.constant 11 : index
    %7 = memref.load %arg2[%c11] : memref<121xf32, #tpu.memory_space<smem>>
    %8 = vector.broadcast %7 : f32 to vector<1x44x128xf32>
    %9 = arith.mulf %6, %8 : vector<1x44x128xf32>
    %10 = arith.addf %5, %9 : vector<1x44x128xf32>
    %11 = vector.extract_strided_slice %1 {offsets = [0, 4, 0], sizes = [1, 44, 128], strides = [1, 1, 1]} : vector<1x64x128xf32> to vector<1x44x128xf32>
    %c22 = arith.constant 22 : index
    %12 = memref.load %arg2[%c22] : memref<121xf32, #tpu.memory_space<smem>>
    %13 = vector.broadcast %12 : f32 to vector<1x44x128xf32>
    %14 = arith.mulf %11, %13 : vector<1x44x128xf32>
    %15 = arith.addf %10, %14 : vector<1x44x128xf32>
    %16 = vector.extract_strided_slice %1 {offsets = [0, 6, 0], sizes = [1, 44, 128], strides = [1, 1, 1]} : vector<1x64x128xf32> to vector<1x44x128xf32>
    %c33 = arith.constant 33 : index
    %17 = memref.load %arg2[%c33] : memref<121xf32, #tpu.memory_space<smem>>
    %18 = vector.broadcast %17 : f32 to vector<1x44x128xf32>
    %19 = arith.mulf %16, %18 : vector<1x44x128xf32>
    %20 = arith.addf %15, %19 : vector<1x44x128xf32>
    %21 = vector.extract_strided_slice %1 {offsets = [0, 8, 0], sizes = [1, 44, 128], strides = [1, 1, 1]} : vector<1x64x128xf32> to vector<1x44x128xf32>
    %c44 = arith.constant 44 : index
    %22 = memref.load %arg2[%c44] : memref<121xf32, #tpu.memory_space<smem>>
    %23 = vector.broadcast %22 : f32 to vector<1x44x128xf32>
    %24 = arith.mulf %21, %23 : vector<1x44x128xf32>
    %25 = arith.addf %20, %24 : vector<1x44x128xf32>
    %26 = vector.extract_strided_slice %1 {offsets = [0, 10, 0], sizes = [1, 44, 128], strides = [1, 1, 1]} : vector<1x64x128xf32> to vector<1x44x128xf32>
    %c55 = arith.constant 55 : index
    %27 = memref.load %arg2[%c55] : memref<121xf32, #tpu.memory_space<smem>>
    %28 = vector.broadcast %27 : f32 to vector<1x44x128xf32>
    %29 = arith.mulf %26, %28 : vector<1x44x128xf32>
    %30 = arith.addf %25, %29 : vector<1x44x128xf32>
    %31 = vector.extract_strided_slice %1 {offsets = [0, 12, 0], sizes = [1, 44, 128], strides = [1, 1, 1]} : vector<1x64x128xf32> to vector<1x44x128xf32>
    %c66 = arith.constant 66 : index
    %32 = memref.load %arg2[%c66] : memref<121xf32, #tpu.memory_space<smem>>
    %33 = vector.broadcast %32 : f32 to vector<1x44x128xf32>
    %34 = arith.mulf %31, %33 : vector<1x44x128xf32>
    %35 = arith.addf %30, %34 : vector<1x44x128xf32>
    %36 = vector.extract_strided_slice %1 {offsets = [0, 14, 0], sizes = [1, 44, 128], strides = [1, 1, 1]} : vector<1x64x128xf32> to vector<1x44x128xf32>
    %c77 = arith.constant 77 : index
    %37 = memref.load %arg2[%c77] : memref<121xf32, #tpu.memory_space<smem>>
    %38 = vector.broadcast %37 : f32 to vector<1x44x128xf32>
    %39 = arith.mulf %36, %38 : vector<1x44x128xf32>
    %40 = arith.addf %35, %39 : vector<1x44x128xf32>
    %41 = vector.extract_strided_slice %1 {offsets = [0, 16, 0], sizes = [1, 44, 128], strides = [1, 1, 1]} : vector<1x64x128xf32> to vector<1x44x128xf32>
    %c88 = arith.constant 88 : index
    %42 = memref.load %arg2[%c88] : memref<121xf32, #tpu.memory_space<smem>>
    %43 = vector.broadcast %42 : f32 to vector<1x44x128xf32>
    %44 = arith.mulf %41, %43 : vector<1x44x128xf32>
    %45 = arith.addf %40, %44 : vector<1x44x128xf32>
    %46 = vector.extract_strided_slice %1 {offsets = [0, 18, 0], sizes = [1, 44, 128], strides = [1, 1, 1]} : vector<1x64x128xf32> to vector<1x44x128xf32>
    %c99 = arith.constant 99 : index
    %47 = memref.load %arg2[%c99] : memref<121xf32, #tpu.memory_space<smem>>
    %48 = vector.broadcast %47 : f32 to vector<1x44x128xf32>
    %49 = arith.mulf %46, %48 : vector<1x44x128xf32>
    %50 = arith.addf %45, %49 : vector<1x44x128xf32>
    %51 = vector.extract_strided_slice %1 {offsets = [0, 20, 0], sizes = [1, 44, 128], strides = [1, 1, 1]} : vector<1x64x128xf32> to vector<1x44x128xf32>
    %c110 = arith.constant 110 : index
    %52 = memref.load %arg2[%c110] : memref<121xf32, #tpu.memory_space<smem>>
    %53 = vector.broadcast %52 : f32 to vector<1x44x128xf32>
    %54 = arith.mulf %51, %53 : vector<1x44x128xf32>
    %55 = arith.addf %50, %54 : vector<1x44x128xf32>
    %56 = arith.addf %0, %55 : vector<1x44x128xf32>
    %c0_3 = arith.constant 0 : index
    %c0_4 = arith.constant 0 : index
    %c2 = arith.constant 2 : index
    %57 = vector.load %arg1[%c0_3, %c0_4, %c2] : memref<1x64x148xf32, #tpu.memory_space<vmem>>, vector<1x64x128xf32>
    %58 = vector.extract_strided_slice %57 {offsets = [0, 0, 0], sizes = [1, 44, 128], strides = [1, 1, 1]} : vector<1x64x128xf32> to vector<1x44x128xf32>
    %c1 = arith.constant 1 : index
    %59 = memref.load %arg2[%c1] : memref<121xf32, #tpu.memory_space<smem>>
    %60 = vector.broadcast %59 : f32 to vector<1x44x128xf32>
    %61 = arith.mulf %58, %60 : vector<1x44x128xf32>
    %62 = vector.extract_strided_slice %57 {offsets = [0, 2, 0], sizes = [1, 44, 128], strides = [1, 1, 1]} : vector<1x64x128xf32> to vector<1x44x128xf32>
    %c12 = arith.constant 12 : index
    %63 = memref.load %arg2[%c12] : memref<121xf32, #tpu.memory_space<smem>>
    %64 = vector.broadcast %63 : f32 to vector<1x44x128xf32>
    %65 = arith.mulf %62, %64 : vector<1x44x128xf32>
    %66 = arith.addf %61, %65 : vector<1x44x128xf32>
    %67 = vector.extract_strided_slice %57 {offsets = [0, 4, 0], sizes = [1, 44, 128], strides = [1, 1, 1]} : vector<1x64x128xf32> to vector<1x44x128xf32>
    %c23 = arith.constant 23 : index
    %68 = memref.load %arg2[%c23] : memref<121xf32, #tpu.memory_space<smem>>
    %69 = vector.broadcast %68 : f32 to vector<1x44x128xf32>
    %70 = arith.mulf %67, %69 : vector<1x44x128xf32>
    %71 = arith.addf %66, %70 : vector<1x44x128xf32>
    %72 = vector.extract_strided_slice %57 {offsets = [0, 6, 0], sizes = [1, 44, 128], strides = [1, 1, 1]} : vector<1x64x128xf32> to vector<1x44x128xf32>
    %c34 = arith.constant 34 : index
    %73 = memref.load %arg2[%c34] : memref<121xf32, #tpu.memory_space<smem>>
    %74 = vector.broadcast %73 : f32 to vector<1x44x128xf32>
    %75 = arith.mulf %72, %74 : vector<1x44x128xf32>
    %76 = arith.addf %71, %75 : vector<1x44x128xf32>
    %77 = vector.extract_strided_slice %57 {offsets = [0, 8, 0], sizes = [1, 44, 128], strides = [1, 1, 1]} : vector<1x64x128xf32> to vector<1x44x128xf32>
    %c45 = arith.constant 45 : index
    %78 = memref.load %arg2[%c45] : memref<121xf32, #tpu.memory_space<smem>>
    %79 = vector.broadcast %78 : f32 to vector<1x44x128xf32>
    %80 = arith.mulf %77, %79 : vector<1x44x128xf32>
    %81 = arith.addf %76, %80 : vector<1x44x128xf32>
    %82 = vector.extract_strided_slice %57 {offsets = [0, 10, 0], sizes = [1, 44, 128], strides = [1, 1, 1]} : vector<1x64x128xf32> to vector<1x44x128xf32>
    %c56 = arith.constant 56 : index
    %83 = memref.load %arg2[%c56] : memref<121xf32, #tpu.memory_space<smem>>
    %84 = vector.broadcast %83 : f32 to vector<1x44x128xf32>
    %85 = arith.mulf %82, %84 : vector<1x44x128xf32>
    %86 = arith.addf %81, %85 : vector<1x44x128xf32>
    %87 = vector.extract_strided_slice %57 {offsets = [0, 12, 0], sizes = [1, 44, 128], strides = [1, 1, 1]} : vector<1x64x128xf32> to vector<1x44x128xf32>
    %c67 = arith.constant 67 : index
    %88 = memref.load %arg2[%c67] : memref<121xf32, #tpu.memory_space<smem>>
    %89 = vector.broadcast %88 : f32 to vector<1x44x128xf32>
    %90 = arith.mulf %87, %89 : vector<1x44x128xf32>
    %91 = arith.addf %86, %90 : vector<1x44x128xf32>
    %92 = vector.extract_strided_slice %57 {offsets = [0, 14, 0], sizes = [1, 44, 128], strides = [1, 1, 1]} : vector<1x64x128xf32> to vector<1x44x128xf32>
    %c78 = arith.constant 78 : index
    %93 = memref.load %arg2[%c78] : memref<121xf32, #tpu.memory_space<smem>>
    %94 = vector.broadcast %93 : f32 to vector<1x44x128xf32>
    %95 = arith.mulf %92, %94 : vector<1x44x128xf32>
    %96 = arith.addf %91, %95 : vector<1x44x128xf32>
    %97 = vector.extract_strided_slice %57 {offsets = [0, 16, 0], sizes = [1, 44, 128], strides = [1, 1, 1]} : vector<1x64x128xf32> to vector<1x44x128xf32>
    %c89 = arith.constant 89 : index
    %98 = memref.load %arg2[%c89] : memref<121xf32, #tpu.memory_space<smem>>
    %99 = vector.broadcast %98 : f32 to vector<1x44x128xf32>
    %100 = arith.mulf %97, %99 : vector<1x44x128xf32>
    %101 = arith.addf %96, %100 : vector<1x44x128xf32>
    %102 = vector.extract_strided_slice %57 {offsets = [0, 18, 0], sizes = [1, 44, 128], strides = [1, 1, 1]} : vector<1x64x128xf32> to vector<1x44x128xf32>
    %c100 = arith.constant 100 : index
    %103 = memref.load %arg2[%c100] : memref<121xf32, #tpu.memory_space<smem>>
    %104 = vector.broadcast %103 : f32 to vector<1x44x128xf32>
    %105 = arith.mulf %102, %104 : vector<1x44x128xf32>
    %106 = arith.addf %101, %105 : vector<1x44x128xf32>
    %107 = vector.extract_strided_slice %57 {offsets = [0, 20, 0], sizes = [1, 44, 128], strides = [1, 1, 1]} : vector<1x64x128xf32> to vector<1x44x128xf32>
    %c111 = arith.constant 111 : index
    %108 = memref.load %arg2[%c111] : memref<121xf32, #tpu.memory_space<smem>>
    %109 = vector.broadcast %108 : f32 to vector<1x44x128xf32>
    %110 = arith.mulf %107, %109 : vector<1x44x128xf32>
    %111 = arith.addf %106, %110 : vector<1x44x128xf32>
    %112 = arith.addf %56, %111 : vector<1x44x128xf32>
    %c0_5 = arith.constant 0 : index
    %c0_6 = arith.constant 0 : index
    %c4 = arith.constant 4 : index
    %113 = vector.load %arg1[%c0_5, %c0_6, %c4] : memref<1x64x148xf32, #tpu.memory_space<vmem>>, vector<1x64x128xf32>
    %114 = vector.extract_strided_slice %113 {offsets = [0, 0, 0], sizes = [1, 44, 128], strides = [1, 1, 1]} : vector<1x64x128xf32> to vector<1x44x128xf32>
    %c2_7 = arith.constant 2 : index
    %115 = memref.load %arg2[%c2_7] : memref<121xf32, #tpu.memory_space<smem>>
    %116 = vector.broadcast %115 : f32 to vector<1x44x128xf32>
    %117 = arith.mulf %114, %116 : vector<1x44x128xf32>
    %118 = vector.extract_strided_slice %113 {offsets = [0, 2, 0], sizes = [1, 44, 128], strides = [1, 1, 1]} : vector<1x64x128xf32> to vector<1x44x128xf32>
    %c13 = arith.constant 13 : index
    %119 = memref.load %arg2[%c13] : memref<121xf32, #tpu.memory_space<smem>>
    %120 = vector.broadcast %119 : f32 to vector<1x44x128xf32>
    %121 = arith.mulf %118, %120 : vector<1x44x128xf32>
    %122 = arith.addf %117, %121 : vector<1x44x128xf32>
    %123 = vector.extract_strided_slice %113 {offsets = [0, 4, 0], sizes = [1, 44, 128], strides = [1, 1, 1]} : vector<1x64x128xf32> to vector<1x44x128xf32>
    %c24 = arith.constant 24 : index
    %124 = memref.load %arg2[%c24] : memref<121xf32, #tpu.memory_space<smem>>
    %125 = vector.broadcast %124 : f32 to vector<1x44x128xf32>
    %126 = arith.mulf %123, %125 : vector<1x44x128xf32>
    %127 = arith.addf %122, %126 : vector<1x44x128xf32>
    %128 = vector.extract_strided_slice %113 {offsets = [0, 6, 0], sizes = [1, 44, 128], strides = [1, 1, 1]} : vector<1x64x128xf32> to vector<1x44x128xf32>
    %c35 = arith.constant 35 : index
    %129 = memref.load %arg2[%c35] : memref<121xf32, #tpu.memory_space<smem>>
    %130 = vector.broadcast %129 : f32 to vector<1x44x128xf32>
    %131 = arith.mulf %128, %130 : vector<1x44x128xf32>
    %132 = arith.addf %127, %131 : vector<1x44x128xf32>
    %133 = vector.extract_strided_slice %113 {offsets = [0, 8, 0], sizes = [1, 44, 128], strides = [1, 1, 1]} : vector<1x64x128xf32> to vector<1x44x128xf32>
    %c46 = arith.constant 46 : index
    %134 = memref.load %arg2[%c46] : memref<121xf32, #tpu.memory_space<smem>>
    %135 = vector.broadcast %134 : f32 to vector<1x44x128xf32>
    %136 = arith.mulf %133, %135 : vector<1x44x128xf32>
    %137 = arith.addf %132, %136 : vector<1x44x128xf32>
    %138 = vector.extract_strided_slice %113 {offsets = [0, 10, 0], sizes = [1, 44, 128], strides = [1, 1, 1]} : vector<1x64x128xf32> to vector<1x44x128xf32>
    %c57 = arith.constant 57 : index
    %139 = memref.load %arg2[%c57] : memref<121xf32, #tpu.memory_space<smem>>
    %140 = vector.broadcast %139 : f32 to vector<1x44x128xf32>
    %141 = arith.mulf %138, %140 : vector<1x44x128xf32>
    %142 = arith.addf %137, %141 : vector<1x44x128xf32>
    %143 = vector.extract_strided_slice %113 {offsets = [0, 12, 0], sizes = [1, 44, 128], strides = [1, 1, 1]} : vector<1x64x128xf32> to vector<1x44x128xf32>
    %c68 = arith.constant 68 : index
    %144 = memref.load %arg2[%c68] : memref<121xf32, #tpu.memory_space<smem>>
    %145 = vector.broadcast %144 : f32 to vector<1x44x128xf32>
    %146 = arith.mulf %143, %145 : vector<1x44x128xf32>
    %147 = arith.addf %142, %146 : vector<1x44x128xf32>
    %148 = vector.extract_strided_slice %113 {offsets = [0, 14, 0], sizes = [1, 44, 128], strides = [1, 1, 1]} : vector<1x64x128xf32> to vector<1x44x128xf32>
    %c79 = arith.constant 79 : index
    %149 = memref.load %arg2[%c79] : memref<121xf32, #tpu.memory_space<smem>>
    %150 = vector.broadcast %149 : f32 to vector<1x44x128xf32>
    %151 = arith.mulf %148, %150 : vector<1x44x128xf32>
    %152 = arith.addf %147, %151 : vector<1x44x128xf32>
    %153 = vector.extract_strided_slice %113 {offsets = [0, 16, 0], sizes = [1, 44, 128], strides = [1, 1, 1]} : vector<1x64x128xf32> to vector<1x44x128xf32>
    %c90 = arith.constant 90 : index
    %154 = memref.load %arg2[%c90] : memref<121xf32, #tpu.memory_space<smem>>
    %155 = vector.broadcast %154 : f32 to vector<1x44x128xf32>
    %156 = arith.mulf %153, %155 : vector<1x44x128xf32>
    %157 = arith.addf %152, %156 : vector<1x44x128xf32>
    %158 = vector.extract_strided_slice %113 {offsets = [0, 18, 0], sizes = [1, 44, 128], strides = [1, 1, 1]} : vector<1x64x128xf32> to vector<1x44x128xf32>
    %c101 = arith.constant 101 : index
    %159 = memref.load %arg2[%c101] : memref<121xf32, #tpu.memory_space<smem>>
    %160 = vector.broadcast %159 : f32 to vector<1x44x128xf32>
    %161 = arith.mulf %158, %160 : vector<1x44x128xf32>
    %162 = arith.addf %157, %161 : vector<1x44x128xf32>
    %163 = vector.extract_strided_slice %113 {offsets = [0, 20, 0], sizes = [1, 44, 128], strides = [1, 1, 1]} : vector<1x64x128xf32> to vector<1x44x128xf32>
    %c112 = arith.constant 112 : index
    %164 = memref.load %arg2[%c112] : memref<121xf32, #tpu.memory_space<smem>>
    %165 = vector.broadcast %164 : f32 to vector<1x44x128xf32>
    %166 = arith.mulf %163, %165 : vector<1x44x128xf32>
    %167 = arith.addf %162, %166 : vector<1x44x128xf32>
    %168 = arith.addf %112, %167 : vector<1x44x128xf32>
    %c0_8 = arith.constant 0 : index
    %c0_9 = arith.constant 0 : index
    %c6 = arith.constant 6 : index
    %169 = vector.load %arg1[%c0_8, %c0_9, %c6] : memref<1x64x148xf32, #tpu.memory_space<vmem>>, vector<1x64x128xf32>
    %170 = vector.extract_strided_slice %169 {offsets = [0, 0, 0], sizes = [1, 44, 128], strides = [1, 1, 1]} : vector<1x64x128xf32> to vector<1x44x128xf32>
    %c3 = arith.constant 3 : index
    %171 = memref.load %arg2[%c3] : memref<121xf32, #tpu.memory_space<smem>>
    %172 = vector.broadcast %171 : f32 to vector<1x44x128xf32>
    %173 = arith.mulf %170, %172 : vector<1x44x128xf32>
    %174 = vector.extract_strided_slice %169 {offsets = [0, 2, 0], sizes = [1, 44, 128], strides = [1, 1, 1]} : vector<1x64x128xf32> to vector<1x44x128xf32>
    %c14 = arith.constant 14 : index
    %175 = memref.load %arg2[%c14] : memref<121xf32, #tpu.memory_space<smem>>
    %176 = vector.broadcast %175 : f32 to vector<1x44x128xf32>
    %177 = arith.mulf %174, %176 : vector<1x44x128xf32>
    %178 = arith.addf %173, %177 : vector<1x44x128xf32>
    %179 = vector.extract_strided_slice %169 {offsets = [0, 4, 0], sizes = [1, 44, 128], strides = [1, 1, 1]} : vector<1x64x128xf32> to vector<1x44x128xf32>
    %c25 = arith.constant 25 : index
    %180 = memref.load %arg2[%c25] : memref<121xf32, #tpu.memory_space<smem>>
    %181 = vector.broadcast %180 : f32 to vector<1x44x128xf32>
    %182 = arith.mulf %179, %181 : vector<1x44x128xf32>
    %183 = arith.addf %178, %182 : vector<1x44x128xf32>
    %184 = vector.extract_strided_slice %169 {offsets = [0, 6, 0], sizes = [1, 44, 128], strides = [1, 1, 1]} : vector<1x64x128xf32> to vector<1x44x128xf32>
    %c36 = arith.constant 36 : index
    %185 = memref.load %arg2[%c36] : memref<121xf32, #tpu.memory_space<smem>>
    %186 = vector.broadcast %185 : f32 to vector<1x44x128xf32>
    %187 = arith.mulf %184, %186 : vector<1x44x128xf32>
    %188 = arith.addf %183, %187 : vector<1x44x128xf32>
    %189 = vector.extract_strided_slice %169 {offsets = [0, 8, 0], sizes = [1, 44, 128], strides = [1, 1, 1]} : vector<1x64x128xf32> to vector<1x44x128xf32>
    %c47 = arith.constant 47 : index
    %190 = memref.load %arg2[%c47] : memref<121xf32, #tpu.memory_space<smem>>
    %191 = vector.broadcast %190 : f32 to vector<1x44x128xf32>
    %192 = arith.mulf %189, %191 : vector<1x44x128xf32>
    %193 = arith.addf %188, %192 : vector<1x44x128xf32>
    %194 = vector.extract_strided_slice %169 {offsets = [0, 10, 0], sizes = [1, 44, 128], strides = [1, 1, 1]} : vector<1x64x128xf32> to vector<1x44x128xf32>
    %c58 = arith.constant 58 : index
    %195 = memref.load %arg2[%c58] : memref<121xf32, #tpu.memory_space<smem>>
    %196 = vector.broadcast %195 : f32 to vector<1x44x128xf32>
    %197 = arith.mulf %194, %196 : vector<1x44x128xf32>
    %198 = arith.addf %193, %197 : vector<1x44x128xf32>
    %199 = vector.extract_strided_slice %169 {offsets = [0, 12, 0], sizes = [1, 44, 128], strides = [1, 1, 1]} : vector<1x64x128xf32> to vector<1x44x128xf32>
    %c69 = arith.constant 69 : index
    %200 = memref.load %arg2[%c69] : memref<121xf32, #tpu.memory_space<smem>>
    %201 = vector.broadcast %200 : f32 to vector<1x44x128xf32>
    %202 = arith.mulf %199, %201 : vector<1x44x128xf32>
    %203 = arith.addf %198, %202 : vector<1x44x128xf32>
    %204 = vector.extract_strided_slice %169 {offsets = [0, 14, 0], sizes = [1, 44, 128], strides = [1, 1, 1]} : vector<1x64x128xf32> to vector<1x44x128xf32>
    %c80 = arith.constant 80 : index
    %205 = memref.load %arg2[%c80] : memref<121xf32, #tpu.memory_space<smem>>
    %206 = vector.broadcast %205 : f32 to vector<1x44x128xf32>
    %207 = arith.mulf %204, %206 : vector<1x44x128xf32>
    %208 = arith.addf %203, %207 : vector<1x44x128xf32>
    %209 = vector.extract_strided_slice %169 {offsets = [0, 16, 0], sizes = [1, 44, 128], strides = [1, 1, 1]} : vector<1x64x128xf32> to vector<1x44x128xf32>
    %c91 = arith.constant 91 : index
    %210 = memref.load %arg2[%c91] : memref<121xf32, #tpu.memory_space<smem>>
    %211 = vector.broadcast %210 : f32 to vector<1x44x128xf32>
    %212 = arith.mulf %209, %211 : vector<1x44x128xf32>
    %213 = arith.addf %208, %212 : vector<1x44x128xf32>
    %214 = vector.extract_strided_slice %169 {offsets = [0, 18, 0], sizes = [1, 44, 128], strides = [1, 1, 1]} : vector<1x64x128xf32> to vector<1x44x128xf32>
    %c102 = arith.constant 102 : index
    %215 = memref.load %arg2[%c102] : memref<121xf32, #tpu.memory_space<smem>>
    %216 = vector.broadcast %215 : f32 to vector<1x44x128xf32>
    %217 = arith.mulf %214, %216 : vector<1x44x128xf32>
    %218 = arith.addf %213, %217 : vector<1x44x128xf32>
    %219 = vector.extract_strided_slice %169 {offsets = [0, 20, 0], sizes = [1, 44, 128], strides = [1, 1, 1]} : vector<1x64x128xf32> to vector<1x44x128xf32>
    %c113 = arith.constant 113 : index
    %220 = memref.load %arg2[%c113] : memref<121xf32, #tpu.memory_space<smem>>
    %221 = vector.broadcast %220 : f32 to vector<1x44x128xf32>
    %222 = arith.mulf %219, %221 : vector<1x44x128xf32>
    %223 = arith.addf %218, %222 : vector<1x44x128xf32>
    %224 = arith.addf %168, %223 : vector<1x44x128xf32>
    %c0_10 = arith.constant 0 : index
    %c0_11 = arith.constant 0 : index
    %c8 = arith.constant 8 : index
    %225 = vector.load %arg1[%c0_10, %c0_11, %c8] : memref<1x64x148xf32, #tpu.memory_space<vmem>>, vector<1x64x128xf32>
    %226 = vector.extract_strided_slice %225 {offsets = [0, 0, 0], sizes = [1, 44, 128], strides = [1, 1, 1]} : vector<1x64x128xf32> to vector<1x44x128xf32>
    %c4_12 = arith.constant 4 : index
    %227 = memref.load %arg2[%c4_12] : memref<121xf32, #tpu.memory_space<smem>>
    %228 = vector.broadcast %227 : f32 to vector<1x44x128xf32>
    %229 = arith.mulf %226, %228 : vector<1x44x128xf32>
    %230 = vector.extract_strided_slice %225 {offsets = [0, 2, 0], sizes = [1, 44, 128], strides = [1, 1, 1]} : vector<1x64x128xf32> to vector<1x44x128xf32>
    %c15 = arith.constant 15 : index
    %231 = memref.load %arg2[%c15] : memref<121xf32, #tpu.memory_space<smem>>
    %232 = vector.broadcast %231 : f32 to vector<1x44x128xf32>
    %233 = arith.mulf %230, %232 : vector<1x44x128xf32>
    %234 = arith.addf %229, %233 : vector<1x44x128xf32>
    %235 = vector.extract_strided_slice %225 {offsets = [0, 4, 0], sizes = [1, 44, 128], strides = [1, 1, 1]} : vector<1x64x128xf32> to vector<1x44x128xf32>
    %c26 = arith.constant 26 : index
    %236 = memref.load %arg2[%c26] : memref<121xf32, #tpu.memory_space<smem>>
    %237 = vector.broadcast %236 : f32 to vector<1x44x128xf32>
    %238 = arith.mulf %235, %237 : vector<1x44x128xf32>
    %239 = arith.addf %234, %238 : vector<1x44x128xf32>
    %240 = vector.extract_strided_slice %225 {offsets = [0, 6, 0], sizes = [1, 44, 128], strides = [1, 1, 1]} : vector<1x64x128xf32> to vector<1x44x128xf32>
    %c37 = arith.constant 37 : index
    %241 = memref.load %arg2[%c37] : memref<121xf32, #tpu.memory_space<smem>>
    %242 = vector.broadcast %241 : f32 to vector<1x44x128xf32>
    %243 = arith.mulf %240, %242 : vector<1x44x128xf32>
    %244 = arith.addf %239, %243 : vector<1x44x128xf32>
    %245 = vector.extract_strided_slice %225 {offsets = [0, 8, 0], sizes = [1, 44, 128], strides = [1, 1, 1]} : vector<1x64x128xf32> to vector<1x44x128xf32>
    %c48 = arith.constant 48 : index
    %246 = memref.load %arg2[%c48] : memref<121xf32, #tpu.memory_space<smem>>
    %247 = vector.broadcast %246 : f32 to vector<1x44x128xf32>
    %248 = arith.mulf %245, %247 : vector<1x44x128xf32>
    %249 = arith.addf %244, %248 : vector<1x44x128xf32>
    %250 = vector.extract_strided_slice %225 {offsets = [0, 10, 0], sizes = [1, 44, 128], strides = [1, 1, 1]} : vector<1x64x128xf32> to vector<1x44x128xf32>
    %c59 = arith.constant 59 : index
    %251 = memref.load %arg2[%c59] : memref<121xf32, #tpu.memory_space<smem>>
    %252 = vector.broadcast %251 : f32 to vector<1x44x128xf32>
    %253 = arith.mulf %250, %252 : vector<1x44x128xf32>
    %254 = arith.addf %249, %253 : vector<1x44x128xf32>
    %255 = vector.extract_strided_slice %225 {offsets = [0, 12, 0], sizes = [1, 44, 128], strides = [1, 1, 1]} : vector<1x64x128xf32> to vector<1x44x128xf32>
    %c70 = arith.constant 70 : index
    %256 = memref.load %arg2[%c70] : memref<121xf32, #tpu.memory_space<smem>>
    %257 = vector.broadcast %256 : f32 to vector<1x44x128xf32>
    %258 = arith.mulf %255, %257 : vector<1x44x128xf32>
    %259 = arith.addf %254, %258 : vector<1x44x128xf32>
    %260 = vector.extract_strided_slice %225 {offsets = [0, 14, 0], sizes = [1, 44, 128], strides = [1, 1, 1]} : vector<1x64x128xf32> to vector<1x44x128xf32>
    %c81 = arith.constant 81 : index
    %261 = memref.load %arg2[%c81] : memref<121xf32, #tpu.memory_space<smem>>
    %262 = vector.broadcast %261 : f32 to vector<1x44x128xf32>
    %263 = arith.mulf %260, %262 : vector<1x44x128xf32>
    %264 = arith.addf %259, %263 : vector<1x44x128xf32>
    %265 = vector.extract_strided_slice %225 {offsets = [0, 16, 0], sizes = [1, 44, 128], strides = [1, 1, 1]} : vector<1x64x128xf32> to vector<1x44x128xf32>
    %c92 = arith.constant 92 : index
    %266 = memref.load %arg2[%c92] : memref<121xf32, #tpu.memory_space<smem>>
    %267 = vector.broadcast %266 : f32 to vector<1x44x128xf32>
    %268 = arith.mulf %265, %267 : vector<1x44x128xf32>
    %269 = arith.addf %264, %268 : vector<1x44x128xf32>
    %270 = vector.extract_strided_slice %225 {offsets = [0, 18, 0], sizes = [1, 44, 128], strides = [1, 1, 1]} : vector<1x64x128xf32> to vector<1x44x128xf32>
    %c103 = arith.constant 103 : index
    %271 = memref.load %arg2[%c103] : memref<121xf32, #tpu.memory_space<smem>>
    %272 = vector.broadcast %271 : f32 to vector<1x44x128xf32>
    %273 = arith.mulf %270, %272 : vector<1x44x128xf32>
    %274 = arith.addf %269, %273 : vector<1x44x128xf32>
    %275 = vector.extract_strided_slice %225 {offsets = [0, 20, 0], sizes = [1, 44, 128], strides = [1, 1, 1]} : vector<1x64x128xf32> to vector<1x44x128xf32>
    %c114 = arith.constant 114 : index
    %276 = memref.load %arg2[%c114] : memref<121xf32, #tpu.memory_space<smem>>
    %277 = vector.broadcast %276 : f32 to vector<1x44x128xf32>
    %278 = arith.mulf %275, %277 : vector<1x44x128xf32>
    %279 = arith.addf %274, %278 : vector<1x44x128xf32>
    %280 = arith.addf %224, %279 : vector<1x44x128xf32>
    %c0_13 = arith.constant 0 : index
    %c0_14 = arith.constant 0 : index
    %c10 = arith.constant 10 : index
    %281 = vector.load %arg1[%c0_13, %c0_14, %c10] : memref<1x64x148xf32, #tpu.memory_space<vmem>>, vector<1x64x128xf32>
    %282 = vector.extract_strided_slice %281 {offsets = [0, 0, 0], sizes = [1, 44, 128], strides = [1, 1, 1]} : vector<1x64x128xf32> to vector<1x44x128xf32>
    %c5 = arith.constant 5 : index
    %283 = memref.load %arg2[%c5] : memref<121xf32, #tpu.memory_space<smem>>
    %284 = vector.broadcast %283 : f32 to vector<1x44x128xf32>
    %285 = arith.mulf %282, %284 : vector<1x44x128xf32>
    %286 = vector.extract_strided_slice %281 {offsets = [0, 2, 0], sizes = [1, 44, 128], strides = [1, 1, 1]} : vector<1x64x128xf32> to vector<1x44x128xf32>
    %c16 = arith.constant 16 : index
    %287 = memref.load %arg2[%c16] : memref<121xf32, #tpu.memory_space<smem>>
    %288 = vector.broadcast %287 : f32 to vector<1x44x128xf32>
    %289 = arith.mulf %286, %288 : vector<1x44x128xf32>
    %290 = arith.addf %285, %289 : vector<1x44x128xf32>
    %291 = vector.extract_strided_slice %281 {offsets = [0, 4, 0], sizes = [1, 44, 128], strides = [1, 1, 1]} : vector<1x64x128xf32> to vector<1x44x128xf32>
    %c27 = arith.constant 27 : index
    %292 = memref.load %arg2[%c27] : memref<121xf32, #tpu.memory_space<smem>>
    %293 = vector.broadcast %292 : f32 to vector<1x44x128xf32>
    %294 = arith.mulf %291, %293 : vector<1x44x128xf32>
    %295 = arith.addf %290, %294 : vector<1x44x128xf32>
    %296 = vector.extract_strided_slice %281 {offsets = [0, 6, 0], sizes = [1, 44, 128], strides = [1, 1, 1]} : vector<1x64x128xf32> to vector<1x44x128xf32>
    %c38 = arith.constant 38 : index
    %297 = memref.load %arg2[%c38] : memref<121xf32, #tpu.memory_space<smem>>
    %298 = vector.broadcast %297 : f32 to vector<1x44x128xf32>
    %299 = arith.mulf %296, %298 : vector<1x44x128xf32>
    %300 = arith.addf %295, %299 : vector<1x44x128xf32>
    %301 = vector.extract_strided_slice %281 {offsets = [0, 8, 0], sizes = [1, 44, 128], strides = [1, 1, 1]} : vector<1x64x128xf32> to vector<1x44x128xf32>
    %c49 = arith.constant 49 : index
    %302 = memref.load %arg2[%c49] : memref<121xf32, #tpu.memory_space<smem>>
    %303 = vector.broadcast %302 : f32 to vector<1x44x128xf32>
    %304 = arith.mulf %301, %303 : vector<1x44x128xf32>
    %305 = arith.addf %300, %304 : vector<1x44x128xf32>
    %306 = vector.extract_strided_slice %281 {offsets = [0, 10, 0], sizes = [1, 44, 128], strides = [1, 1, 1]} : vector<1x64x128xf32> to vector<1x44x128xf32>
    %c60 = arith.constant 60 : index
    %307 = memref.load %arg2[%c60] : memref<121xf32, #tpu.memory_space<smem>>
    %308 = vector.broadcast %307 : f32 to vector<1x44x128xf32>
    %309 = arith.mulf %306, %308 : vector<1x44x128xf32>
    %310 = arith.addf %305, %309 : vector<1x44x128xf32>
    %311 = vector.extract_strided_slice %281 {offsets = [0, 12, 0], sizes = [1, 44, 128], strides = [1, 1, 1]} : vector<1x64x128xf32> to vector<1x44x128xf32>
    %c71 = arith.constant 71 : index
    %312 = memref.load %arg2[%c71] : memref<121xf32, #tpu.memory_space<smem>>
    %313 = vector.broadcast %312 : f32 to vector<1x44x128xf32>
    %314 = arith.mulf %311, %313 : vector<1x44x128xf32>
    %315 = arith.addf %310, %314 : vector<1x44x128xf32>
    %316 = vector.extract_strided_slice %281 {offsets = [0, 14, 0], sizes = [1, 44, 128], strides = [1, 1, 1]} : vector<1x64x128xf32> to vector<1x44x128xf32>
    %c82 = arith.constant 82 : index
    %317 = memref.load %arg2[%c82] : memref<121xf32, #tpu.memory_space<smem>>
    %318 = vector.broadcast %317 : f32 to vector<1x44x128xf32>
    %319 = arith.mulf %316, %318 : vector<1x44x128xf32>
    %320 = arith.addf %315, %319 : vector<1x44x128xf32>
    %321 = vector.extract_strided_slice %281 {offsets = [0, 16, 0], sizes = [1, 44, 128], strides = [1, 1, 1]} : vector<1x64x128xf32> to vector<1x44x128xf32>
    %c93 = arith.constant 93 : index
    %322 = memref.load %arg2[%c93] : memref<121xf32, #tpu.memory_space<smem>>
    %323 = vector.broadcast %322 : f32 to vector<1x44x128xf32>
    %324 = arith.mulf %321, %323 : vector<1x44x128xf32>
    %325 = arith.addf %320, %324 : vector<1x44x128xf32>
    %326 = vector.extract_strided_slice %281 {offsets = [0, 18, 0], sizes = [1, 44, 128], strides = [1, 1, 1]} : vector<1x64x128xf32> to vector<1x44x128xf32>
    %c104 = arith.constant 104 : index
    %327 = memref.load %arg2[%c104] : memref<121xf32, #tpu.memory_space<smem>>
    %328 = vector.broadcast %327 : f32 to vector<1x44x128xf32>
    %329 = arith.mulf %326, %328 : vector<1x44x128xf32>
    %330 = arith.addf %325, %329 : vector<1x44x128xf32>
    %331 = vector.extract_strided_slice %281 {offsets = [0, 20, 0], sizes = [1, 44, 128], strides = [1, 1, 1]} : vector<1x64x128xf32> to vector<1x44x128xf32>
    %c115 = arith.constant 115 : index
    %332 = memref.load %arg2[%c115] : memref<121xf32, #tpu.memory_space<smem>>
    %333 = vector.broadcast %332 : f32 to vector<1x44x128xf32>
    %334 = arith.mulf %331, %333 : vector<1x44x128xf32>
    %335 = arith.addf %330, %334 : vector<1x44x128xf32>
    %336 = arith.addf %280, %335 : vector<1x44x128xf32>
    %c0_15 = arith.constant 0 : index
    %c0_16 = arith.constant 0 : index
    %c12_17 = arith.constant 12 : index
    %337 = vector.load %arg1[%c0_15, %c0_16, %c12_17] : memref<1x64x148xf32, #tpu.memory_space<vmem>>, vector<1x64x128xf32>
    %338 = vector.extract_strided_slice %337 {offsets = [0, 0, 0], sizes = [1, 44, 128], strides = [1, 1, 1]} : vector<1x64x128xf32> to vector<1x44x128xf32>
    %c6_18 = arith.constant 6 : index
    %339 = memref.load %arg2[%c6_18] : memref<121xf32, #tpu.memory_space<smem>>
    %340 = vector.broadcast %339 : f32 to vector<1x44x128xf32>
    %341 = arith.mulf %338, %340 : vector<1x44x128xf32>
    %342 = vector.extract_strided_slice %337 {offsets = [0, 2, 0], sizes = [1, 44, 128], strides = [1, 1, 1]} : vector<1x64x128xf32> to vector<1x44x128xf32>
    %c17 = arith.constant 17 : index
    %343 = memref.load %arg2[%c17] : memref<121xf32, #tpu.memory_space<smem>>
    %344 = vector.broadcast %343 : f32 to vector<1x44x128xf32>
    %345 = arith.mulf %342, %344 : vector<1x44x128xf32>
    %346 = arith.addf %341, %345 : vector<1x44x128xf32>
    %347 = vector.extract_strided_slice %337 {offsets = [0, 4, 0], sizes = [1, 44, 128], strides = [1, 1, 1]} : vector<1x64x128xf32> to vector<1x44x128xf32>
    %c28 = arith.constant 28 : index
    %348 = memref.load %arg2[%c28] : memref<121xf32, #tpu.memory_space<smem>>
    %349 = vector.broadcast %348 : f32 to vector<1x44x128xf32>
    %350 = arith.mulf %347, %349 : vector<1x44x128xf32>
    %351 = arith.addf %346, %350 : vector<1x44x128xf32>
    %352 = vector.extract_strided_slice %337 {offsets = [0, 6, 0], sizes = [1, 44, 128], strides = [1, 1, 1]} : vector<1x64x128xf32> to vector<1x44x128xf32>
    %c39 = arith.constant 39 : index
    %353 = memref.load %arg2[%c39] : memref<121xf32, #tpu.memory_space<smem>>
    %354 = vector.broadcast %353 : f32 to vector<1x44x128xf32>
    %355 = arith.mulf %352, %354 : vector<1x44x128xf32>
    %356 = arith.addf %351, %355 : vector<1x44x128xf32>
    %357 = vector.extract_strided_slice %337 {offsets = [0, 8, 0], sizes = [1, 44, 128], strides = [1, 1, 1]} : vector<1x64x128xf32> to vector<1x44x128xf32>
    %c50 = arith.constant 50 : index
    %358 = memref.load %arg2[%c50] : memref<121xf32, #tpu.memory_space<smem>>
    %359 = vector.broadcast %358 : f32 to vector<1x44x128xf32>
    %360 = arith.mulf %357, %359 : vector<1x44x128xf32>
    %361 = arith.addf %356, %360 : vector<1x44x128xf32>
    %362 = vector.extract_strided_slice %337 {offsets = [0, 10, 0], sizes = [1, 44, 128], strides = [1, 1, 1]} : vector<1x64x128xf32> to vector<1x44x128xf32>
    %c61 = arith.constant 61 : index
    %363 = memref.load %arg2[%c61] : memref<121xf32, #tpu.memory_space<smem>>
    %364 = vector.broadcast %363 : f32 to vector<1x44x128xf32>
    %365 = arith.mulf %362, %364 : vector<1x44x128xf32>
    %366 = arith.addf %361, %365 : vector<1x44x128xf32>
    %367 = vector.extract_strided_slice %337 {offsets = [0, 12, 0], sizes = [1, 44, 128], strides = [1, 1, 1]} : vector<1x64x128xf32> to vector<1x44x128xf32>
    %c72 = arith.constant 72 : index
    %368 = memref.load %arg2[%c72] : memref<121xf32, #tpu.memory_space<smem>>
    %369 = vector.broadcast %368 : f32 to vector<1x44x128xf32>
    %370 = arith.mulf %367, %369 : vector<1x44x128xf32>
    %371 = arith.addf %366, %370 : vector<1x44x128xf32>
    %372 = vector.extract_strided_slice %337 {offsets = [0, 14, 0], sizes = [1, 44, 128], strides = [1, 1, 1]} : vector<1x64x128xf32> to vector<1x44x128xf32>
    %c83 = arith.constant 83 : index
    %373 = memref.load %arg2[%c83] : memref<121xf32, #tpu.memory_space<smem>>
    %374 = vector.broadcast %373 : f32 to vector<1x44x128xf32>
    %375 = arith.mulf %372, %374 : vector<1x44x128xf32>
    %376 = arith.addf %371, %375 : vector<1x44x128xf32>
    %377 = vector.extract_strided_slice %337 {offsets = [0, 16, 0], sizes = [1, 44, 128], strides = [1, 1, 1]} : vector<1x64x128xf32> to vector<1x44x128xf32>
    %c94 = arith.constant 94 : index
    %378 = memref.load %arg2[%c94] : memref<121xf32, #tpu.memory_space<smem>>
    %379 = vector.broadcast %378 : f32 to vector<1x44x128xf32>
    %380 = arith.mulf %377, %379 : vector<1x44x128xf32>
    %381 = arith.addf %376, %380 : vector<1x44x128xf32>
    %382 = vector.extract_strided_slice %337 {offsets = [0, 18, 0], sizes = [1, 44, 128], strides = [1, 1, 1]} : vector<1x64x128xf32> to vector<1x44x128xf32>
    %c105 = arith.constant 105 : index
    %383 = memref.load %arg2[%c105] : memref<121xf32, #tpu.memory_space<smem>>
    %384 = vector.broadcast %383 : f32 to vector<1x44x128xf32>
    %385 = arith.mulf %382, %384 : vector<1x44x128xf32>
    %386 = arith.addf %381, %385 : vector<1x44x128xf32>
    %387 = vector.extract_strided_slice %337 {offsets = [0, 20, 0], sizes = [1, 44, 128], strides = [1, 1, 1]} : vector<1x64x128xf32> to vector<1x44x128xf32>
    %c116 = arith.constant 116 : index
    %388 = memref.load %arg2[%c116] : memref<121xf32, #tpu.memory_space<smem>>
    %389 = vector.broadcast %388 : f32 to vector<1x44x128xf32>
    %390 = arith.mulf %387, %389 : vector<1x44x128xf32>
    %391 = arith.addf %386, %390 : vector<1x44x128xf32>
    %392 = arith.addf %336, %391 : vector<1x44x128xf32>
    %c0_19 = arith.constant 0 : index
    %c0_20 = arith.constant 0 : index
    %c14_21 = arith.constant 14 : index
    %393 = vector.load %arg1[%c0_19, %c0_20, %c14_21] : memref<1x64x148xf32, #tpu.memory_space<vmem>>, vector<1x64x128xf32>
    %394 = vector.extract_strided_slice %393 {offsets = [0, 0, 0], sizes = [1, 44, 128], strides = [1, 1, 1]} : vector<1x64x128xf32> to vector<1x44x128xf32>
    %c7 = arith.constant 7 : index
    %395 = memref.load %arg2[%c7] : memref<121xf32, #tpu.memory_space<smem>>
    %396 = vector.broadcast %395 : f32 to vector<1x44x128xf32>
    %397 = arith.mulf %394, %396 : vector<1x44x128xf32>
    %398 = vector.extract_strided_slice %393 {offsets = [0, 2, 0], sizes = [1, 44, 128], strides = [1, 1, 1]} : vector<1x64x128xf32> to vector<1x44x128xf32>
    %c18 = arith.constant 18 : index
    %399 = memref.load %arg2[%c18] : memref<121xf32, #tpu.memory_space<smem>>
    %400 = vector.broadcast %399 : f32 to vector<1x44x128xf32>
    %401 = arith.mulf %398, %400 : vector<1x44x128xf32>
    %402 = arith.addf %397, %401 : vector<1x44x128xf32>
    %403 = vector.extract_strided_slice %393 {offsets = [0, 4, 0], sizes = [1, 44, 128], strides = [1, 1, 1]} : vector<1x64x128xf32> to vector<1x44x128xf32>
    %c29 = arith.constant 29 : index
    %404 = memref.load %arg2[%c29] : memref<121xf32, #tpu.memory_space<smem>>
    %405 = vector.broadcast %404 : f32 to vector<1x44x128xf32>
    %406 = arith.mulf %403, %405 : vector<1x44x128xf32>
    %407 = arith.addf %402, %406 : vector<1x44x128xf32>
    %408 = vector.extract_strided_slice %393 {offsets = [0, 6, 0], sizes = [1, 44, 128], strides = [1, 1, 1]} : vector<1x64x128xf32> to vector<1x44x128xf32>
    %c40 = arith.constant 40 : index
    %409 = memref.load %arg2[%c40] : memref<121xf32, #tpu.memory_space<smem>>
    %410 = vector.broadcast %409 : f32 to vector<1x44x128xf32>
    %411 = arith.mulf %408, %410 : vector<1x44x128xf32>
    %412 = arith.addf %407, %411 : vector<1x44x128xf32>
    %413 = vector.extract_strided_slice %393 {offsets = [0, 8, 0], sizes = [1, 44, 128], strides = [1, 1, 1]} : vector<1x64x128xf32> to vector<1x44x128xf32>
    %c51 = arith.constant 51 : index
    %414 = memref.load %arg2[%c51] : memref<121xf32, #tpu.memory_space<smem>>
    %415 = vector.broadcast %414 : f32 to vector<1x44x128xf32>
    %416 = arith.mulf %413, %415 : vector<1x44x128xf32>
    %417 = arith.addf %412, %416 : vector<1x44x128xf32>
    %418 = vector.extract_strided_slice %393 {offsets = [0, 10, 0], sizes = [1, 44, 128], strides = [1, 1, 1]} : vector<1x64x128xf32> to vector<1x44x128xf32>
    %c62 = arith.constant 62 : index
    %419 = memref.load %arg2[%c62] : memref<121xf32, #tpu.memory_space<smem>>
    %420 = vector.broadcast %419 : f32 to vector<1x44x128xf32>
    %421 = arith.mulf %418, %420 : vector<1x44x128xf32>
    %422 = arith.addf %417, %421 : vector<1x44x128xf32>
    %423 = vector.extract_strided_slice %393 {offsets = [0, 12, 0], sizes = [1, 44, 128], strides = [1, 1, 1]} : vector<1x64x128xf32> to vector<1x44x128xf32>
    %c73 = arith.constant 73 : index
    %424 = memref.load %arg2[%c73] : memref<121xf32, #tpu.memory_space<smem>>
    %425 = vector.broadcast %424 : f32 to vector<1x44x128xf32>
    %426 = arith.mulf %423, %425 : vector<1x44x128xf32>
    %427 = arith.addf %422, %426 : vector<1x44x128xf32>
    %428 = vector.extract_strided_slice %393 {offsets = [0, 14, 0], sizes = [1, 44, 128], strides = [1, 1, 1]} : vector<1x64x128xf32> to vector<1x44x128xf32>
    %c84 = arith.constant 84 : index
    %429 = memref.load %arg2[%c84] : memref<121xf32, #tpu.memory_space<smem>>
    %430 = vector.broadcast %429 : f32 to vector<1x44x128xf32>
    %431 = arith.mulf %428, %430 : vector<1x44x128xf32>
    %432 = arith.addf %427, %431 : vector<1x44x128xf32>
    %433 = vector.extract_strided_slice %393 {offsets = [0, 16, 0], sizes = [1, 44, 128], strides = [1, 1, 1]} : vector<1x64x128xf32> to vector<1x44x128xf32>
    %c95 = arith.constant 95 : index
    %434 = memref.load %arg2[%c95] : memref<121xf32, #tpu.memory_space<smem>>
    %435 = vector.broadcast %434 : f32 to vector<1x44x128xf32>
    %436 = arith.mulf %433, %435 : vector<1x44x128xf32>
    %437 = arith.addf %432, %436 : vector<1x44x128xf32>
    %438 = vector.extract_strided_slice %393 {offsets = [0, 18, 0], sizes = [1, 44, 128], strides = [1, 1, 1]} : vector<1x64x128xf32> to vector<1x44x128xf32>
    %c106 = arith.constant 106 : index
    %439 = memref.load %arg2[%c106] : memref<121xf32, #tpu.memory_space<smem>>
    %440 = vector.broadcast %439 : f32 to vector<1x44x128xf32>
    %441 = arith.mulf %438, %440 : vector<1x44x128xf32>
    %442 = arith.addf %437, %441 : vector<1x44x128xf32>
    %443 = vector.extract_strided_slice %393 {offsets = [0, 20, 0], sizes = [1, 44, 128], strides = [1, 1, 1]} : vector<1x64x128xf32> to vector<1x44x128xf32>
    %c117 = arith.constant 117 : index
    %444 = memref.load %arg2[%c117] : memref<121xf32, #tpu.memory_space<smem>>
    %445 = vector.broadcast %444 : f32 to vector<1x44x128xf32>
    %446 = arith.mulf %443, %445 : vector<1x44x128xf32>
    %447 = arith.addf %442, %446 : vector<1x44x128xf32>
    %448 = arith.addf %392, %447 : vector<1x44x128xf32>
    %c0_22 = arith.constant 0 : index
    %c0_23 = arith.constant 0 : index
    %c16_24 = arith.constant 16 : index
    %449 = vector.load %arg1[%c0_22, %c0_23, %c16_24] : memref<1x64x148xf32, #tpu.memory_space<vmem>>, vector<1x64x128xf32>
    %450 = vector.extract_strided_slice %449 {offsets = [0, 0, 0], sizes = [1, 44, 128], strides = [1, 1, 1]} : vector<1x64x128xf32> to vector<1x44x128xf32>
    %c8_25 = arith.constant 8 : index
    %451 = memref.load %arg2[%c8_25] : memref<121xf32, #tpu.memory_space<smem>>
    %452 = vector.broadcast %451 : f32 to vector<1x44x128xf32>
    %453 = arith.mulf %450, %452 : vector<1x44x128xf32>
    %454 = vector.extract_strided_slice %449 {offsets = [0, 2, 0], sizes = [1, 44, 128], strides = [1, 1, 1]} : vector<1x64x128xf32> to vector<1x44x128xf32>
    %c19 = arith.constant 19 : index
    %455 = memref.load %arg2[%c19] : memref<121xf32, #tpu.memory_space<smem>>
    %456 = vector.broadcast %455 : f32 to vector<1x44x128xf32>
    %457 = arith.mulf %454, %456 : vector<1x44x128xf32>
    %458 = arith.addf %453, %457 : vector<1x44x128xf32>
    %459 = vector.extract_strided_slice %449 {offsets = [0, 4, 0], sizes = [1, 44, 128], strides = [1, 1, 1]} : vector<1x64x128xf32> to vector<1x44x128xf32>
    %c30 = arith.constant 30 : index
    %460 = memref.load %arg2[%c30] : memref<121xf32, #tpu.memory_space<smem>>
    %461 = vector.broadcast %460 : f32 to vector<1x44x128xf32>
    %462 = arith.mulf %459, %461 : vector<1x44x128xf32>
    %463 = arith.addf %458, %462 : vector<1x44x128xf32>
    %464 = vector.extract_strided_slice %449 {offsets = [0, 6, 0], sizes = [1, 44, 128], strides = [1, 1, 1]} : vector<1x64x128xf32> to vector<1x44x128xf32>
    %c41 = arith.constant 41 : index
    %465 = memref.load %arg2[%c41] : memref<121xf32, #tpu.memory_space<smem>>
    %466 = vector.broadcast %465 : f32 to vector<1x44x128xf32>
    %467 = arith.mulf %464, %466 : vector<1x44x128xf32>
    %468 = arith.addf %463, %467 : vector<1x44x128xf32>
    %469 = vector.extract_strided_slice %449 {offsets = [0, 8, 0], sizes = [1, 44, 128], strides = [1, 1, 1]} : vector<1x64x128xf32> to vector<1x44x128xf32>
    %c52 = arith.constant 52 : index
    %470 = memref.load %arg2[%c52] : memref<121xf32, #tpu.memory_space<smem>>
    %471 = vector.broadcast %470 : f32 to vector<1x44x128xf32>
    %472 = arith.mulf %469, %471 : vector<1x44x128xf32>
    %473 = arith.addf %468, %472 : vector<1x44x128xf32>
    %474 = vector.extract_strided_slice %449 {offsets = [0, 10, 0], sizes = [1, 44, 128], strides = [1, 1, 1]} : vector<1x64x128xf32> to vector<1x44x128xf32>
    %c63 = arith.constant 63 : index
    %475 = memref.load %arg2[%c63] : memref<121xf32, #tpu.memory_space<smem>>
    %476 = vector.broadcast %475 : f32 to vector<1x44x128xf32>
    %477 = arith.mulf %474, %476 : vector<1x44x128xf32>
    %478 = arith.addf %473, %477 : vector<1x44x128xf32>
    %479 = vector.extract_strided_slice %449 {offsets = [0, 12, 0], sizes = [1, 44, 128], strides = [1, 1, 1]} : vector<1x64x128xf32> to vector<1x44x128xf32>
    %c74 = arith.constant 74 : index
    %480 = memref.load %arg2[%c74] : memref<121xf32, #tpu.memory_space<smem>>
    %481 = vector.broadcast %480 : f32 to vector<1x44x128xf32>
    %482 = arith.mulf %479, %481 : vector<1x44x128xf32>
    %483 = arith.addf %478, %482 : vector<1x44x128xf32>
    %484 = vector.extract_strided_slice %449 {offsets = [0, 14, 0], sizes = [1, 44, 128], strides = [1, 1, 1]} : vector<1x64x128xf32> to vector<1x44x128xf32>
    %c85 = arith.constant 85 : index
    %485 = memref.load %arg2[%c85] : memref<121xf32, #tpu.memory_space<smem>>
    %486 = vector.broadcast %485 : f32 to vector<1x44x128xf32>
    %487 = arith.mulf %484, %486 : vector<1x44x128xf32>
    %488 = arith.addf %483, %487 : vector<1x44x128xf32>
    %489 = vector.extract_strided_slice %449 {offsets = [0, 16, 0], sizes = [1, 44, 128], strides = [1, 1, 1]} : vector<1x64x128xf32> to vector<1x44x128xf32>
    %c96 = arith.constant 96 : index
    %490 = memref.load %arg2[%c96] : memref<121xf32, #tpu.memory_space<smem>>
    %491 = vector.broadcast %490 : f32 to vector<1x44x128xf32>
    %492 = arith.mulf %489, %491 : vector<1x44x128xf32>
    %493 = arith.addf %488, %492 : vector<1x44x128xf32>
    %494 = vector.extract_strided_slice %449 {offsets = [0, 18, 0], sizes = [1, 44, 128], strides = [1, 1, 1]} : vector<1x64x128xf32> to vector<1x44x128xf32>
    %c107 = arith.constant 107 : index
    %495 = memref.load %arg2[%c107] : memref<121xf32, #tpu.memory_space<smem>>
    %496 = vector.broadcast %495 : f32 to vector<1x44x128xf32>
    %497 = arith.mulf %494, %496 : vector<1x44x128xf32>
    %498 = arith.addf %493, %497 : vector<1x44x128xf32>
    %499 = vector.extract_strided_slice %449 {offsets = [0, 20, 0], sizes = [1, 44, 128], strides = [1, 1, 1]} : vector<1x64x128xf32> to vector<1x44x128xf32>
    %c118 = arith.constant 118 : index
    %500 = memref.load %arg2[%c118] : memref<121xf32, #tpu.memory_space<smem>>
    %501 = vector.broadcast %500 : f32 to vector<1x44x128xf32>
    %502 = arith.mulf %499, %501 : vector<1x44x128xf32>
    %503 = arith.addf %498, %502 : vector<1x44x128xf32>
    %504 = arith.addf %448, %503 : vector<1x44x128xf32>
    %c0_26 = arith.constant 0 : index
    %c0_27 = arith.constant 0 : index
    %c18_28 = arith.constant 18 : index
    %505 = vector.load %arg1[%c0_26, %c0_27, %c18_28] : memref<1x64x148xf32, #tpu.memory_space<vmem>>, vector<1x64x128xf32>
    %506 = vector.extract_strided_slice %505 {offsets = [0, 0, 0], sizes = [1, 44, 128], strides = [1, 1, 1]} : vector<1x64x128xf32> to vector<1x44x128xf32>
    %c9 = arith.constant 9 : index
    %507 = memref.load %arg2[%c9] : memref<121xf32, #tpu.memory_space<smem>>
    %508 = vector.broadcast %507 : f32 to vector<1x44x128xf32>
    %509 = arith.mulf %506, %508 : vector<1x44x128xf32>
    %510 = vector.extract_strided_slice %505 {offsets = [0, 2, 0], sizes = [1, 44, 128], strides = [1, 1, 1]} : vector<1x64x128xf32> to vector<1x44x128xf32>
    %c20 = arith.constant 20 : index
    %511 = memref.load %arg2[%c20] : memref<121xf32, #tpu.memory_space<smem>>
    %512 = vector.broadcast %511 : f32 to vector<1x44x128xf32>
    %513 = arith.mulf %510, %512 : vector<1x44x128xf32>
    %514 = arith.addf %509, %513 : vector<1x44x128xf32>
    %515 = vector.extract_strided_slice %505 {offsets = [0, 4, 0], sizes = [1, 44, 128], strides = [1, 1, 1]} : vector<1x64x128xf32> to vector<1x44x128xf32>
    %c31 = arith.constant 31 : index
    %516 = memref.load %arg2[%c31] : memref<121xf32, #tpu.memory_space<smem>>
    %517 = vector.broadcast %516 : f32 to vector<1x44x128xf32>
    %518 = arith.mulf %515, %517 : vector<1x44x128xf32>
    %519 = arith.addf %514, %518 : vector<1x44x128xf32>
    %520 = vector.extract_strided_slice %505 {offsets = [0, 6, 0], sizes = [1, 44, 128], strides = [1, 1, 1]} : vector<1x64x128xf32> to vector<1x44x128xf32>
    %c42 = arith.constant 42 : index
    %521 = memref.load %arg2[%c42] : memref<121xf32, #tpu.memory_space<smem>>
    %522 = vector.broadcast %521 : f32 to vector<1x44x128xf32>
    %523 = arith.mulf %520, %522 : vector<1x44x128xf32>
    %524 = arith.addf %519, %523 : vector<1x44x128xf32>
    %525 = vector.extract_strided_slice %505 {offsets = [0, 8, 0], sizes = [1, 44, 128], strides = [1, 1, 1]} : vector<1x64x128xf32> to vector<1x44x128xf32>
    %c53 = arith.constant 53 : index
    %526 = memref.load %arg2[%c53] : memref<121xf32, #tpu.memory_space<smem>>
    %527 = vector.broadcast %526 : f32 to vector<1x44x128xf32>
    %528 = arith.mulf %525, %527 : vector<1x44x128xf32>
    %529 = arith.addf %524, %528 : vector<1x44x128xf32>
    %530 = vector.extract_strided_slice %505 {offsets = [0, 10, 0], sizes = [1, 44, 128], strides = [1, 1, 1]} : vector<1x64x128xf32> to vector<1x44x128xf32>
    %c64 = arith.constant 64 : index
    %531 = memref.load %arg2[%c64] : memref<121xf32, #tpu.memory_space<smem>>
    %532 = vector.broadcast %531 : f32 to vector<1x44x128xf32>
    %533 = arith.mulf %530, %532 : vector<1x44x128xf32>
    %534 = arith.addf %529, %533 : vector<1x44x128xf32>
    %535 = vector.extract_strided_slice %505 {offsets = [0, 12, 0], sizes = [1, 44, 128], strides = [1, 1, 1]} : vector<1x64x128xf32> to vector<1x44x128xf32>
    %c75 = arith.constant 75 : index
    %536 = memref.load %arg2[%c75] : memref<121xf32, #tpu.memory_space<smem>>
    %537 = vector.broadcast %536 : f32 to vector<1x44x128xf32>
    %538 = arith.mulf %535, %537 : vector<1x44x128xf32>
    %539 = arith.addf %534, %538 : vector<1x44x128xf32>
    %540 = vector.extract_strided_slice %505 {offsets = [0, 14, 0], sizes = [1, 44, 128], strides = [1, 1, 1]} : vector<1x64x128xf32> to vector<1x44x128xf32>
    %c86 = arith.constant 86 : index
    %541 = memref.load %arg2[%c86] : memref<121xf32, #tpu.memory_space<smem>>
    %542 = vector.broadcast %541 : f32 to vector<1x44x128xf32>
    %543 = arith.mulf %540, %542 : vector<1x44x128xf32>
    %544 = arith.addf %539, %543 : vector<1x44x128xf32>
    %545 = vector.extract_strided_slice %505 {offsets = [0, 16, 0], sizes = [1, 44, 128], strides = [1, 1, 1]} : vector<1x64x128xf32> to vector<1x44x128xf32>
    %c97 = arith.constant 97 : index
    %546 = memref.load %arg2[%c97] : memref<121xf32, #tpu.memory_space<smem>>
    %547 = vector.broadcast %546 : f32 to vector<1x44x128xf32>
    %548 = arith.mulf %545, %547 : vector<1x44x128xf32>
    %549 = arith.addf %544, %548 : vector<1x44x128xf32>
    %550 = vector.extract_strided_slice %505 {offsets = [0, 18, 0], sizes = [1, 44, 128], strides = [1, 1, 1]} : vector<1x64x128xf32> to vector<1x44x128xf32>
    %c108 = arith.constant 108 : index
    %551 = memref.load %arg2[%c108] : memref<121xf32, #tpu.memory_space<smem>>
    %552 = vector.broadcast %551 : f32 to vector<1x44x128xf32>
    %553 = arith.mulf %550, %552 : vector<1x44x128xf32>
    %554 = arith.addf %549, %553 : vector<1x44x128xf32>
    %555 = vector.extract_strided_slice %505 {offsets = [0, 20, 0], sizes = [1, 44, 128], strides = [1, 1, 1]} : vector<1x64x128xf32> to vector<1x44x128xf32>
    %c119 = arith.constant 119 : index
    %556 = memref.load %arg2[%c119] : memref<121xf32, #tpu.memory_space<smem>>
    %557 = vector.broadcast %556 : f32 to vector<1x44x128xf32>
    %558 = arith.mulf %555, %557 : vector<1x44x128xf32>
    %559 = arith.addf %554, %558 : vector<1x44x128xf32>
    %560 = arith.addf %504, %559 : vector<1x44x128xf32>
    %c0_29 = arith.constant 0 : index
    %c0_30 = arith.constant 0 : index
    %c20_31 = arith.constant 20 : index
    %561 = vector.load %arg1[%c0_29, %c0_30, %c20_31] : memref<1x64x148xf32, #tpu.memory_space<vmem>>, vector<1x64x128xf32>
    %562 = vector.extract_strided_slice %561 {offsets = [0, 0, 0], sizes = [1, 44, 128], strides = [1, 1, 1]} : vector<1x64x128xf32> to vector<1x44x128xf32>
    %c10_32 = arith.constant 10 : index
    %563 = memref.load %arg2[%c10_32] : memref<121xf32, #tpu.memory_space<smem>>
    %564 = vector.broadcast %563 : f32 to vector<1x44x128xf32>
    %565 = arith.mulf %562, %564 : vector<1x44x128xf32>
    %566 = vector.extract_strided_slice %561 {offsets = [0, 2, 0], sizes = [1, 44, 128], strides = [1, 1, 1]} : vector<1x64x128xf32> to vector<1x44x128xf32>
    %c21 = arith.constant 21 : index
    %567 = memref.load %arg2[%c21] : memref<121xf32, #tpu.memory_space<smem>>
    %568 = vector.broadcast %567 : f32 to vector<1x44x128xf32>
    %569 = arith.mulf %566, %568 : vector<1x44x128xf32>
    %570 = arith.addf %565, %569 : vector<1x44x128xf32>
    %571 = vector.extract_strided_slice %561 {offsets = [0, 4, 0], sizes = [1, 44, 128], strides = [1, 1, 1]} : vector<1x64x128xf32> to vector<1x44x128xf32>
    %c32 = arith.constant 32 : index
    %572 = memref.load %arg2[%c32] : memref<121xf32, #tpu.memory_space<smem>>
    %573 = vector.broadcast %572 : f32 to vector<1x44x128xf32>
    %574 = arith.mulf %571, %573 : vector<1x44x128xf32>
    %575 = arith.addf %570, %574 : vector<1x44x128xf32>
    %576 = vector.extract_strided_slice %561 {offsets = [0, 6, 0], sizes = [1, 44, 128], strides = [1, 1, 1]} : vector<1x64x128xf32> to vector<1x44x128xf32>
    %c43 = arith.constant 43 : index
    %577 = memref.load %arg2[%c43] : memref<121xf32, #tpu.memory_space<smem>>
    %578 = vector.broadcast %577 : f32 to vector<1x44x128xf32>
    %579 = arith.mulf %576, %578 : vector<1x44x128xf32>
    %580 = arith.addf %575, %579 : vector<1x44x128xf32>
    %581 = vector.extract_strided_slice %561 {offsets = [0, 8, 0], sizes = [1, 44, 128], strides = [1, 1, 1]} : vector<1x64x128xf32> to vector<1x44x128xf32>
    %c54 = arith.constant 54 : index
    %582 = memref.load %arg2[%c54] : memref<121xf32, #tpu.memory_space<smem>>
    %583 = vector.broadcast %582 : f32 to vector<1x44x128xf32>
    %584 = arith.mulf %581, %583 : vector<1x44x128xf32>
    %585 = arith.addf %580, %584 : vector<1x44x128xf32>
    %586 = vector.extract_strided_slice %561 {offsets = [0, 10, 0], sizes = [1, 44, 128], strides = [1, 1, 1]} : vector<1x64x128xf32> to vector<1x44x128xf32>
    %c65 = arith.constant 65 : index
    %587 = memref.load %arg2[%c65] : memref<121xf32, #tpu.memory_space<smem>>
    %588 = vector.broadcast %587 : f32 to vector<1x44x128xf32>
    %589 = arith.mulf %586, %588 : vector<1x44x128xf32>
    %590 = arith.addf %585, %589 : vector<1x44x128xf32>
    %591 = vector.extract_strided_slice %561 {offsets = [0, 12, 0], sizes = [1, 44, 128], strides = [1, 1, 1]} : vector<1x64x128xf32> to vector<1x44x128xf32>
    %c76 = arith.constant 76 : index
    %592 = memref.load %arg2[%c76] : memref<121xf32, #tpu.memory_space<smem>>
    %593 = vector.broadcast %592 : f32 to vector<1x44x128xf32>
    %594 = arith.mulf %591, %593 : vector<1x44x128xf32>
    %595 = arith.addf %590, %594 : vector<1x44x128xf32>
    %596 = vector.extract_strided_slice %561 {offsets = [0, 14, 0], sizes = [1, 44, 128], strides = [1, 1, 1]} : vector<1x64x128xf32> to vector<1x44x128xf32>
    %c87 = arith.constant 87 : index
    %597 = memref.load %arg2[%c87] : memref<121xf32, #tpu.memory_space<smem>>
    %598 = vector.broadcast %597 : f32 to vector<1x44x128xf32>
    %599 = arith.mulf %596, %598 : vector<1x44x128xf32>
    %600 = arith.addf %595, %599 : vector<1x44x128xf32>
    %601 = vector.extract_strided_slice %561 {offsets = [0, 16, 0], sizes = [1, 44, 128], strides = [1, 1, 1]} : vector<1x64x128xf32> to vector<1x44x128xf32>
    %c98 = arith.constant 98 : index
    %602 = memref.load %arg2[%c98] : memref<121xf32, #tpu.memory_space<smem>>
    %603 = vector.broadcast %602 : f32 to vector<1x44x128xf32>
    %604 = arith.mulf %601, %603 : vector<1x44x128xf32>
    %605 = arith.addf %600, %604 : vector<1x44x128xf32>
    %606 = vector.extract_strided_slice %561 {offsets = [0, 18, 0], sizes = [1, 44, 128], strides = [1, 1, 1]} : vector<1x64x128xf32> to vector<1x44x128xf32>
    %c109 = arith.constant 109 : index
    %607 = memref.load %arg2[%c109] : memref<121xf32, #tpu.memory_space<smem>>
    %608 = vector.broadcast %607 : f32 to vector<1x44x128xf32>
    %609 = arith.mulf %606, %608 : vector<1x44x128xf32>
    %610 = arith.addf %605, %609 : vector<1x44x128xf32>
    %611 = vector.extract_strided_slice %561 {offsets = [0, 20, 0], sizes = [1, 44, 128], strides = [1, 1, 1]} : vector<1x64x128xf32> to vector<1x44x128xf32>
    %c120 = arith.constant 120 : index
    %612 = memref.load %arg2[%c120] : memref<121xf32, #tpu.memory_space<smem>>
    %613 = vector.broadcast %612 : f32 to vector<1x44x128xf32>
    %614 = arith.mulf %611, %613 : vector<1x44x128xf32>
    %615 = arith.addf %610, %614 : vector<1x44x128xf32>
    %616 = arith.addf %560, %615 : vector<1x44x128xf32>
    %617 = math.tanh %616 : vector<1x44x128xf32>
    %c0_33 = arith.constant 0 : index
    %c0_34 = arith.constant 0 : index
    %c0_35 = arith.constant 0 : index
    %618 = vector.load %arg3[%c0_33, %c0_34, %c0_35] : memref<1x44x128xf32, #tpu.memory_space<vmem>>, vector<1x44x128xf32>
    tpu.vector_store %arg3[%c0_33, %c0_34, %c0_35], %617 {strides = array<i32>} : memref<1x44x128xf32, #tpu.memory_space<vmem>>, vector<1x44x128xf32>,
    return
  }
  func.func @transform_0(%arg0: i32) -> (i32, i32, i32) {
    %c0_i32 = arith.constant 0 : i32
    %c0_i32_0 = arith.constant 0 : i32
    %c0_i32_1 = arith.constant 0 : i32
    return %arg0, %c0_i32, %c0_i32_0 : i32, i32, i32
  }
  func.func @transform_1(%arg0: i32) -> i32 {
    %c0_i32 = arith.constant 0 : i32
    %c0_i32_0 = arith.constant 0 : i32
    return %c0_i32 : i32
  }
  func.func @transform_2(%arg0: i32) -> (i32, i32, i32) {
    %c0_i32 = arith.constant 0 : i32
    %c0_i32_0 = arith.constant 0 : i32
    %c0_i32_1 = arith.constant 0 : i32
    return %arg0, %c0_i32, %c0_i32_0 : i32, i32, i32
  }
}

</mosaic_0001>

<llo_original>
// kernel: tpu_custom_call.1
$region0: #{tpu_custom_call.1}
  #allocation0 [shape = 'u32[]', space=smem, size = 0x4, offset = 0x4, fixed_abs, tag = 'smem constant byte address 0x4 - core index']
  #allocation1 [shape = 'u32[72,128]{1,0:T(1,128)}', space=vmem, size = 0x9000, scoped, tag = 'internal scratch']
  %s0 = inlined_call_operand.hbm [shape: f32[2,64,148], index: 0, kind: input, shape index: {}]
  %s1 = inlined_call_operand.hbm [shape: f32[121], index: 1, kind: input, shape index: {}]
  %s2 = inlined_call_operand.vmem [shape: f32[2,44,128], index: 2, kind: output, shape index: {}]
  %s3 = sld [smem:[#allocation0]]
  $region49: #{tpu_custom_call.1} parent=0
    _
  %s5 = ssub.s32 1, %s3
  %s6 = scalar_select 0, %s5, %s3
  $region1: #{tpu_custom_call.1} parent=0
    #allocation2 [shape = 'u8[131072]{0}', space=vmem, size = 0x20000, scoped, tag = 'input window, operand 0']
    #allocation3 [shape = 's32[2]{0}', space=sflag, size = 0x8, scoped, tag = 'scoped memory for tpu_custom_call.1']
    #allocation4 [shape = 's32[2]{0}', space=sflag, size = 0x8, scoped, tag = 'scoped memory for tpu_custom_call.1']
    #allocation5 [shape = 'u8[512]{0}', space=smem, size = 0x200, scoped, tag = 'input window, operand 1, single buffered']
    %7 = vsyncpa [#allocation3], 0
    %s8 = scalar_lea.sflag [#allocation3], 1
    %9 = vsyncpa %s8, 0
    %10 = vsyncpa [#allocation4], 0
    loop: start=0, step=1, limit=4
    $region2: #{tpu_custom_call.1} parent=1 // loop_pre_header
      _
    $region3: #{tpu_custom_call.1} parent=1 // loop_header
      %s12 = sphi 0, %s16
      %p13 = scmp.ge.s32.totalorder %s12, 4
      %s22 = sphi 0, %s24
      %s25 = sphi 0, %s22
      %s26 = sphi 0, %s25
      %s42 = sphi 0, %s26
      %s46 = sphi 0, %s46
      %s48 = sphi 0, %s46
      %s49 = sphi 0, %s48
      %s63 = sphi 0, %s49
      %s69 = sphi 0, %s71
      %s72 = sphi 0, %s69
      %s73 = sphi 0, %s72
      %s89 = sphi 0, %s73
    $region4: #{tpu_custom_call.1} parent=1 // loop_header_branch
      %15 = sbr.rel (%p13) target = $region8
    $region5: #{tpu_custom_call.1} parent=1 // loop_body
      %s17 = ssub.s32 %s12, 1
      %s18 = ssub.s32 %s12, 2
      %s19 = sadd.s32 %s12, 1
      %s20 = ssub.s32 %s12, %s19
      %p21 = scmp.eq.s32.totalorder %s20, 0
      %s23 = sadd.s32 %s22, 1
      %s24 = scalar_select %p21, %s22, %s23
      %p27 = pneg %p21
      %p28 = scmp.eq.s32.totalorder %s12, 1
      %p29 = por %p27, %p28
      %p30 = scmp.ne.s32.totalorder %s22, %s25
      %p31 = scmp.eq.s32.totalorder %s12, 0
      %p32 = por %p30, %p31
      %p33 = scmp.ne.s32.totalorder %s22, %s25
      %p34 = scmp.eq.s32.totalorder %s17, 1
      %p35 = por %p33, %p34
      %p36 = scmp.ne.s32.totalorder %s25, %s26
      %p37 = scmp.eq.s32.totalorder %s17, 0
      %p38 = por %p36, %p37
      %p39 = scmp.ne.s32.totalorder %s25, %s26
      %p40 = scmp.eq.s32.totalorder %s18, 1
      %p41 = por %p39, %p40
      %p43 = scmp.ne.s32.totalorder %s26, %s42
      %p44 = scmp.eq.s32.totalorder %s18, 0
      %p45 = por %p43, %p44
      %s47 = sadd.s32 %s46, 1
      %p50 = scmp.eq.s32.totalorder %s12, 1
      %p51 = scmp.ne.s32.totalorder %s46, %s48
      %p52 = scmp.eq.s32.totalorder %s12, 0
      %p53 = por %p51, %p52
      %p54 = scmp.ne.s32.totalorder %s46, %s48
      %p55 = scmp.eq.s32.totalorder %s17, 1
      %p56 = por %p54, %p55
      %p57 = scmp.ne.s32.totalorder %s48, %s49
      %p58 = scmp.eq.s32.totalorder %s17, 0
      %p59 = por %p57, %p58
      %p60 = scmp.ne.s32.totalorder %s48, %s49
      %p61 = scmp.eq.s32.totalorder %s18, 1
      %p62 = por %p60, %p61
      %p64 = scmp.ne.s32.totalorder %s49, %s63
      %p65 = scmp.eq.s32.totalorder %s18, 0
      %p66 = por %p64, %p65
      %s67 = ssub.s32 %s12, %s19
      %p68 = scmp.eq.s32.totalorder %s67, 0
      %s70 = sadd.s32 %s69, 1
      %s71 = scalar_select %p68, %s69, %s70
      %p74 = pneg %p68
      %p75 = scmp.eq.s32.totalorder %s12, 1
      %p76 = por %p74, %p75
      %p77 = scmp.ne.s32.totalorder %s69, %s72
      %p78 = scmp.eq.s32.totalorder %s12, 0
      %p79 = por %p77, %p78
      %p80 = scmp.ne.s32.totalorder %s69, %s72
      %p81 = scmp.eq.s32.totalorder %s17, 1
      %p82 = por %p80, %p81
      %p83 = scmp.ne.s32.totalorder %s72, %s73
      %p84 = scmp.eq.s32.totalorder %s17, 0
      %p85 = por %p83, %p84
      %p86 = scmp.ne.s32.totalorder %s72, %s73
      %p87 = scmp.eq.s32.totalorder %s18, 1
      %p88 = por %p86, %p87
      %p90 = scmp.ne.s32.totalorder %s73, %s89
      %p91 = scmp.eq.s32.totalorder %s18, 0
      %p92 = por %p90, %p91
      %p93 = scmp.le.s32.totalorder 1, %s12
      %p94 = scmp.lt.s32.totalorder %s12, 3
      %p95 = pnand %p93, %p94
      %p96 = pneg %p95
      // Predicated region
      $region9: #{tpu_custom_call.1} parent=5 // pred_check
        _
      $region10: #{tpu_custom_call.1} parent=5 // pred_check_branch
        %98 = sbr.rel (%p95) target = $region12
      $region11: #{tpu_custom_call.1} parent=5 // pred_region
        %s99 = ssub.s32 %s12, 1
        // Predicated region
        $region13: #{tpu_custom_call.1} parent=11 // pred_check
          %p100 = pneg %p59
        $region14: #{tpu_custom_call.1} parent=11 // pred_check_branch
          %102 = sbr.rel (%p100) target = $region16
        $region15: #{tpu_custom_call.1} parent=11 // pred_region
          %104 = vsyncadd [#allocation4], 0
          %s106 = sshll.u32 %s1, 4
          %s107 = int_to_ptr.hbm [resolvable:$true] %s106
          %109 = dma.hbm_to_smem %s107, 16, [#allocation5], [#allocation4]
        $region16: #{tpu_custom_call.1} parent=11 // pred_fallthru
          _
      $region12: #{tpu_custom_call.1} parent=5 // pred_fallthru
        _
      %p110 = scmp.lt.s32.totalorder %s12, 2
      // Predicated region
      $region17: #{tpu_custom_call.1} parent=5 // pred_check
        %p111 = pneg %p110
      $region18: #{tpu_custom_call.1} parent=5 // pred_check_branch
        %113 = sbr.rel (%p111) target = $region20
      $region19: #{tpu_custom_call.1} parent=5 // pred_region
        // Predicated region
        $region21: #{tpu_custom_call.1} parent=19 // pred_check
          %p114 = pneg %p32
        $region22: #{tpu_custom_call.1} parent=19 // pred_check_branch
          %116 = sbr.rel (%p114) target = $region24
        $region23: #{tpu_custom_call.1} parent=19 // pred_region
          %s117 = sand.u32 %s22, 1
          %s118 = scalar_lea.sflag [#allocation3], %s117
          %s119 = sand.u32 %s22, 1
          %s120 = smul.addr %s119, 128
          %s121 = scalar_lea.vmem [#allocation2], %s120
          %123 = vsyncadd %s118, 0
          %s124 = smul.addr %s12, 16
          %s125 = smul.addr %s124, 8
          %s126 = scalar_lea.hbm %s0, %s125
          %s127 = sshll.u32 %s126, 4
          %s128 = int_to_ptr.hbm [resolvable:$true] %s127
          %s129 = sshll.u32 %s121, 4
          %s130 = int_to_ptr.vmem [resolvable:$true] %s129
          %135 = dma.hbm_to_vmem [thread:$0]  %s128, 2048, %s130, %s118, 256, 256, 16
        $region24: #{tpu_custom_call.1} parent=19 // pred_fallthru
          _
      $region20: #{tpu_custom_call.1} parent=5 // pred_fallthru
        _
      %p136 = scmp.le.s32.totalorder 1, %s12
      %p137 = scmp.lt.s32.totalorder %s12, 3
      %p138 = pnand %p136, %p137
      %p139 = pneg %p138
      // Predicated region
      $region25: #{tpu_custom_call.1} parent=5 // pred_check
        _
      $region26: #{tpu_custom_call.1} parent=5 // pred_check_branch
        %141 = sbr.rel (%p138) target = $region28
      $region27: #{tpu_custom_call.1} parent=5 // pred_region
        %s142 = ssub.s32 %s12, 1
        %s143 = sand.u32 %s25, 1
        %s144 = scalar_lea.sflag [#allocation3], %s143
        %s145 = sand.u32 %s25, 1
        %s146 = smul.addr %s145, 128
        %s147 = scalar_lea.vmem [#allocation2], %s146
        // Predicated region
        $region29: #{tpu_custom_call.1} parent=27 // pred_check
          %p148 = pneg %p38
        $region30: #{tpu_custom_call.1} parent=27 // pred_check_branch
          %150 = sbr.rel (%p148) target = $region32
        $region31: #{tpu_custom_call.1} parent=27 // pred_region
          %152 = dma.done %s144, 2048
        $region32: #{tpu_custom_call.1} parent=27 // pred_fallthru
          _
        // Predicated region
        $region33: #{tpu_custom_call.1} parent=27 // pred_check
          %p153 = pneg %p59
        $region34: #{tpu_custom_call.1} parent=27 // pred_check_branch
          %155 = sbr.rel (%p153) target = $region36
        $region35: #{tpu_custom_call.1} parent=27 // pred_region
          %157 = dma.done [#allocation4], 16
        $region36: #{tpu_custom_call.1} parent=27 // pred_fallthru
          _
        %158 = sfence
        %s159 = sand.u32 %s25, 1
        %s160 = scalar_lea.sflag [#allocation3], %s159
        %s161 = sand.u32 %s25, 1
        %s162 = smul.addr %s161, 128
        %s163 = scalar_lea.vmem [#allocation2], %s162
        %p164 = pneg %p38
        %p165 = pneg %p35
        %p166 = pneg %p59
        %p167 = pneg %p56
        %p168 = pneg %p85
        %p169 = pneg %p82
        %p170 = scmp.lt.s32.totalorder %s17, 1
        %s171 = scalar_select %p170, %s17, 1
        %s172 = smul.addr %s171, 6
        %s173 = smul.addr %s172, 8
        %s174 = scalar_lea.vmem %s2, %s173
        %p175 = scmp.lt.s32.totalorder %s17, 1
        %s176 = scalar_select %p175, %s17, 1
        %s177 = smul.addr %s176, 6
        %s178 = smul.addr %s177, 8
        %s179 = scalar_lea.vmem %s2, %s178
        %v180 = vld [vmem:[%s147] sm:$0xff]
        %v181 = vld [vmem:[%s147 + $0x10] sm:$0xff]
        %v182 = vld [vmem:[%s147 + $0x20] sm:$0xff]
        %v183 = vld [vmem:[%s147 + $0x30] sm:$0xff]
        %v184 = vld [vmem:[%s147 + $0x40] sm:$0xff]
        %v185 = vld [vmem:[%s147 + $0x50] sm:$0xff]
        %v186 = vld [vmem:[%s147 + $0x60] sm:$0xff]
        %v187 = vld [vmem:[%s147 + $0x70] sm:$0xff]
        %s188 = sld [smem:[#allocation5]]
        %v189 = vstv %s188
        %v190 = vmul.f32 %v180, %v189
        %v191 = vmul.f32 %v181, %v189
        %v192 = vmul.f32 %v182, %v189
        %v193 = vmul.f32 %v183, %v189
        %v194 = vmul.f32 %v184, %v189
        %v195 = vmul.f32 %v185, %v189
        %s196 = sld [smem:[#allocation5 + $0xb]]
        %v197 = vstv %s196
        %v198 = vmul.f32 %v180, %v197
        %v199 = vmul.f32 %v181, %v197
        %v200 = vmul.f32 %v182, %v197
        %v201 = vmul.f32 %v183, %v197
        %v202 = vmul.f32 %v184, %v197
        %v203 = vmul.f32 %v185, %v197
        %vm210 = vcmask 1045504
        %v211 = vrot.slane %v198, 2
        %v212 = vrot.slane %v199, 2
        %v213 = vsel %vm210, %v211, %v212
        %v214 = vrot.slane %v200, 2
        %v215 = vsel %vm210, %v212, %v214
        %v216 = vrot.slane %v201, 2
        %v217 = vsel %vm210, %v214, %v216
        %v218 = vrot.slane %v202, 2
        %v219 = vsel %vm210, %v216, %v218
        %v220 = vrot.slane %v203, 2
        %v221 = vsel %vm210, %v218, %v220
        %v228 = vadd.f32 %v190, %v213
        %v229 = vadd.f32 %v191, %v215
        %v230 = vadd.f32 %v192, %v217
        %v231 = vadd.f32 %v193, %v219
        %v232 = vadd.f32 %v194, %v221
        %v233 = vadd.f32 %v195, %v220
        %s234 = sld [smem:[#allocation5 + $0x16]]
        %v235 = vstv %s234
        %v236 = vmul.f32 %v180, %v235
        %v237 = vmul.f32 %v181, %v235
        %v238 = vmul.f32 %v182, %v235
        %v239 = vmul.f32 %v183, %v235
        %v240 = vmul.f32 %v184, %v235
        %v241 = vmul.f32 %v185, %v235
        %vm248 = vcmask 1043456
        %v249 = vrot.slane %v236, 4
        %v250 = vrot.slane %v237, 4
        %v251 = vsel %vm248, %v249, %v250
        %v252 = vrot.slane %v238, 4
        %v253 = vsel %vm248, %v250, %v252
        %v254 = vrot.slane %v239, 4
        %v255 = vsel %vm248, %v252, %v254
        %v256 = vrot.slane %v240, 4
        %v257 = vsel %vm248, %v254, %v256
        %v258 = vrot.slane %v241, 4
        %v259 = vsel %vm248, %v256, %v258
        %v266 = vadd.f32 %v228, %v251
        %v267 = vadd.f32 %v229, %v253
        %v268 = vadd.f32 %v230, %v255
        %v269 = vadd.f32 %v231, %v257
        %v270 = vadd.f32 %v232, %v259
        %v271 = vadd.f32 %v233, %v258
        %s272 = sld [smem:[#allocation5 + $0x21]]
        %v273 = vstv %s272
        %v274 = vmul.f32 %v180, %v273
        %v275 = vmul.f32 %v181, %v273
        %v276 = vmul.f32 %v182, %v273
        %v277 = vmul.f32 %v183, %v273
        %v278 = vmul.f32 %v184, %v273
        %v279 = vmul.f32 %v185, %v273
        %v280 = vmul.f32 %v186, %v273
        %vm288 = vcmask 1041408
        %v289 = vrot.slane %v274, 6
        %v290 = vrot.slane %v275, 6
        %v291 = vsel %vm288, %v289, %v290
        %v292 = vrot.slane %v276, 6
        %v293 = vsel %vm288, %v290, %v292
        %v294 = vrot.slane %v277, 6
        %v295 = vsel %vm288, %v292, %v294
        %v296 = vrot.slane %v278, 6
        %v297 = vsel %vm288, %v294, %v296
        %v298 = vrot.slane %v279, 6
        %v299 = vsel %vm288, %v296, %v298
        %v300 = vrot.slane %v280, 6
        %v301 = vsel %vm288, %v298, %v300
        %v308 = vadd.f32 %v266, %v291
        %v309 = vadd.f32 %v267, %v293
        %v310 = vadd.f32 %v268, %v295
        %v311 = vadd.f32 %v269, %v297
        %v312 = vadd.f32 %v270, %v299
        %v313 = vadd.f32 %v271, %v301
        %s314 = sld [smem:[#allocation5 + $0x2c]]
        %v315 = vstv %s314
        %v316 = vmul.f32 %v181, %v315
        %v317 = vmul.f32 %v182, %v315
        %v318 = vmul.f32 %v183, %v315
        %v319 = vmul.f32 %v184, %v315
        %v320 = vmul.f32 %v185, %v315
        %v321 = vmul.f32 %v186, %v315
        %v322 = vadd.f32 %v308, %v316
        %v323 = vadd.f32 %v309, %v317
        %v324 = vadd.f32 %v310, %v318
        %v325 = vadd.f32 %v311, %v319
        %v326 = vadd.f32 %v312, %v320
        %v327 = vadd.f32 %v313, %v321
        %s328 = sld [smem:[#allocation5 + $0x37]]
        %v329 = vstv %s328
        %v330 = vmul.f32 %v181, %v329
        %v331 = vmul.f32 %v182, %v329
        %v332 = vmul.f32 %v183, %v329
        %v333 = vmul.f32 %v184, %v329
        %v334 = vmul.f32 %v185, %v329
        %v335 = vmul.f32 %v186, %v329
        %v342 = vrot.slane %v330, 2
        %v343 = vrot.slane %v331, 2
        %v344 = vsel %vm210, %v342, %v343
        %v345 = vrot.slane %v332, 2
        %v346 = vsel %vm210, %v343, %v345
        %v347 = vrot.slane %v333, 2
        %v348 = vsel %vm210, %v345, %v347
        %v349 = vrot.slane %v334, 2
        %v350 = vsel %vm210, %v347, %v349
        %v351 = vrot.slane %v335, 2
        %v352 = vsel %vm210, %v349, %v351
        %v359 = vadd.f32 %v322, %v344
        %v360 = vadd.f32 %v323, %v346
        %v361 = vadd.f32 %v324, %v348
        %v362 = vadd.f32 %v325, %v350
        %v363 = vadd.f32 %v326, %v352
        %v364 = vadd.f32 %v327, %v351
        %s365 = sld [smem:[#allocation5 + $0x42]]
        %v366 = vstv %s365
        %v367 = vmul.f32 %v181, %v366
        %v368 = vmul.f32 %v182, %v366
        %v369 = vmul.f32 %v183, %v366
        %v370 = vmul.f32 %v184, %v366
        %v371 = vmul.f32 %v185, %v366
        %v372 = vmul.f32 %v186, %v366
        %v379 = vrot.slane %v367, 4
        %v380 = vrot.slane %v368, 4
        %v381 = vsel %vm248, %v379, %v380
        %v382 = vrot.slane %v369, 4
        %v383 = vsel %vm248, %v380, %v382
        %v384 = vrot.slane %v370, 4
        %v385 = vsel %vm248, %v382, %v384
        %v386 = vrot.slane %v371, 4
        %v387 = vsel %vm248, %v384, %v386
        %v388 = vrot.slane %v372, 4
        %v389 = vsel %vm248, %v386, %v388
        %v396 = vadd.f32 %v359, %v381
        %v397 = vadd.f32 %v360, %v383
        %v398 = vadd.f32 %v361, %v385
        %v399 = vadd.f32 %v362, %v387
        %v400 = vadd.f32 %v363, %v389
        %v401 = vadd.f32 %v364, %v388
        %s402 = sld [smem:[#allocation5 + $0x4d]]
        %v403 = vstv %s402
        %v404 = vmul.f32 %v181, %v403
        %v405 = vmul.f32 %v182, %v403
        %v406 = vmul.f32 %v183, %v403
        %v407 = vmul.f32 %v184, %v403
        %v408 = vmul.f32 %v185, %v403
        %v409 = vmul.f32 %v186, %v403
        %v410 = vmul.f32 %v187, %v403
        %v418 = vrot.slane %v404, 6
        %v419 = vrot.slane %v405, 6
        %v420 = vsel %vm288, %v418, %v419
        %v421 = vrot.slane %v406, 6
        %v422 = vsel %vm288, %v419, %v421
        %v423 = vrot.slane %v407, 6
        %v424 = vsel %vm288, %v421, %v423
        %v425 = vrot.slane %v408, 6
        %v426 = vsel %vm288, %v423, %v425
        %v427 = vrot.slane %v409, 6
        %v428 = vsel %vm288, %v425, %v427
        %v429 = vrot.slane %v410, 6
        %v430 = vsel %vm288, %v427, %v429
        %v437 = vadd.f32 %v396, %v420
        %v438 = vadd.f32 %v397, %v422
        %v439 = vadd.f32 %v398, %v424
        %v440 = vadd.f32 %v399, %v426
        %v441 = vadd.f32 %v400, %v428
        %v442 = vadd.f32 %v401, %v430
        %s443 = sld [smem:[#allocation5 + $0x58]]
        %v444 = vstv %s443
        %v445 = vmul.f32 %v182, %v444
        %v446 = vmul.f32 %v183, %v444
        %v447 = vmul.f32 %v184, %v444
        %v448 = vmul.f32 %v185, %v444
        %v449 = vmul.f32 %v186, %v444
        %v450 = vmul.f32 %v187, %v444
        %v451 = vadd.f32 %v437, %v445
        %v452 = vadd.f32 %v438, %v446
        %v453 = vadd.f32 %v439, %v447
        %v454 = vadd.f32 %v440, %v448
        %v455 = vadd.f32 %v441, %v449
        %v456 = vadd.f32 %v442, %v450
        %s457 = sld [smem:[#allocation5 + $0x63]]
        %v458 = vstv %s457
        %v459 = vmul.f32 %v182, %v458
        %v460 = vmul.f32 %v183, %v458
        %v461 = vmul.f32 %v184, %v458
        %v462 = vmul.f32 %v185, %v458
        %v463 = vmul.f32 %v186, %v458
        %v464 = vmul.f32 %v187, %v458
        %v471 = vrot.slane %v459, 2
        %v472 = vrot.slane %v460, 2
        %v473 = vsel %vm210, %v471, %v472
        %v474 = vrot.slane %v461, 2
        %v475 = vsel %vm210, %v472, %v474
        %v476 = vrot.slane %v462, 2
        %v477 = vsel %vm210, %v474, %v476
        %v478 = vrot.slane %v463, 2
        %v479 = vsel %vm210, %v476, %v478
        %v480 = vrot.slane %v464, 2
        %v481 = vsel %vm210, %v478, %v480
        %v488 = vadd.f32 %v451, %v473
        %v489 = vadd.f32 %v452, %v475
        %v490 = vadd.f32 %v453, %v477
        %v491 = vadd.f32 %v454, %v479
        %v492 = vadd.f32 %v455, %v481
        %v493 = vadd.f32 %v456, %v480
        %s494 = sld [smem:[#allocation5 + $0x6e]]
        %v495 = vstv %s494
        %v496 = vmul.f32 %v182, %v495
        %v497 = vmul.f32 %v183, %v495
        %v498 = vmul.f32 %v184, %v495
        %v499 = vmul.f32 %v185, %v495
        %v500 = vmul.f32 %v186, %v495
        %v501 = vmul.f32 %v187, %v495
        %v508 = vrot.slane %v496, 4
        %v509 = vrot.slane %v497, 4
        %v510 = vsel %vm248, %v508, %v509
        %v511 = vrot.slane %v498, 4
        %v512 = vsel %vm248, %v509, %v511
        %v513 = vrot.slane %v499, 4
        %v514 = vsel %vm248, %v511, %v513
        %v515 = vrot.slane %v500, 4
        %v516 = vsel %vm248, %v513, %v515
        %v517 = vrot.slane %v501, 4
        %v518 = vsel %vm248, %v515, %v517
        %v525 = vadd.f32 %v488, %v510
        %v526 = vadd.f32 %v489, %v512
        %v527 = vadd.f32 %v490, %v514
        %v528 = vadd.f32 %v491, %v516
        %v529 = vadd.f32 %v492, %v518
        %v530 = vadd.f32 %v493, %v517
        %v531 = vadd.f32 %v525, 0.0
        %v532 = vadd.f32 %v526, 0.0
        %v533 = vadd.f32 %v527, 0.0
        %v534 = vadd.f32 %v528, 0.0
        %v535 = vadd.f32 %v529, 0.0
        %v536 = vadd.f32 %v530, 0.0
        %v537 = vld [vmem:[%s147] sm:$0xff]
        %v538 = vld [vmem:[%s147 + $0x8] sm:$0xff]
        %v539 = vld [vmem:[%s147 + $0x10] sm:$0xff]
        %v540 = vld [vmem:[%s147 + $0x18] sm:$0xff]
        %v541 = vld [vmem:[%s147 + $0x20] sm:$0xff]
        %v542 = vld [vmem:[%s147 + $0x28] sm:$0xff]
        %v543 = vld [vmem:[%s147 + $0x30] sm:$0xff]
        %v544 = vld [vmem:[%s147 + $0x38] sm:$0xff]
        %v545 = vld [vmem:[%s147 + $0x40] sm:$0xff]
        %v546 = vld [vmem:[%s147 + $0x48] sm:$0xff]
        %v547 = vld [vmem:[%s147 + $0x50] sm:$0xff]
        %v548 = vld [vmem:[%s147 + $0x58] sm:$0xff]
        %v549 = vld [vmem:[%s147 + $0x60] sm:$0xff]
        %v550 = vld [vmem:[%s147 + $0x68] sm:$0xff]
        %v551 = vld [vmem:[%s147 + $0x70] sm:$0xff]
        %v552 = vld [vmem:[%s147 + $0x78] sm:$0xff]
        %s553 = sld [smem:[#allocation5 + $0x1]]
        %v554 = vstv %s553
        %v555 = vmul.f32 %v537, %v554
        %v556 = vmul.f32 %v538, %v554
        %v557 = vmul.f32 %v539, %v554
        %v558 = vmul.f32 %v540, %v554
        %v559 = vmul.f32 %v541, %v554
        %v560 = vmul.f32 %v542, %v554
        %v561 = vmul.f32 %v543, %v554
        %v562 = vmul.f32 %v544, %v554
        %v563 = vmul.f32 %v545, %v554
        %v564 = vmul.f32 %v546, %v554
        %v565 = vmul.f32 %v547, %v554
        %v566 = vmul.f32 %v548, %v554
        %s567 = sld [smem:[#allocation5 + $0xc]]
        %v568 = vstv %s567
        %v569 = vmul.f32 %v537, %v568
        %v570 = vmul.f32 %v538, %v568
        %v571 = vmul.f32 %v539, %v568
        %v572 = vmul.f32 %v540, %v568
        %v573 = vmul.f32 %v541, %v568
        %v574 = vmul.f32 %v542, %v568
        %v575 = vmul.f32 %v543, %v568
        %v576 = vmul.f32 %v544, %v568
        %v577 = vmul.f32 %v545, %v568
        %v578 = vmul.f32 %v546, %v568
        %v579 = vmul.f32 %v547, %v568
        %v580 = vmul.f32 %v548, %v568
        %v593 = vrot.slane %v569, 2
        %v594 = vrot.slane %v571, 2
        %v595 = vsel %vm210, %v593, %v594
        %v596 = vrot.slane %v570, 2
        %v597 = vrot.slane %v572, 2
        %v598 = vsel %vm210, %v596, %v597
        %v599 = vrot.slane %v573, 2
        %v600 = vsel %vm210, %v594, %v599
        %v601 = vrot.slane %v574, 2
        %v602 = vsel %vm210, %v597, %v601
        %v603 = vrot.slane %v575, 2
        %v604 = vsel %vm210, %v599, %v603
        %v605 = vrot.slane %v576, 2
        %v606 = vsel %vm210, %v601, %v605
        %v607 = vrot.slane %v577, 2
        %v608 = vsel %vm210, %v603, %v607
        %v609 = vrot.slane %v578, 2
        %v610 = vsel %vm210, %v605, %v609
        %v611 = vrot.slane %v579, 2
        %v612 = vsel %vm210, %v607, %v611
        %v613 = vrot.slane %v580, 2
        %v614 = vsel %vm210, %v609, %v613
        %v627 = vadd.f32 %v555, %v595
        %v628 = vadd.f32 %v556, %v598
        %v629 = vadd.f32 %v557, %v600
        %v630 = vadd.f32 %v558, %v602
        %v631 = vadd.f32 %v559, %v604
        %v632 = vadd.f32 %v560, %v606
        %v633 = vadd.f32 %v561, %v608
        %v634 = vadd.f32 %v562, %v610
        %v635 = vadd.f32 %v563, %v612
        %v636 = vadd.f32 %v564, %v614
        %v637 = vadd.f32 %v565, %v611
        %v638 = vadd.f32 %v566, %v613
        %s639 = sld [smem:[#allocation5 + $0x17]]
        %v640 = vstv %s639
        %v641 = vmul.f32 %v537, %v640
        %v642 = vmul.f32 %v538, %v640
        %v643 = vmul.f32 %v539, %v640
        %v644 = vmul.f32 %v540, %v640
        %v645 = vmul.f32 %v541, %v640
        %v646 = vmul.f32 %v542, %v640
        %v647 = vmul.f32 %v543, %v640
        %v648 = vmul.f32 %v544, %v640
        %v649 = vmul.f32 %v545, %v640
        %v650 = vmul.f32 %v546, %v640
        %v651 = vmul.f32 %v547, %v640
        %v652 = vmul.f32 %v548, %v640
        %v665 = vrot.slane %v641, 4
        %v666 = vrot.slane %v643, 4
        %v667 = vsel %vm248, %v665, %v666
        %v668 = vrot.slane %v642, 4
        %v669 = vrot.slane %v644, 4
        %v670 = vsel %vm248, %v668, %v669
        %v671 = vrot.slane %v645, 4
        %v672 = vsel %vm248, %v666, %v671
        %v673 = vrot.slane %v646, 4
        %v674 = vsel %vm248, %v669, %v673
        %v675 = vrot.slane %v647, 4
        %v676 = vsel %vm248, %v671, %v675
        %v677 = vrot.slane %v648, 4
        %v678 = vsel %vm248, %v673, %v677
        %v679 = vrot.slane %v649, 4
        %v680 = vsel %vm248, %v675, %v679
        %v681 = vrot.slane %v650, 4
        %v682 = vsel %vm248, %v677, %v681
        %v683 = vrot.slane %v651, 4
        %v684 = vsel %vm248, %v679, %v683
        %v685 = vrot.slane %v652, 4
        %v686 = vsel %vm248, %v681, %v685
        %v699 = vadd.f32 %v627, %v667
        %v700 = vadd.f32 %v628, %v670
        %v701 = vadd.f32 %v629, %v672
        %v702 = vadd.f32 %v630, %v674
        %v703 = vadd.f32 %v631, %v676
        %v704 = vadd.f32 %v632, %v678
        %v705 = vadd.f32 %v633, %v680
        %v706 = vadd.f32 %v634, %v682
        %v707 = vadd.f32 %v635, %v684
        %v708 = vadd.f32 %v636, %v686
        %v709 = vadd.f32 %v637, %v683
        %v710 = vadd.f32 %v638, %v685
        %s711 = sld [smem:[#allocation5 + $0x22]]
        %v712 = vstv %s711
        %v713 = vmul.f32 %v537, %v712
        %v714 = vmul.f32 %v538, %v712
        %v715 = vmul.f32 %v539, %v712
        %v716 = vmul.f32 %v540, %v712
        %v717 = vmul.f32 %v541, %v712
        %v718 = vmul.f32 %v542, %v712
        %v719 = vmul.f32 %v543, %v712
        %v720 = vmul.f32 %v544, %v712
        %v721 = vmul.f32 %v545, %v712
        %v722 = vmul.f32 %v546, %v712
        %v723 = vmul.f32 %v547, %v712
        %v724 = vmul.f32 %v548, %v712
        %v725 = vmul.f32 %v549, %v712
        %v726 = vmul.f32 %v550, %v712
        %v741 = vrot.slane %v713, 6
        %v742 = vrot.slane %v715, 6
        %v743 = vsel %vm288, %v741, %v742
        %v744 = vrot.slane %v714, 6
        %v745 = vrot.slane %v716, 6
        %v746 = vsel %vm288, %v744, %v745
        %v747 = vrot.slane %v717, 6
        %v748 = vsel %vm288, %v742, %v747
        %v749 = vrot.slane %v718, 6
        %v750 = vsel %vm288, %v745, %v749
        %v751 = vrot.slane %v719, 6
        %v752 = vsel %vm288, %v747, %v751
        %v753 = vrot.slane %v720, 6
        %v754 = vsel %vm288, %v749, %v753
        %v755 = vrot.slane %v721, 6
        %v756 = vsel %vm288, %v751, %v755
        %v757 = vrot.slane %v722, 6
        %v758 = vsel %vm288, %v753, %v757
        %v759 = vrot.slane %v723, 6
        %v760 = vsel %vm288, %v755, %v759
        %v761 = vrot.slane %v724, 6
        %v762 = vsel %vm288, %v757, %v761
        %v763 = vrot.slane %v725, 6
        %v764 = vsel %vm288, %v759, %v763
        %v765 = vrot.slane %v726, 6
        %v766 = vsel %vm288, %v761, %v765
        %v779 = vadd.f32 %v699, %v743
        %v780 = vadd.f32 %v700, %v746
        %v781 = vadd.f32 %v701, %v748
        %v782 = vadd.f32 %v702, %v750
        %v783 = vadd.f32 %v703, %v752
        %v784 = vadd.f32 %v704, %v754
        %v785 = vadd.f32 %v705, %v756
        %v786 = vadd.f32 %v706, %v758
        %v787 = vadd.f32 %v707, %v760
        %v788 = vadd.f32 %v708, %v762
        %v789 = vadd.f32 %v709, %v764
        %v790 = vadd.f32 %v710, %v766
        %s791 = sld [smem:[#allocation5 + $0x2d]]
        %v792 = vstv %s791
        %v793 = vmul.f32 %v539, %v792
        %v794 = vmul.f32 %v540, %v792
        %v795 = vmul.f32 %v541, %v792
        %v796 = vmul.f32 %v542, %v792
        %v797 = vmul.f32 %v543, %v792
        %v798 = vmul.f32 %v544, %v792
        %v799 = vmul.f32 %v545, %v792
        %v800 = vmul.f32 %v546, %v792
        %v801 = vmul.f32 %v547, %v792
        %v802 = vmul.f32 %v548, %v792
        %v803 = vmul.f32 %v549, %v792
        %v804 = vmul.f32 %v550, %v792
        %v805 = vadd.f32 %v779, %v793
        %v806 = vadd.f32 %v780, %v794
        %v807 = vadd.f32 %v781, %v795
        %v808 = vadd.f32 %v782, %v796
        %v809 = vadd.f32 %v783, %v797
        %v810 = vadd.f32 %v784, %v798
        %v811 = vadd.f32 %v785, %v799
        %v812 = vadd.f32 %v786, %v800
        %v813 = vadd.f32 %v787, %v801
        %v814 = vadd.f32 %v788, %v802
        %v815 = vadd.f32 %v789, %v803
        %v816 = vadd.f32 %v790, %v804
        %s817 = sld [smem:[#allocation5 + $0x38]]
        %v818 = vstv %s817
        %v819 = vmul.f32 %v539, %v818
        %v820 = vmul.f32 %v540, %v818
        %v821 = vmul.f32 %v541, %v818
        %v822 = vmul.f32 %v542, %v818
        %v823 = vmul.f32 %v543, %v818
        %v824 = vmul.f32 %v544, %v818
        %v825 = vmul.f32 %v545, %v818
        %v826 = vmul.f32 %v546, %v818
        %v827 = vmul.f32 %v547, %v818
        %v828 = vmul.f32 %v548, %v818
        %v829 = vmul.f32 %v549, %v818
        %v830 = vmul.f32 %v550, %v818
        %v843 = vrot.slane %v819, 2
        %v844 = vrot.slane %v821, 2
        %v845 = vsel %vm210, %v843, %v844
        %v846 = vrot.slane %v820, 2
        %v847 = vrot.slane %v822, 2
        %v848 = vsel %vm210, %v846, %v847
        %v849 = vrot.slane %v823, 2
        %v850 = vsel %vm210, %v844, %v849
        %v851 = vrot.slane %v824, 2
        %v852 = vsel %vm210, %v847, %v851
        %v853 = vrot.slane %v825, 2
        %v854 = vsel %vm210, %v849, %v853
        %v855 = vrot.slane %v826, 2
        %v856 = vsel %vm210, %v851, %v855
        %v857 = vrot.slane %v827, 2
        %v858 = vsel %vm210, %v853, %v857
        %v859 = vrot.slane %v828, 2
        %v860 = vsel %vm210, %v855, %v859
        %v861 = vrot.slane %v829, 2
        %v862 = vsel %vm210, %v857, %v861
        %v863 = vrot.slane %v830, 2
        %v864 = vsel %vm210, %v859, %v863
        %v877 = vadd.f32 %v805, %v845
        %v878 = vadd.f32 %v806, %v848
        %v879 = vadd.f32 %v807, %v850
        %v880 = vadd.f32 %v808, %v852
        %v881 = vadd.f32 %v809, %v854
        %v882 = vadd.f32 %v810, %v856
        %v883 = vadd.f32 %v811, %v858
        %v884 = vadd.f32 %v812, %v860
        %v885 = vadd.f32 %v813, %v862
        %v886 = vadd.f32 %v814, %v864
        %v887 = vadd.f32 %v815, %v861
        %v888 = vadd.f32 %v816, %v863
        %s889 = sld [smem:[#allocation5 + $0x43]]
        %v890 = vstv %s889
        %v891 = vmul.f32 %v539, %v890
        %v892 = vmul.f32 %v540, %v890
        %v893 = vmul.f32 %v541, %v890
        %v894 = vmul.f32 %v542, %v890
        %v895 = vmul.f32 %v543, %v890
        %v896 = vmul.f32 %v544, %v890
        %v897 = vmul.f32 %v545, %v890
        %v898 = vmul.f32 %v546, %v890
        %v899 = vmul.f32 %v547, %v890
        %v900 = vmul.f32 %v548, %v890
        %v901 = vmul.f32 %v549, %v890
        %v902 = vmul.f32 %v550, %v890
        %v915 = vrot.slane %v891, 4
        %v916 = vrot.slane %v893, 4
        %v917 = vsel %vm248, %v915, %v916
        %v918 = vrot.slane %v892, 4
        %v919 = vrot.slane %v894, 4
        %v920 = vsel %vm248, %v918, %v919
        %v921 = vrot.slane %v895, 4
        %v922 = vsel %vm248, %v916, %v921
        %v923 = vrot.slane %v896, 4
        %v924 = vsel %vm248, %v919, %v923
        %v925 = vrot.slane %v897, 4
        %v926 = vsel %vm248, %v921, %v925
        %v927 = vrot.slane %v898, 4
        %v928 = vsel %vm248, %v923, %v927
        %v929 = vrot.slane %v899, 4
        %v930 = vsel %vm248, %v925, %v929
        %v931 = vrot.slane %v900, 4
        %v932 = vsel %vm248, %v927, %v931
        %v933 = vrot.slane %v901, 4
        %v934 = vsel %vm248, %v929, %v933
        %v935 = vrot.slane %v902, 4
        %v936 = vsel %vm248, %v931, %v935
        %v949 = vadd.f32 %v877, %v917
        %v950 = vadd.f32 %v878, %v920
        %v951 = vadd.f32 %v879, %v922
        %v952 = vadd.f32 %v880, %v924
        %v953 = vadd.f32 %v881, %v926
        %v954 = vadd.f32 %v882, %v928
        %v955 = vadd.f32 %v883, %v930
        %v956 = vadd.f32 %v884, %v932
        %v957 = vadd.f32 %v885, %v934
        %v958 = vadd.f32 %v886, %v936
        %v959 = vadd.f32 %v887, %v933
        %v960 = vadd.f32 %v888, %v935
        %s961 = sld [smem:[#allocation5 + $0x4e]]
        %v962 = vstv %s961
        %v963 = vmul.f32 %v539, %v962
        %v964 = vmul.f32 %v540, %v962
        %v965 = vmul.f32 %v541, %v962
        %v966 = vmul.f32 %v542, %v962
        %v967 = vmul.f32 %v543, %v962
        %v968 = vmul.f32 %v544, %v962
        %v969 = vmul.f32 %v545, %v962
        %v970 = vmul.f32 %v546, %v962
        %v971 = vmul.f32 %v547, %v962
        %v972 = vmul.f32 %v548, %v962
        %v973 = vmul.f32 %v549, %v962
        %v974 = vmul.f32 %v550, %v962
        %v975 = vmul.f32 %v551, %v962
        %v976 = vmul.f32 %v552, %v962
        %v991 = vrot.slane %v963, 6
        %v992 = vrot.slane %v965, 6
        %v993 = vsel %vm288, %v991, %v992
        %v994 = vrot.slane %v964, 6
        %v995 = vrot.slane %v966, 6
        %v996 = vsel %vm288, %v994, %v995
        %v997 = vrot.slane %v967, 6
        %v998 = vsel %vm288, %v992, %v997
        %v999 = vrot.slane %v968, 6
        %v1000 = vsel %vm288, %v995, %v999
        %v1001 = vrot.slane %v969, 6
        %v1002 = vsel %vm288, %v997, %v1001
        %v1003 = vrot.slane %v970, 6
        %v1004 = vsel %vm288, %v999, %v1003
        %v1005 = vrot.slane %v971, 6
        %v1006 = vsel %vm288, %v1001, %v1005
        %v1007 = vrot.slane %v972, 6
        %v1008 = vsel %vm288, %v1003, %v1007
        %v1009 = vrot.slane %v973, 6
        %v1010 = vsel %vm288, %v1005, %v1009
        %v1011 = vrot.slane %v974, 6
        %v1012 = vsel %vm288, %v1007, %v1011
        %v1013 = vrot.slane %v975, 6
        %v1014 = vsel %vm288, %v1009, %v1013
        %v1015 = vrot.slane %v976, 6
        %v1016 = vsel %vm288, %v1011, %v1015
        %v1029 = vadd.f32 %v949, %v993
        %v1030 = vadd.f32 %v950, %v996
        %v1031 = vadd.f32 %v951, %v998
        %v1032 = vadd.f32 %v952, %v1000
        %v1033 = vadd.f32 %v953, %v1002
        %v1034 = vadd.f32 %v954, %v1004
        %v1035 = vadd.f32 %v955, %v1006
        %v1036 = vadd.f32 %v956, %v1008
        %v1037 = vadd.f32 %v957, %v1010
        %v1038 = vadd.f32 %v958, %v1012
        %v1039 = vadd.f32 %v959, %v1014
        %v1040 = vadd.f32 %v960, %v1016
        %s1041 = sld [smem:[#allocation5 + $0x59]]
        %v1042 = vstv %s1041
        %v1043 = vmul.f32 %v541, %v1042
        %v1044 = vmul.f32 %v542, %v1042
        %v1045 = vmul.f32 %v543, %v1042
        %v1046 = vmul.f32 %v544, %v1042
        %v1047 = vmul.f32 %v545, %v1042
        %v1048 = vmul.f32 %v546, %v1042
        %v1049 = vmul.f32 %v547, %v1042
        %v1050 = vmul.f32 %v548, %v1042
        %v1051 = vmul.f32 %v549, %v1042
        %v1052 = vmul.f32 %v550, %v1042
        %v1053 = vmul.f32 %v551, %v1042
        %v1054 = vmul.f32 %v552, %v1042
        %v1055 = vadd.f32 %v1029, %v1043
        %v1056 = vadd.f32 %v1030, %v1044
        %v1057 = vadd.f32 %v1031, %v1045
        %v1058 = vadd.f32 %v1032, %v1046
        %v1059 = vadd.f32 %v1033, %v1047
        %v1060 = vadd.f32 %v1034, %v1048
        %v1061 = vadd.f32 %v1035, %v1049
        %v1062 = vadd.f32 %v1036, %v1050
        %v1063 = vadd.f32 %v1037, %v1051
        %v1064 = vadd.f32 %v1038, %v1052
        %v1065 = vadd.f32 %v1039, %v1053
        %v1066 = vadd.f32 %v1040, %v1054
        %s1067 = sld [smem:[#allocation5 + $0x64]]
        %v1068 = vstv %s1067
        %v1069 = vmul.f32 %v541, %v1068
        %v1070 = vmul.f32 %v542, %v1068
        %v1071 = vmul.f32 %v543, %v1068
        %v1072 = vmul.f32 %v544, %v1068
        %v1073 = vmul.f32 %v545, %v1068
        %v1074 = vmul.f32 %v546, %v1068
        %v1075 = vmul.f32 %v547, %v1068
        %v1076 = vmul.f32 %v548, %v1068
        %v1077 = vmul.f32 %v549, %v1068
        %v1078 = vmul.f32 %v550, %v1068
        %v1079 = vmul.f32 %v551, %v1068
        %v1080 = vmul.f32 %v552, %v1068
        %v1093 = vrot.slane %v1069, 2
        %v1094 = vrot.slane %v1071, 2
        %v1095 = vsel %vm210, %v1093, %v1094
        %v1096 = vrot.slane %v1070, 2
        %v1097 = vrot.slane %v1072, 2
        %v1098 = vsel %vm210, %v1096, %v1097
        %v1099 = vrot.slane %v1073, 2
        %v1100 = vsel %vm210, %v1094, %v1099
        %v1101 = vrot.slane %v1074, 2
        %v1102 = vsel %vm210, %v1097, %v1101
        %v1103 = vrot.slane %v1075, 2
        %v1104 = vsel %vm210, %v1099, %v1103
        %v1105 = vrot.slane %v1076, 2
        %v1106 = vsel %vm210, %v1101, %v1105
        %v1107 = vrot.slane %v1077, 2
        %v1108 = vsel %vm210, %v1103, %v1107
        %v1109 = vrot.slane %v1078, 2
        %v1110 = vsel %vm210, %v1105, %v1109
        %v1111 = vrot.slane %v1079, 2
        %v1112 = vsel %vm210, %v1107, %v1111
        %v1113 = vrot.slane %v1080, 2
        %v1114 = vsel %vm210, %v1109, %v1113
        %v1127 = vadd.f32 %v1055, %v1095
        %v1128 = vadd.f32 %v1056, %v1098
        %v1129 = vadd.f32 %v1057, %v1100
        %v1130 = vadd.f32 %v1058, %v1102
        %v1131 = vadd.f32 %v1059, %v1104
        %v1132 = vadd.f32 %v1060, %v1106
        %v1133 = vadd.f32 %v1061, %v1108
        %v1134 = vadd.f32 %v1062, %v1110
        %v1135 = vadd.f32 %v1063, %v1112
        %v1136 = vadd.f32 %v1064, %v1114
        %v1137 = vadd.f32 %v1065, %v1111
        %v1138 = vadd.f32 %v1066, %v1113
        %s1139 = sld [smem:[#allocation5 + $0x6f]]
        %v1140 = vstv %s1139
        %v1141 = vmul.f32 %v541, %v1140
        %v1142 = vmul.f32 %v542, %v1140
        %v1143 = vmul.f32 %v543, %v1140
        %v1144 = vmul.f32 %v544, %v1140
        %v1145 = vmul.f32 %v545, %v1140
        %v1146 = vmul.f32 %v546, %v1140
        %v1147 = vmul.f32 %v547, %v1140
        %v1148 = vmul.f32 %v548, %v1140
        %v1149 = vmul.f32 %v549, %v1140
        %v1150 = vmul.f32 %v550, %v1140
        %v1151 = vmul.f32 %v551, %v1140
        %v1152 = vmul.f32 %v552, %v1140
        %v1165 = vrot.slane %v1141, 4
        %v1166 = vrot.slane %v1143, 4
        %v1167 = vsel %vm248, %v1165, %v1166
        %v1168 = vrot.slane %v1142, 4
        %v1169 = vrot.slane %v1144, 4
        %v1170 = vsel %vm248, %v1168, %v1169
        %v1171 = vrot.slane %v1145, 4
        %v1172 = vsel %vm248, %v1166, %v1171
        %v1173 = vrot.slane %v1146, 4
        %v1174 = vsel %vm248, %v1169, %v1173
        %v1175 = vrot.slane %v1147, 4
        %v1176 = vsel %vm248, %v1171, %v1175
        %v1177 = vrot.slane %v1148, 4
        %v1178 = vsel %vm248, %v1173, %v1177
        %v1179 = vrot.slane %v1149, 4
        %v1180 = vsel %vm248, %v1175, %v1179
        %v1181 = vrot.slane %v1150, 4
        %v1182 = vsel %vm248, %v1177, %v1181
        %v1183 = vrot.slane %v1151, 4
        %v1184 = vsel %vm248, %v1179, %v1183
        %v1185 = vrot.slane %v1152, 4
        %v1186 = vsel %vm248, %v1181, %v1185
        %v1199 = vadd.f32 %v1127, %v1167
        %v1200 = vadd.f32 %v1128, %v1170
        %v1201 = vadd.f32 %v1129, %v1172
        %v1202 = vadd.f32 %v1130, %v1174
        %v1203 = vadd.f32 %v1131, %v1176
        %v1204 = vadd.f32 %v1132, %v1178
        %v1205 = vadd.f32 %v1133, %v1180
        %v1206 = vadd.f32 %v1134, %v1182
        %v1207 = vadd.f32 %v1135, %v1184
        %v1208 = vadd.f32 %v1136, %v1186
        %v1209 = vadd.f32 %v1137, %v1183
        %v1210 = vadd.f32 %v1138, %v1185
        %1223 = vrot.lane.b32.xlu0 %v1199, 126
        %v1224 = vpop.permute.xlu0 %1223
        %1225 = vrot.lane.b32.xlu0 %v1200, 126
        %v1226 = vpop.permute.xlu0 %1225
        %1227 = vrot.lane.b32.xlu0 %v1201, 126
        %v1228 = vpop.permute.xlu0 %1227
        %1229 = vrot.lane.b32.xlu0 %v1202, 126
        %v1230 = vpop.permute.xlu0 %1229
        %1231 = vrot.lane.b32.xlu0 %v1203, 126
        %v1232 = vpop.permute.xlu0 %1231
        %1233 = vrot.lane.b32.xlu0 %v1204, 126
        %v1234 = vpop.permute.xlu0 %1233
        %1235 = vrot.lane.b32.xlu0 %v1205, 126
        %v1236 = vpop.permute.xlu0 %1235
        %1237 = vrot.lane.b32.xlu0 %v1206, 126
        %v1238 = vpop.permute.xlu0 %1237
        %1239 = vrot.lane.b32.xlu0 %v1207, 126
        %v1240 = vpop.permute.xlu0 %1239
        %1241 = vrot.lane.b32.xlu0 %v1208, 126
        %v1242 = vpop.permute.xlu0 %1241
        %1243 = vrot.lane.b32.xlu0 %v1209, 126
        %v1244 = vpop.permute.xlu0 %1243
        %1245 = vrot.lane.b32.xlu0 %v1210, 126
        %v1246 = vpop.permute.xlu0 %1245
        %vm1247 = vcmask 1031168
        %v1248 = vsel %vm1247, %v1224, %v1226
        %v1249 = vsel %vm1247, %v1228, %v1230
        %v1250 = vsel %vm1247, %v1232, %v1234
        %v1251 = vsel %vm1247, %v1236, %v1238
        %v1252 = vsel %vm1247, %v1240, %v1242
        %v1253 = vsel %vm1247, %v1244, %v1246
        %v1260 = vadd.f32 %v531, %v1248
        %v1261 = vadd.f32 %v532, %v1249
        %v1262 = vadd.f32 %v533, %v1250
        %v1263 = vadd.f32 %v534, %v1251
        %v1264 = vadd.f32 %v535, %v1252
        %v1265 = vadd.f32 %v536, %v1253
        %s1266 = sld [smem:[#allocation5 + $0x2]]
        %v1267 = vstv %s1266
        %v1268 = vmul.f32 %v537, %v1267
        %v1269 = vmul.f32 %v538, %v1267
        %v1270 = vmul.f32 %v539, %v1267
        %v1271 = vmul.f32 %v540, %v1267
        %v1272 = vmul.f32 %v541, %v1267
        %v1273 = vmul.f32 %v542, %v1267
        %v1274 = vmul.f32 %v543, %v1267
        %v1275 = vmul.f32 %v544, %v1267
        %v1276 = vmul.f32 %v545, %v1267
        %v1277 = vmul.f32 %v546, %v1267
        %v1278 = vmul.f32 %v547, %v1267
        %v1279 = vmul.f32 %v548, %v1267
        %s1280 = sld [smem:[#allocation5 + $0xd]]
        %v1281 = vstv %s1280
        %v1282 = vmul.f32 %v537, %v1281
        %v1283 = vmul.f32 %v538, %v1281
        %v1284 = vmul.f32 %v539, %v1281
        %v1285 = vmul.f32 %v540, %v1281
        %v1286 = vmul.f32 %v541, %v1281
        %v1287 = vmul.f32 %v542, %v1281
        %v1288 = vmul.f32 %v543, %v1281
        %v1289 = vmul.f32 %v544, %v1281
        %v1290 = vmul.f32 %v545, %v1281
        %v1291 = vmul.f32 %v546, %v1281
        %v1292 = vmul.f32 %v547, %v1281
        %v1293 = vmul.f32 %v548, %v1281
        %v1306 = vrot.slane %v1282, 2
        %v1307 = vrot.slane %v1284, 2
        %v1308 = vsel %vm210, %v1306, %v1307
        %v1309 = vrot.slane %v1283, 2
        %v1310 = vrot.slane %v1285, 2
        %v1311 = vsel %vm210, %v1309, %v1310
        %v1312 = vrot.slane %v1286, 2
        %v1313 = vsel %vm210, %v1307, %v1312
        %v1314 = vrot.slane %v1287, 2
        %v1315 = vsel %vm210, %v1310, %v1314
        %v1316 = vrot.slane %v1288, 2
        %v1317 = vsel %vm210, %v1312, %v1316
        %v1318 = vrot.slane %v1289, 2
        %v1319 = vsel %vm210, %v1314, %v1318
        %v1320 = vrot.slane %v1290, 2
        %v1321 = vsel %vm210, %v1316, %v1320
        %v1322 = vrot.slane %v1291, 2
        %v1323 = vsel %vm210, %v1318, %v1322
        %v1324 = vrot.slane %v1292, 2
        %v1325 = vsel %vm210, %v1320, %v1324
        %v1326 = vrot.slane %v1293, 2
        %v1327 = vsel %vm210, %v1322, %v1326
        %v1340 = vadd.f32 %v1268, %v1308
        %v1341 = vadd.f32 %v1269, %v1311
        %v1342 = vadd.f32 %v1270, %v1313
        %v1343 = vadd.f32 %v1271, %v1315
        %v1344 = vadd.f32 %v1272, %v1317
        %v1345 = vadd.f32 %v1273, %v1319
        %v1346 = vadd.f32 %v1274, %v1321
        %v1347 = vadd.f32 %v1275, %v1323
        %v1348 = vadd.f32 %v1276, %v1325
        %v1349 = vadd.f32 %v1277, %v1327
        %v1350 = vadd.f32 %v1278, %v1324
        %v1351 = vadd.f32 %v1279, %v1326
        %s1352 = sld [smem:[#allocation5 + $0x18]]
        %v1353 = vstv %s1352
        %v1354 = vmul.f32 %v537, %v1353
        %v1355 = vmul.f32 %v538, %v1353
        %v1356 = vmul.f32 %v539, %v1353
        %v1357 = vmul.f32 %v540, %v1353
        %v1358 = vmul.f32 %v541, %v1353
        %v1359 = vmul.f32 %v542, %v1353
        %v1360 = vmul.f32 %v543, %v1353
        %v1361 = vmul.f32 %v544, %v1353
        %v1362 = vmul.f32 %v545, %v1353
        %v1363 = vmul.f32 %v546, %v1353
        %v1364 = vmul.f32 %v547, %v1353
        %v1365 = vmul.f32 %v548, %v1353
        %v1378 = vrot.slane %v1354, 4
        %v1379 = vrot.slane %v1356, 4
        %v1380 = vsel %vm248, %v1378, %v1379
        %v1381 = vrot.slane %v1355, 4
        %v1382 = vrot.slane %v1357, 4
        %v1383 = vsel %vm248, %v1381, %v1382
        %v1384 = vrot.slane %v1358, 4
        %v1385 = vsel %vm248, %v1379, %v1384
        %v1386 = vrot.slane %v1359, 4
        %v1387 = vsel %vm248, %v1382, %v1386
        %v1388 = vrot.slane %v1360, 4
        %v1389 = vsel %vm248, %v1384, %v1388
        %v1390 = vrot.slane %v1361, 4
        %v1391 = vsel %vm248, %v1386, %v1390
        %v1392 = vrot.slane %v1362, 4
        %v1393 = vsel %vm248, %v1388, %v1392
        %v1394 = vrot.slane %v1363, 4
        %v1395 = vsel %vm248, %v1390, %v1394
        %v1396 = vrot.slane %v1364, 4
        %v1397 = vsel %vm248, %v1392, %v1396
        %v1398 = vrot.slane %v1365, 4
        %v1399 = vsel %vm248, %v1394, %v1398
        %v1412 = vadd.f32 %v1340, %v1380
        %v1413 = vadd.f32 %v1341, %v1383
        %v1414 = vadd.f32 %v1342, %v1385
        %v1415 = vadd.f32 %v1343, %v1387
        %v1416 = vadd.f32 %v1344, %v1389
        %v1417 = vadd.f32 %v1345, %v1391
        %v1418 = vadd.f32 %v1346, %v1393
        %v1419 = vadd.f32 %v1347, %v1395
        %v1420 = vadd.f32 %v1348, %v1397
        %v1421 = vadd.f32 %v1349, %v1399
        %v1422 = vadd.f32 %v1350, %v1396
        %v1423 = vadd.f32 %v1351, %v1398
        %s1424 = sld [smem:[#allocation5 + $0x23]]
        %v1425 = vstv %s1424
        %v1426 = vmul.f32 %v537, %v1425
        %v1427 = vmul.f32 %v538, %v1425
        %v1428 = vmul.f32 %v539, %v1425
        %v1429 = vmul.f32 %v540, %v1425
        %v1430 = vmul.f32 %v541, %v1425
        %v1431 = vmul.f32 %v542, %v1425
        %v1432 = vmul.f32 %v543, %v1425
        %v1433 = vmul.f32 %v544, %v1425
        %v1434 = vmul.f32 %v545, %v1425
        %v1435 = vmul.f32 %v546, %v1425
        %v1436 = vmul.f32 %v547, %v1425
        %v1437 = vmul.f32 %v548, %v1425
        %v1438 = vmul.f32 %v549, %v1425
        %v1439 = vmul.f32 %v550, %v1425
        %v1454 = vrot.slane %v1426, 6
        %v1455 = vrot.slane %v1428, 6
        %v1456 = vsel %vm288, %v1454, %v1455
        %v1457 = vrot.slane %v1427, 6
        %v1458 = vrot.slane %v1429, 6
        %v1459 = vsel %vm288, %v1457, %v1458
        %v1460 = vrot.slane %v1430, 6
        %v1461 = vsel %vm288, %v1455, %v1460
        %v1462 = vrot.slane %v1431, 6
        %v1463 = vsel %vm288, %v1458, %v1462
        %v1464 = vrot.slane %v1432, 6
        %v1465 = vsel %vm288, %v1460, %v1464
        %v1466 = vrot.slane %v1433, 6
        %v1467 = vsel %vm288, %v1462, %v1466
        %v1468 = vrot.slane %v1434, 6
        %v1469 = vsel %vm288, %v1464, %v1468
        %v1470 = vrot.slane %v1435, 6
        %v1471 = vsel %vm288, %v1466, %v1470
        %v1472 = vrot.slane %v1436, 6
        %v1473 = vsel %vm288, %v1468, %v1472
        %v1474 = vrot.slane %v1437, 6
        %v1475 = vsel %vm288, %v1470, %v1474
        %v1476 = vrot.slane %v1438, 6
        %v1477 = vsel %vm288, %v1472, %v1476
        %v1478 = vrot.slane %v1439, 6
        %v1479 = vsel %vm288, %v1474, %v1478
        %v1492 = vadd.f32 %v1412, %v1456
        %v1493 = vadd.f32 %v1413, %v1459
        %v1494 = vadd.f32 %v1414, %v1461
        %v1495 = vadd.f32 %v1415, %v1463
        %v1496 = vadd.f32 %v1416, %v1465
        %v1497 = vadd.f32 %v1417, %v1467
        %v1498 = vadd.f32 %v1418, %v1469
        %v1499 = vadd.f32 %v1419, %v1471
        %v1500 = vadd.f32 %v1420, %v1473
        %v1501 = vadd.f32 %v1421, %v1475
        %v1502 = vadd.f32 %v1422, %v1477
        %v1503 = vadd.f32 %v1423, %v1479
        %s1504 = sld [smem:[#allocation5 + $0x2e]]
        %v1505 = vstv %s1504
        %v1506 = vmul.f32 %v539, %v1505
        %v1507 = vmul.f32 %v540, %v1505
        %v1508 = vmul.f32 %v541, %v1505
        %v1509 = vmul.f32 %v542, %v1505
        %v1510 = vmul.f32 %v543, %v1505
        %v1511 = vmul.f32 %v544, %v1505
        %v1512 = vmul.f32 %v545, %v1505
        %v1513 = vmul.f32 %v546, %v1505
        %v1514 = vmul.f32 %v547, %v1505
        %v1515 = vmul.f32 %v548, %v1505
        %v1516 = vmul.f32 %v549, %v1505
        %v1517 = vmul.f32 %v550, %v1505
        %v1518 = vadd.f32 %v1492, %v1506
        %v1519 = vadd.f32 %v1493, %v1507
        %v1520 = vadd.f32 %v1494, %v1508
        %v1521 = vadd.f32 %v1495, %v1509
        %v1522 = vadd.f32 %v1496, %v1510
        %v1523 = vadd.f32 %v1497, %v1511
        %v1524 = vadd.f32 %v1498, %v1512
        %v1525 = vadd.f32 %v1499, %v1513
        %v1526 = vadd.f32 %v1500, %v1514
        %v1527 = vadd.f32 %v1501, %v1515
        %v1528 = vadd.f32 %v1502, %v1516
        %v1529 = vadd.f32 %v1503, %v1517
        %s1530 = sld [smem:[#allocation5 + $0x39]]
        %v1531 = vstv %s1530
        %v1532 = vmul.f32 %v539, %v1531
        %v1533 = vmul.f32 %v540, %v1531
        %v1534 = vmul.f32 %v541, %v1531
        %v1535 = vmul.f32 %v542, %v1531
        %v1536 = vmul.f32 %v543, %v1531
        %v1537 = vmul.f32 %v544, %v1531
        %v1538 = vmul.f32 %v545, %v1531
        %v1539 = vmul.f32 %v546, %v1531
        %v1540 = vmul.f32 %v547, %v1531
        %v1541 = vmul.f32 %v548, %v1531
        %v1542 = vmul.f32 %v549, %v1531
        %v1543 = vmul.f32 %v550, %v1531
        %v1556 = vrot.slane %v1532, 2
        %v1557 = vrot.slane %v1534, 2
        %v1558 = vsel %vm210, %v1556, %v1557
        %v1559 = vrot.slane %v1533, 2
        %v1560 = vrot.slane %v1535, 2
        %v1561 = vsel %vm210, %v1559, %v1560
        %v1562 = vrot.slane %v1536, 2
        %v1563 = vsel %vm210, %v1557, %v1562
        %v1564 = vrot.slane %v1537, 2
        %v1565 = vsel %vm210, %v1560, %v1564
        %v1566 = vrot.slane %v1538, 2
        %v1567 = vsel %vm210, %v1562, %v1566
        %v1568 = vrot.slane %v1539, 2
        %v1569 = vsel %vm210, %v1564, %v1568
        %v1570 = vrot.slane %v1540, 2
        %v1571 = vsel %vm210, %v1566, %v1570
        %v1572 = vrot.slane %v1541, 2
        %v1573 = vsel %vm210, %v1568, %v1572
        %v1574 = vrot.slane %v1542, 2
        %v1575 = vsel %vm210, %v1570, %v1574
        %v1576 = vrot.slane %v1543, 2
        %v1577 = vsel %vm210, %v1572, %v1576
        %v1590 = vadd.f32 %v1518, %v1558
        %v1591 = vadd.f32 %v1519, %v1561
        %v1592 = vadd.f32 %v1520, %v1563
        %v1593 = vadd.f32 %v1521, %v1565
        %v1594 = vadd.f32 %v1522, %v1567
        %v1595 = vadd.f32 %v1523, %v1569
        %v1596 = vadd.f32 %v1524, %v1571
        %v1597 = vadd.f32 %v1525, %v1573
        %v1598 = vadd.f32 %v1526, %v1575
        %v1599 = vadd.f32 %v1527, %v1577
        %v1600 = vadd.f32 %v1528, %v1574
        %v1601 = vadd.f32 %v1529, %v1576
        %s1602 = sld [smem:[#allocation5 + $0x44]]
        %v1603 = vstv %s1602
        %v1604 = vmul.f32 %v539, %v1603
        %v1605 = vmul.f32 %v540, %v1603
        %v1606 = vmul.f32 %v541, %v1603
        %v1607 = vmul.f32 %v542, %v1603
        %v1608 = vmul.f32 %v543, %v1603
        %v1609 = vmul.f32 %v544, %v1603
        %v1610 = vmul.f32 %v545, %v1603
        %v1611 = vmul.f32 %v546, %v1603
        %v1612 = vmul.f32 %v547, %v1603
        %v1613 = vmul.f32 %v548, %v1603
        %v1614 = vmul.f32 %v549, %v1603
        %v1615 = vmul.f32 %v550, %v1603
        %v1628 = vrot.slane %v1604, 4
        %v1629 = vrot.slane %v1606, 4
        %v1630 = vsel %vm248, %v1628, %v1629
        %v1631 = vrot.slane %v1605, 4
        %v1632 = vrot.slane %v1607, 4
        %v1633 = vsel %vm248, %v1631, %v1632
        %v1634 = vrot.slane %v1608, 4
        %v1635 = vsel %vm248, %v1629, %v1634
        %v1636 = vrot.slane %v1609, 4
        %v1637 = vsel %vm248, %v1632, %v1636
        %v1638 = vrot.slane %v1610, 4
        %v1639 = vsel %vm248, %v1634, %v1638
        %v1640 = vrot.slane %v1611, 4
        %v1641 = vsel %vm248, %v1636, %v1640
        %v1642 = vrot.slane %v1612, 4
        %v1643 = vsel %vm248, %v1638, %v1642
        %v1644 = vrot.slane %v1613, 4
        %v1645 = vsel %vm248, %v1640, %v1644
        %v1646 = vrot.slane %v1614, 4
        %v1647 = vsel %vm248, %v1642, %v1646
        %v1648 = vrot.slane %v1615, 4
        %v1649 = vsel %vm248, %v1644, %v1648
        %v1662 = vadd.f32 %v1590, %v1630
        %v1663 = vadd.f32 %v1591, %v1633
        %v1664 = vadd.f32 %v1592, %v1635
        %v1665 = vadd.f32 %v1593, %v1637
        %v1666 = vadd.f32 %v1594, %v1639
        %v1667 = vadd.f32 %v1595, %v1641
        %v1668 = vadd.f32 %v1596, %v1643
        %v1669 = vadd.f32 %v1597, %v1645
        %v1670 = vadd.f32 %v1598, %v1647
        %v1671 = vadd.f32 %v1599, %v1649
        %v1672 = vadd.f32 %v1600, %v1646
        %v1673 = vadd.f32 %v1601, %v1648
        %s1674 = sld [smem:[#allocation5 + $0x4f]]
        %v1675 = vstv %s1674
        %v1676 = vmul.f32 %v539, %v1675
        %v1677 = vmul.f32 %v540, %v1675
        %v1678 = vmul.f32 %v541, %v1675
        %v1679 = vmul.f32 %v542, %v1675
        %v1680 = vmul.f32 %v543, %v1675
        %v1681 = vmul.f32 %v544, %v1675
        %v1682 = vmul.f32 %v545, %v1675
        %v1683 = vmul.f32 %v546, %v1675
        %v1684 = vmul.f32 %v547, %v1675
        %v1685 = vmul.f32 %v548, %v1675
        %v1686 = vmul.f32 %v549, %v1675
        %v1687 = vmul.f32 %v550, %v1675
        %v1688 = vmul.f32 %v551, %v1675
        %v1689 = vmul.f32 %v552, %v1675
        %v1704 = vrot.slane %v1676, 6
        %v1705 = vrot.slane %v1678, 6
        %v1706 = vsel %vm288, %v1704, %v1705
        %v1707 = vrot.slane %v1677, 6
        %v1708 = vrot.slane %v1679, 6
        %v1709 = vsel %vm288, %v1707, %v1708
        %v1710 = vrot.slane %v1680, 6
        %v1711 = vsel %vm288, %v1705, %v1710
        %v1712 = vrot.slane %v1681, 6
        %v1713 = vsel %vm288, %v1708, %v1712
        %v1714 = vrot.slane %v1682, 6
        %v1715 = vsel %vm288, %v1710, %v1714
        %v1716 = vrot.slane %v1683, 6
        %v1717 = vsel %vm288, %v1712, %v1716
        %v1718 = vrot.slane %v1684, 6
        %v1719 = vsel %vm288, %v1714, %v1718
        %v1720 = vrot.slane %v1685, 6
        %v1721 = vsel %vm288, %v1716, %v1720
        %v1722 = vrot.slane %v1686, 6
        %v1723 = vsel %vm288, %v1718, %v1722
        %v1724 = vrot.slane %v1687, 6
        %v1725 = vsel %vm288, %v1720, %v1724
        %v1726 = vrot.slane %v1688, 6
        %v1727 = vsel %vm288, %v1722, %v1726
        %v1728 = vrot.slane %v1689, 6
        %v1729 = vsel %vm288, %v1724, %v1728
        %v1742 = vadd.f32 %v1662, %v1706
        %v1743 = vadd.f32 %v1663, %v1709
        %v1744 = vadd.f32 %v1664, %v1711
        %v1745 = vadd.f32 %v1665, %v1713
        %v1746 = vadd.f32 %v1666, %v1715
        %v1747 = vadd.f32 %v1667, %v1717
        %v1748 = vadd.f32 %v1668, %v1719
        %v1749 = vadd.f32 %v1669, %v1721
        %v1750 = vadd.f32 %v1670, %v1723
        %v1751 = vadd.f32 %v1671, %v1725
        %v1752 = vadd.f32 %v1672, %v1727
        %v1753 = vadd.f32 %v1673, %v1729
        %s1754 = sld [smem:[#allocation5 + $0x5a]]
        %v1755 = vstv %s1754
        %v1756 = vmul.f32 %v541, %v1755
        %v1757 = vmul.f32 %v542, %v1755
        %v1758 = vmul.f32 %v543, %v1755
        %v1759 = vmul.f32 %v544, %v1755
        %v1760 = vmul.f32 %v545, %v1755
        %v1761 = vmul.f32 %v546, %v1755
        %v1762 = vmul.f32 %v547, %v1755
        %v1763 = vmul.f32 %v548, %v1755
        %v1764 = vmul.f32 %v549, %v1755
        %v1765 = vmul.f32 %v550, %v1755
        %v1766 = vmul.f32 %v551, %v1755
        %v1767 = vmul.f32 %v552, %v1755
        %v1768 = vadd.f32 %v1742, %v1756
        %v1769 = vadd.f32 %v1743, %v1757
        %v1770 = vadd.f32 %v1744, %v1758
        %v1771 = vadd.f32 %v1745, %v1759
        %v1772 = vadd.f32 %v1746, %v1760
        %v1773 = vadd.f32 %v1747, %v1761
        %v1774 = vadd.f32 %v1748, %v1762
        %v1775 = vadd.f32 %v1749, %v1763
        %v1776 = vadd.f32 %v1750, %v1764
        %v1777 = vadd.f32 %v1751, %v1765
        %v1778 = vadd.f32 %v1752, %v1766
        %v1779 = vadd.f32 %v1753, %v1767
        %s1780 = sld [smem:[#allocation5 + $0x65]]
        %v1781 = vstv %s1780
        %v1782 = vmul.f32 %v541, %v1781
        %v1783 = vmul.f32 %v542, %v1781
        %v1784 = vmul.f32 %v543, %v1781
        %v1785 = vmul.f32 %v544, %v1781
        %v1786 = vmul.f32 %v545, %v1781
        %v1787 = vmul.f32 %v546, %v1781
        %v1788 = vmul.f32 %v547, %v1781
        %v1789 = vmul.f32 %v548, %v1781
        %v1790 = vmul.f32 %v549, %v1781
        %v1791 = vmul.f32 %v550, %v1781
        %v1792 = vmul.f32 %v551, %v1781
        %v1793 = vmul.f32 %v552, %v1781
        %v1806 = vrot.slane %v1782, 2
        %v1807 = vrot.slane %v1784, 2
        %v1808 = vsel %vm210, %v1806, %v1807
        %v1809 = vrot.slane %v1783, 2
        %v1810 = vrot.slane %v1785, 2
        %v1811 = vsel %vm210, %v1809, %v1810
        %v1812 = vrot.slane %v1786, 2
        %v1813 = vsel %vm210, %v1807, %v1812
        %v1814 = vrot.slane %v1787, 2
        %v1815 = vsel %vm210, %v1810, %v1814
        %v1816 = vrot.slane %v1788, 2
        %v1817 = vsel %vm210, %v1812, %v1816
        %v1818 = vrot.slane %v1789, 2
        %v1819 = vsel %vm210, %v1814, %v1818
        %v1820 = vrot.slane %v1790, 2
        %v1821 = vsel %vm210, %v1816, %v1820
        %v1822 = vrot.slane %v1791, 2
        %v1823 = vsel %vm210, %v1818, %v1822
        %v1824 = vrot.slane %v1792, 2
        %v1825 = vsel %vm210, %v1820, %v1824
        %v1826 = vrot.slane %v1793, 2
        %v1827 = vsel %vm210, %v1822, %v1826
        %v1840 = vadd.f32 %v1768, %v1808
        %v1841 = vadd.f32 %v1769, %v1811
        %v1842 = vadd.f32 %v1770, %v1813
        %v1843 = vadd.f32 %v1771, %v1815
        %v1844 = vadd.f32 %v1772, %v1817
        %v1845 = vadd.f32 %v1773, %v1819
        %v1846 = vadd.f32 %v1774, %v1821
        %v1847 = vadd.f32 %v1775, %v1823
        %v1848 = vadd.f32 %v1776, %v1825
        %v1849 = vadd.f32 %v1777, %v1827
        %v1850 = vadd.f32 %v1778, %v1824
        %v1851 = vadd.f32 %v1779, %v1826
        %s1852 = sld [smem:[#allocation5 + $0x70]]
        %v1853 = vstv %s1852
        %v1854 = vmul.f32 %v541, %v1853
        %v1855 = vmul.f32 %v542, %v1853
        %v1856 = vmul.f32 %v543, %v1853
        %v1857 = vmul.f32 %v544, %v1853
        %v1858 = vmul.f32 %v545, %v1853
        %v1859 = vmul.f32 %v546, %v1853
        %v1860 = vmul.f32 %v547, %v1853
        %v1861 = vmul.f32 %v548, %v1853
        %v1862 = vmul.f32 %v549, %v1853
        %v1863 = vmul.f32 %v550, %v1853
        %v1864 = vmul.f32 %v551, %v1853
        %v1865 = vmul.f32 %v552, %v1853
        %v1878 = vrot.slane %v1854, 4
        %v1879 = vrot.slane %v1856, 4
        %v1880 = vsel %vm248, %v1878, %v1879
        %v1881 = vrot.slane %v1855, 4
        %v1882 = vrot.slane %v1857, 4
        %v1883 = vsel %vm248, %v1881, %v1882
        %v1884 = vrot.slane %v1858, 4
        %v1885 = vsel %vm248, %v1879, %v1884
        %v1886 = vrot.slane %v1859, 4
        %v1887 = vsel %vm248, %v1882, %v1886
        %v1888 = vrot.slane %v1860, 4
        %v1889 = vsel %vm248, %v1884, %v1888
        %v1890 = vrot.slane %v1861, 4
        %v1891 = vsel %vm248, %v1886, %v1890
        %v1892 = vrot.slane %v1862, 4
        %v1893 = vsel %vm248, %v1888, %v1892
        %v1894 = vrot.slane %v1863, 4
        %v1895 = vsel %vm248, %v1890, %v1894
        %v1896 = vrot.slane %v1864, 4
        %v1897 = vsel %vm248, %v1892, %v1896
        %v1898 = vrot.slane %v1865, 4
        %v1899 = vsel %vm248, %v1894, %v1898
        %v1912 = vadd.f32 %v1840, %v1880
        %v1913 = vadd.f32 %v1841, %v1883
        %v1914 = vadd.f32 %v1842, %v1885
        %v1915 = vadd.f32 %v1843, %v1887
        %v1916 = vadd.f32 %v1844, %v1889
        %v1917 = vadd.f32 %v1845, %v1891
        %v1918 = vadd.f32 %v1846, %v1893
        %v1919 = vadd.f32 %v1847, %v1895
        %v1920 = vadd.f32 %v1848, %v1897
        %v1921 = vadd.f32 %v1849, %v1899
        %v1922 = vadd.f32 %v1850, %v1896
        %v1923 = vadd.f32 %v1851, %v1898
        %1936 = vrot.lane.b32.xlu0 %v1912, 124
        %v1937 = vpop.permute.xlu0 %1936
        %1938 = vrot.lane.b32.xlu0 %v1913, 124
        %v1939 = vpop.permute.xlu0 %1938
        %1940 = vrot.lane.b32.xlu0 %v1914, 124
        %v1941 = vpop.permute.xlu0 %1940
        %1942 = vrot.lane.b32.xlu0 %v1915, 124
        %v1943 = vpop.permute.xlu0 %1942
        %1944 = vrot.lane.b32.xlu0 %v1916, 124
        %v1945 = vpop.permute.xlu0 %1944
        %1946 = vrot.lane.b32.xlu0 %v1917, 124
        %v1947 = vpop.permute.xlu0 %1946
        %1948 = vrot.lane.b32.xlu0 %v1918, 124
        %v1949 = vpop.permute.xlu0 %1948
        %1950 = vrot.lane.b32.xlu0 %v1919, 124
        %v1951 = vpop.permute.xlu0 %1950
        %1952 = vrot.lane.b32.xlu0 %v1920, 124
        %v1953 = vpop.permute.xlu0 %1952
        %1954 = vrot.lane.b32.xlu0 %v1921, 124
        %v1955 = vpop.permute.xlu0 %1954
        %1956 = vrot.lane.b32.xlu0 %v1922, 124
        %v1957 = vpop.permute.xlu0 %1956
        %1958 = vrot.lane.b32.xlu0 %v1923, 124
        %v1959 = vpop.permute.xlu0 %1958
        %vm1960 = vcmask 1014784
        %v1961 = vsel %vm1960, %v1937, %v1939
        %v1962 = vsel %vm1960, %v1941, %v1943
        %v1963 = vsel %vm1960, %v1945, %v1947
        %v1964 = vsel %vm1960, %v1949, %v1951
        %v1965 = vsel %vm1960, %v1953, %v1955
        %v1966 = vsel %vm1960, %v1957, %v1959
        %v1973 = vadd.f32 %v1260, %v1961
        %v1974 = vadd.f32 %v1261, %v1962
        %v1975 = vadd.f32 %v1262, %v1963
        %v1976 = vadd.f32 %v1263, %v1964
        %v1977 = vadd.f32 %v1264, %v1965
        %v1978 = vadd.f32 %v1265, %v1966
        %s1979 = sld [smem:[#allocation5 + $0x3]]
        %v1980 = vstv %s1979
        %v1981 = vmul.f32 %v537, %v1980
        %v1982 = vmul.f32 %v538, %v1980
        %v1983 = vmul.f32 %v539, %v1980
        %v1984 = vmul.f32 %v540, %v1980
        %v1985 = vmul.f32 %v541, %v1980
        %v1986 = vmul.f32 %v542, %v1980
        %v1987 = vmul.f32 %v543, %v1980
        %v1988 = vmul.f32 %v544, %v1980
        %v1989 = vmul.f32 %v545, %v1980
        %v1990 = vmul.f32 %v546, %v1980
        %v1991 = vmul.f32 %v547, %v1980
        %v1992 = vmul.f32 %v548, %v1980
        %s1993 = sld [smem:[#allocation5 + $0xe]]
        %v1994 = vstv %s1993
        %v1995 = vmul.f32 %v537, %v1994
        %v1996 = vmul.f32 %v538, %v1994
        %v1997 = vmul.f32 %v539, %v1994
        %v1998 = vmul.f32 %v540, %v1994
        %v1999 = vmul.f32 %v541, %v1994
        %v2000 = vmul.f32 %v542, %v1994
        %v2001 = vmul.f32 %v543, %v1994
        %v2002 = vmul.f32 %v544, %v1994
        %v2003 = vmul.f32 %v545, %v1994
        %v2004 = vmul.f32 %v546, %v1994
        %v2005 = vmul.f32 %v547, %v1994
        %v2006 = vmul.f32 %v548, %v1994
        %v2019 = vrot.slane %v1995, 2
        %v2020 = vrot.slane %v1997, 2
        %v2021 = vsel %vm210, %v2019, %v2020
        %v2022 = vrot.slane %v1996, 2
        %v2023 = vrot.slane %v1998, 2
        %v2024 = vsel %vm210, %v2022, %v2023
        %v2025 = vrot.slane %v1999, 2
        %v2026 = vsel %vm210, %v2020, %v2025
        %v2027 = vrot.slane %v2000, 2
        %v2028 = vsel %vm210, %v2023, %v2027
        %v2029 = vrot.slane %v2001, 2
        %v2030 = vsel %vm210, %v2025, %v2029
        %v2031 = vrot.slane %v2002, 2
        %v2032 = vsel %vm210, %v2027, %v2031
        %v2033 = vrot.slane %v2003, 2
        %v2034 = vsel %vm210, %v2029, %v2033
        %v2035 = vrot.slane %v2004, 2
        %v2036 = vsel %vm210, %v2031, %v2035
        %v2037 = vrot.slane %v2005, 2
        %v2038 = vsel %vm210, %v2033, %v2037
        %v2039 = vrot.slane %v2006, 2
        %v2040 = vsel %vm210, %v2035, %v2039
        %v2053 = vadd.f32 %v1981, %v2021
        %v2054 = vadd.f32 %v1982, %v2024
        %v2055 = vadd.f32 %v1983, %v2026
        %v2056 = vadd.f32 %v1984, %v2028
        %v2057 = vadd.f32 %v1985, %v2030
        %v2058 = vadd.f32 %v1986, %v2032
        %v2059 = vadd.f32 %v1987, %v2034
        %v2060 = vadd.f32 %v1988, %v2036
        %v2061 = vadd.f32 %v1989, %v2038
        %v2062 = vadd.f32 %v1990, %v2040
        %v2063 = vadd.f32 %v1991, %v2037
        %v2064 = vadd.f32 %v1992, %v2039
        %s2065 = sld [smem:[#allocation5 + $0x19]]
        %v2066 = vstv %s2065
        %v2067 = vmul.f32 %v537, %v2066
        %v2068 = vmul.f32 %v538, %v2066
        %v2069 = vmul.f32 %v539, %v2066
        %v2070 = vmul.f32 %v540, %v2066
        %v2071 = vmul.f32 %v541, %v2066
        %v2072 = vmul.f32 %v542, %v2066
        %v2073 = vmul.f32 %v543, %v2066
        %v2074 = vmul.f32 %v544, %v2066
        %v2075 = vmul.f32 %v545, %v2066
        %v2076 = vmul.f32 %v546, %v2066
        %v2077 = vmul.f32 %v547, %v2066
        %v2078 = vmul.f32 %v548, %v2066
        %v2091 = vrot.slane %v2067, 4
        %v2092 = vrot.slane %v2069, 4
        %v2093 = vsel %vm248, %v2091, %v2092
        %v2094 = vrot.slane %v2068, 4
        %v2095 = vrot.slane %v2070, 4
        %v2096 = vsel %vm248, %v2094, %v2095
        %v2097 = vrot.slane %v2071, 4
        %v2098 = vsel %vm248, %v2092, %v2097
        %v2099 = vrot.slane %v2072, 4
        %v2100 = vsel %vm248, %v2095, %v2099
        %v2101 = vrot.slane %v2073, 4
        %v2102 = vsel %vm248, %v2097, %v2101
        %v2103 = vrot.slane %v2074, 4
        %v2104 = vsel %vm248, %v2099, %v2103
        %v2105 = vrot.slane %v2075, 4
        %v2106 = vsel %vm248, %v2101, %v2105
        %v2107 = vrot.slane %v2076, 4
        %v2108 = vsel %vm248, %v2103, %v2107
        %v2109 = vrot.slane %v2077, 4
        %v2110 = vsel %vm248, %v2105, %v2109
        %v2111 = vrot.slane %v2078, 4
        %v2112 = vsel %vm248, %v2107, %v2111
        %v2125 = vadd.f32 %v2053, %v2093
        %v2126 = vadd.f32 %v2054, %v2096
        %v2127 = vadd.f32 %v2055, %v2098
        %v2128 = vadd.f32 %v2056, %v2100
        %v2129 = vadd.f32 %v2057, %v2102
        %v2130 = vadd.f32 %v2058, %v2104
        %v2131 = vadd.f32 %v2059, %v2106
        %v2132 = vadd.f32 %v2060, %v2108
        %v2133 = vadd.f32 %v2061, %v2110
        %v2134 = vadd.f32 %v2062, %v2112
        %v2135 = vadd.f32 %v2063, %v2109
        %v2136 = vadd.f32 %v2064, %v2111
        %s2137 = sld [smem:[#allocation5 + $0x24]]
        %v2138 = vstv %s2137
        %v2139 = vmul.f32 %v537, %v2138
        %v2140 = vmul.f32 %v538, %v2138
        %v2141 = vmul.f32 %v539, %v2138
        %v2142 = vmul.f32 %v540, %v2138
        %v2143 = vmul.f32 %v541, %v2138
        %v2144 = vmul.f32 %v542, %v2138
        %v2145 = vmul.f32 %v543, %v2138
        %v2146 = vmul.f32 %v544, %v2138
        %v2147 = vmul.f32 %v545, %v2138
        %v2148 = vmul.f32 %v546, %v2138
        %v2149 = vmul.f32 %v547, %v2138
        %v2150 = vmul.f32 %v548, %v2138
        %v2151 = vmul.f32 %v549, %v2138
        %v2152 = vmul.f32 %v550, %v2138
        %v2167 = vrot.slane %v2139, 6
        %v2168 = vrot.slane %v2141, 6
        %v2169 = vsel %vm288, %v2167, %v2168
        %v2170 = vrot.slane %v2140, 6
        %v2171 = vrot.slane %v2142, 6
        %v2172 = vsel %vm288, %v2170, %v2171
        %v2173 = vrot.slane %v2143, 6
        %v2174 = vsel %vm288, %v2168, %v2173
        %v2175 = vrot.slane %v2144, 6
        %v2176 = vsel %vm288, %v2171, %v2175
        %v2177 = vrot.slane %v2145, 6
        %v2178 = vsel %vm288, %v2173, %v2177
        %v2179 = vrot.slane %v2146, 6
        %v2180 = vsel %vm288, %v2175, %v2179
        %v2181 = vrot.slane %v2147, 6
        %v2182 = vsel %vm288, %v2177, %v2181
        %v2183 = vrot.slane %v2148, 6
        %v2184 = vsel %vm288, %v2179, %v2183
        %v2185 = vrot.slane %v2149, 6
        %v2186 = vsel %vm288, %v2181, %v2185
        %v2187 = vrot.slane %v2150, 6
        %v2188 = vsel %vm288, %v2183, %v2187
        %v2189 = vrot.slane %v2151, 6
        %v2190 = vsel %vm288, %v2185, %v2189
        %v2191 = vrot.slane %v2152, 6
        %v2192 = vsel %vm288, %v2187, %v2191
        %v2205 = vadd.f32 %v2125, %v2169
        %v2206 = vadd.f32 %v2126, %v2172
        %v2207 = vadd.f32 %v2127, %v2174
        %v2208 = vadd.f32 %v2128, %v2176
        %v2209 = vadd.f32 %v2129, %v2178
        %v2210 = vadd.f32 %v2130, %v2180
        %v2211 = vadd.f32 %v2131, %v2182
        %v2212 = vadd.f32 %v2132, %v2184
        %v2213 = vadd.f32 %v2133, %v2186
        %v2214 = vadd.f32 %v2134, %v2188
        %v2215 = vadd.f32 %v2135, %v2190
        %v2216 = vadd.f32 %v2136, %v2192
        %s2217 = sld [smem:[#allocation5 + $0x2f]]
        %v2218 = vstv %s2217
        %v2219 = vmul.f32 %v539, %v2218
        %v2220 = vmul.f32 %v540, %v2218
        %v2221 = vmul.f32 %v541, %v2218
        %v2222 = vmul.f32 %v542, %v2218
        %v2223 = vmul.f32 %v543, %v2218
        %v2224 = vmul.f32 %v544, %v2218
        %v2225 = vmul.f32 %v545, %v2218
        %v2226 = vmul.f32 %v546, %v2218
        %v2227 = vmul.f32 %v547, %v2218
        %v2228 = vmul.f32 %v548, %v2218
        %v2229 = vmul.f32 %v549, %v2218
        %v2230 = vmul.f32 %v550, %v2218
        %v2231 = vadd.f32 %v2205, %v2219
        %v2232 = vadd.f32 %v2206, %v2220
        %v2233 = vadd.f32 %v2207, %v2221
        %v2234 = vadd.f32 %v2208, %v2222
        %v2235 = vadd.f32 %v2209, %v2223
        %v2236 = vadd.f32 %v2210, %v2224
        %v2237 = vadd.f32 %v2211, %v2225
        %v2238 = vadd.f32 %v2212, %v2226
        %v2239 = vadd.f32 %v2213, %v2227
        %v2240 = vadd.f32 %v2214, %v2228
        %v2241 = vadd.f32 %v2215, %v2229
        %v2242 = vadd.f32 %v2216, %v2230
        %s2243 = sld [smem:[#allocation5 + $0x3a]]
        %v2244 = vstv %s2243
        %v2245 = vmul.f32 %v539, %v2244
        %v2246 = vmul.f32 %v540, %v2244
        %v2247 = vmul.f32 %v541, %v2244
        %v2248 = vmul.f32 %v542, %v2244
        %v2249 = vmul.f32 %v543, %v2244
        %v2250 = vmul.f32 %v544, %v2244
        %v2251 = vmul.f32 %v545, %v2244
        %v2252 = vmul.f32 %v546, %v2244
        %v2253 = vmul.f32 %v547, %v2244
        %v2254 = vmul.f32 %v548, %v2244
        %v2255 = vmul.f32 %v549, %v2244
        %v2256 = vmul.f32 %v550, %v2244
        %v2269 = vrot.slane %v2245, 2
        %v2270 = vrot.slane %v2247, 2
        %v2271 = vsel %vm210, %v2269, %v2270
        %v2272 = vrot.slane %v2246, 2
        %v2273 = vrot.slane %v2248, 2
        %v2274 = vsel %vm210, %v2272, %v2273
        %v2275 = vrot.slane %v2249, 2
        %v2276 = vsel %vm210, %v2270, %v2275
        %v2277 = vrot.slane %v2250, 2
        %v2278 = vsel %vm210, %v2273, %v2277
        %v2279 = vrot.slane %v2251, 2
        %v2280 = vsel %vm210, %v2275, %v2279
        %v2281 = vrot.slane %v2252, 2
        %v2282 = vsel %vm210, %v2277, %v2281
        %v2283 = vrot.slane %v2253, 2
        %v2284 = vsel %vm210, %v2279, %v2283
        %v2285 = vrot.slane %v2254, 2
        %v2286 = vsel %vm210, %v2281, %v2285
        %v2287 = vrot.slane %v2255, 2
        %v2288 = vsel %vm210, %v2283, %v2287
        %v2289 = vrot.slane %v2256, 2
        %v2290 = vsel %vm210, %v2285, %v2289
        %v2303 = vadd.f32 %v2231, %v2271
        %v2304 = vadd.f32 %v2232, %v2274
        %v2305 = vadd.f32 %v2233, %v2276
        %v2306 = vadd.f32 %v2234, %v2278
        %v2307 = vadd.f32 %v2235, %v2280
        %v2308 = vadd.f32 %v2236, %v2282
        %v2309 = vadd.f32 %v2237, %v2284
        %v2310 = vadd.f32 %v2238, %v2286
        %v2311 = vadd.f32 %v2239, %v2288
        %v2312 = vadd.f32 %v2240, %v2290
        %v2313 = vadd.f32 %v2241, %v2287
        %v2314 = vadd.f32 %v2242, %v2289
        %s2315 = sld [smem:[#allocation5 + $0x45]]
        %v2316 = vstv %s2315
        %v2317 = vmul.f32 %v539, %v2316
        %v2318 = vmul.f32 %v540, %v2316
        %v2319 = vmul.f32 %v541, %v2316
        %v2320 = vmul.f32 %v542, %v2316
        %v2321 = vmul.f32 %v543, %v2316
        %v2322 = vmul.f32 %v544, %v2316
        %v2323 = vmul.f32 %v545, %v2316
        %v2324 = vmul.f32 %v546, %v2316
        %v2325 = vmul.f32 %v547, %v2316
        %v2326 = vmul.f32 %v548, %v2316
        %v2327 = vmul.f32 %v549, %v2316
        %v2328 = vmul.f32 %v550, %v2316
        %v2341 = vrot.slane %v2317, 4
        %v2342 = vrot.slane %v2319, 4
        %v2343 = vsel %vm248, %v2341, %v2342
        %v2344 = vrot.slane %v2318, 4
        %v2345 = vrot.slane %v2320, 4
        %v2346 = vsel %vm248, %v2344, %v2345
        %v2347 = vrot.slane %v2321, 4
        %v2348 = vsel %vm248, %v2342, %v2347
        %v2349 = vrot.slane %v2322, 4
        %v2350 = vsel %vm248, %v2345, %v2349
        %v2351 = vrot.slane %v2323, 4
        %v2352 = vsel %vm248, %v2347, %v2351
        %v2353 = vrot.slane %v2324, 4
        %v2354 = vsel %vm248, %v2349, %v2353
        %v2355 = vrot.slane %v2325, 4
        %v2356 = vsel %vm248, %v2351, %v2355
        %v2357 = vrot.slane %v2326, 4
        %v2358 = vsel %vm248, %v2353, %v2357
        %v2359 = vrot.slane %v2327, 4
        %v2360 = vsel %vm248, %v2355, %v2359
        %v2361 = vrot.slane %v2328, 4
        %v2362 = vsel %vm248, %v2357, %v2361
        %v2375 = vadd.f32 %v2303, %v2343
        %v2376 = vadd.f32 %v2304, %v2346
        %v2377 = vadd.f32 %v2305, %v2348
        %v2378 = vadd.f32 %v2306, %v2350
        %v2379 = vadd.f32 %v2307, %v2352
        %v2380 = vadd.f32 %v2308, %v2354
        %v2381 = vadd.f32 %v2309, %v2356
        %v2382 = vadd.f32 %v2310, %v2358
        %v2383 = vadd.f32 %v2311, %v2360
        %v2384 = vadd.f32 %v2312, %v2362
        %v2385 = vadd.f32 %v2313, %v2359
        %v2386 = vadd.f32 %v2314, %v2361
        %s2387 = sld [smem:[#allocation5 + $0x50]]
        %v2388 = vstv %s2387
        %v2389 = vmul.f32 %v539, %v2388
        %v2390 = vmul.f32 %v540, %v2388
        %v2391 = vmul.f32 %v541, %v2388
        %v2392 = vmul.f32 %v542, %v2388
        %v2393 = vmul.f32 %v543, %v2388
        %v2394 = vmul.f32 %v544, %v2388
        %v2395 = vmul.f32 %v545, %v2388
        %v2396 = vmul.f32 %v546, %v2388
        %v2397 = vmul.f32 %v547, %v2388
        %v2398 = vmul.f32 %v548, %v2388
        %v2399 = vmul.f32 %v549, %v2388
        %v2400 = vmul.f32 %v550, %v2388
        %v2401 = vmul.f32 %v551, %v2388
        %v2402 = vmul.f32 %v552, %v2388
        %v2417 = vrot.slane %v2389, 6
        %v2418 = vrot.slane %v2391, 6
        %v2419 = vsel %vm288, %v2417, %v2418
        %v2420 = vrot.slane %v2390, 6
        %v2421 = vrot.slane %v2392, 6
        %v2422 = vsel %vm288, %v2420, %v2421
        %v2423 = vrot.slane %v2393, 6
        %v2424 = vsel %vm288, %v2418, %v2423
        %v2425 = vrot.slane %v2394, 6
        %v2426 = vsel %vm288, %v2421, %v2425
        %v2427 = vrot.slane %v2395, 6
        %v2428 = vsel %vm288, %v2423, %v2427
        %v2429 = vrot.slane %v2396, 6
        %v2430 = vsel %vm288, %v2425, %v2429
        %v2431 = vrot.slane %v2397, 6
        %v2432 = vsel %vm288, %v2427, %v2431
        %v2433 = vrot.slane %v2398, 6
        %v2434 = vsel %vm288, %v2429, %v2433
        %v2435 = vrot.slane %v2399, 6
        %v2436 = vsel %vm288, %v2431, %v2435
        %v2437 = vrot.slane %v2400, 6
        %v2438 = vsel %vm288, %v2433, %v2437
        %v2439 = vrot.slane %v2401, 6
        %v2440 = vsel %vm288, %v2435, %v2439
        %v2441 = vrot.slane %v2402, 6
        %v2442 = vsel %vm288, %v2437, %v2441
        %v2455 = vadd.f32 %v2375, %v2419
        %v2456 = vadd.f32 %v2376, %v2422
        %v2457 = vadd.f32 %v2377, %v2424
        %v2458 = vadd.f32 %v2378, %v2426
        %v2459 = vadd.f32 %v2379, %v2428
        %v2460 = vadd.f32 %v2380, %v2430
        %v2461 = vadd.f32 %v2381, %v2432
        %v2462 = vadd.f32 %v2382, %v2434
        %v2463 = vadd.f32 %v2383, %v2436
        %v2464 = vadd.f32 %v2384, %v2438
        %v2465 = vadd.f32 %v2385, %v2440
        %v2466 = vadd.f32 %v2386, %v2442
        %s2467 = sld [smem:[#allocation5 + $0x5b]]
        %v2468 = vstv %s2467
        %v2469 = vmul.f32 %v541, %v2468
        %v2470 = vmul.f32 %v542, %v2468
        %v2471 = vmul.f32 %v543, %v2468
        %v2472 = vmul.f32 %v544, %v2468
        %v2473 = vmul.f32 %v545, %v2468
        %v2474 = vmul.f32 %v546, %v2468
        %v2475 = vmul.f32 %v547, %v2468
        %v2476 = vmul.f32 %v548, %v2468
        %v2477 = vmul.f32 %v549, %v2468
        %v2478 = vmul.f32 %v550, %v2468
        %v2479 = vmul.f32 %v551, %v2468
        %v2480 = vmul.f32 %v552, %v2468
        %v2481 = vadd.f32 %v2455, %v2469
        %v2482 = vadd.f32 %v2456, %v2470
        %v2483 = vadd.f32 %v2457, %v2471
        %v2484 = vadd.f32 %v2458, %v2472
        %v2485 = vadd.f32 %v2459, %v2473
        %v2486 = vadd.f32 %v2460, %v2474
        %v2487 = vadd.f32 %v2461, %v2475
        %v2488 = vadd.f32 %v2462, %v2476
        %v2489 = vadd.f32 %v2463, %v2477
        %v2490 = vadd.f32 %v2464, %v2478
        %v2491 = vadd.f32 %v2465, %v2479
        %v2492 = vadd.f32 %v2466, %v2480
        %s2493 = sld [smem:[#allocation5 + $0x66]]
        %v2494 = vstv %s2493
        %v2495 = vmul.f32 %v541, %v2494
        %v2496 = vmul.f32 %v542, %v2494
        %v2497 = vmul.f32 %v543, %v2494
        %v2498 = vmul.f32 %v544, %v2494
        %v2499 = vmul.f32 %v545, %v2494
        %v2500 = vmul.f32 %v546, %v2494
        %v2501 = vmul.f32 %v547, %v2494
        %v2502 = vmul.f32 %v548, %v2494
        %v2503 = vmul.f32 %v549, %v2494
        %v2504 = vmul.f32 %v550, %v2494
        %v2505 = vmul.f32 %v551, %v2494
        %v2506 = vmul.f32 %v552, %v2494
        %v2519 = vrot.slane %v2495, 2
        %v2520 = vrot.slane %v2497, 2
        %v2521 = vsel %vm210, %v2519, %v2520
        %v2522 = vrot.slane %v2496, 2
        %v2523 = vrot.slane %v2498, 2
        %v2524 = vsel %vm210, %v2522, %v2523
        %v2525 = vrot.slane %v2499, 2
        %v2526 = vsel %vm210, %v2520, %v2525
        %v2527 = vrot.slane %v2500, 2
        %v2528 = vsel %vm210, %v2523, %v2527
        %v2529 = vrot.slane %v2501, 2
        %v2530 = vsel %vm210, %v2525, %v2529
        %v2531 = vrot.slane %v2502, 2
        %v2532 = vsel %vm210, %v2527, %v2531
        %v2533 = vrot.slane %v2503, 2
        %v2534 = vsel %vm210, %v2529, %v2533
        %v2535 = vrot.slane %v2504, 2
        %v2536 = vsel %vm210, %v2531, %v2535
        %v2537 = vrot.slane %v2505, 2
        %v2538 = vsel %vm210, %v2533, %v2537
        %v2539 = vrot.slane %v2506, 2
        %v2540 = vsel %vm210, %v2535, %v2539
        %v2553 = vadd.f32 %v2481, %v2521
        %v2554 = vadd.f32 %v2482, %v2524
        %v2555 = vadd.f32 %v2483, %v2526
        %v2556 = vadd.f32 %v2484, %v2528
        %v2557 = vadd.f32 %v2485, %v2530
        %v2558 = vadd.f32 %v2486, %v2532
        %v2559 = vadd.f32 %v2487, %v2534
        %v2560 = vadd.f32 %v2488, %v2536
        %v2561 = vadd.f32 %v2489, %v2538
        %v2562 = vadd.f32 %v2490, %v2540
        %v2563 = vadd.f32 %v2491, %v2537
        %v2564 = vadd.f32 %v2492, %v2539
        %s2565 = sld [smem:[#allocation5 + $0x71]]
        %v2566 = vstv %s2565
        %v2567 = vmul.f32 %v541, %v2566
        %v2568 = vmul.f32 %v542, %v2566
        %v2569 = vmul.f32 %v543, %v2566
        %v2570 = vmul.f32 %v544, %v2566
        %v2571 = vmul.f32 %v545, %v2566
        %v2572 = vmul.f32 %v546, %v2566
        %v2573 = vmul.f32 %v547, %v2566
        %v2574 = vmul.f32 %v548, %v2566
        %v2575 = vmul.f32 %v549, %v2566
        %v2576 = vmul.f32 %v550, %v2566
        %v2577 = vmul.f32 %v551, %v2566
        %v2578 = vmul.f32 %v552, %v2566
        %v2591 = vrot.slane %v2567, 4
        %v2592 = vrot.slane %v2569, 4
        %v2593 = vsel %vm248, %v2591, %v2592
        %v2594 = vrot.slane %v2568, 4
        %v2595 = vrot.slane %v2570, 4
        %v2596 = vsel %vm248, %v2594, %v2595
        %v2597 = vrot.slane %v2571, 4
        %v2598 = vsel %vm248, %v2592, %v2597
        %v2599 = vrot.slane %v2572, 4
        %v2600 = vsel %vm248, %v2595, %v2599
        %v2601 = vrot.slane %v2573, 4
        %v2602 = vsel %vm248, %v2597, %v2601
        %v2603 = vrot.slane %v2574, 4
        %v2604 = vsel %vm248, %v2599, %v2603
        %v2605 = vrot.slane %v2575, 4
        %v2606 = vsel %vm248, %v2601, %v2605
        %v2607 = vrot.slane %v2576, 4
        %v2608 = vsel %vm248, %v2603, %v2607
        %v2609 = vrot.slane %v2577, 4
        %v2610 = vsel %vm248, %v2605, %v2609
        %v2611 = vrot.slane %v2578, 4
        %v2612 = vsel %vm248, %v2607, %v2611
        %v2625 = vadd.f32 %v2553, %v2593
        %v2626 = vadd.f32 %v2554, %v2596
        %v2627 = vadd.f32 %v2555, %v2598
        %v2628 = vadd.f32 %v2556, %v2600
        %v2629 = vadd.f32 %v2557, %v2602
        %v2630 = vadd.f32 %v2558, %v2604
        %v2631 = vadd.f32 %v2559, %v2606
        %v2632 = vadd.f32 %v2560, %v2608
        %v2633 = vadd.f32 %v2561, %v2610
        %v2634 = vadd.f32 %v2562, %v2612
        %v2635 = vadd.f32 %v2563, %v2609
        %v2636 = vadd.f32 %v2564, %v2611
        %2649 = vrot.lane.b32.xlu0 %v2625, 122
        %v2650 = vpop.permute.xlu0 %2649
        %2651 = vrot.lane.b32.xlu0 %v2626, 122
        %v2652 = vpop.permute.xlu0 %2651
        %2653 = vrot.lane.b32.xlu0 %v2627, 122
        %v2654 = vpop.permute.xlu0 %2653
        %2655 = vrot.lane.b32.xlu0 %v2628, 122
        %v2656 = vpop.permute.xlu0 %2655
        %2657 = vrot.lane.b32.xlu0 %v2629, 122
        %v2658 = vpop.permute.xlu0 %2657
        %2659 = vrot.lane.b32.xlu0 %v2630, 122
        %v2660 = vpop.permute.xlu0 %2659
        %2661 = vrot.lane.b32.xlu0 %v2631, 122
        %v2662 = vpop.permute.xlu0 %2661
        %2663 = vrot.lane.b32.xlu0 %v2632, 122
        %v2664 = vpop.permute.xlu0 %2663
        %2665 = vrot.lane.b32.xlu0 %v2633, 122
        %v2666 = vpop.permute.xlu0 %2665
        %2667 = vrot.lane.b32.xlu0 %v2634, 122
        %v2668 = vpop.permute.xlu0 %2667
        %2669 = vrot.lane.b32.xlu0 %v2635, 122
        %v2670 = vpop.permute.xlu0 %2669
        %2671 = vrot.lane.b32.xlu0 %v2636, 122
        %v2672 = vpop.permute.xlu0 %2671
        %vm2673 = vcmask 998400
        %v2674 = vsel %vm2673, %v2650, %v2652
        %v2675 = vsel %vm2673, %v2654, %v2656
        %v2676 = vsel %vm2673, %v2658, %v2660
        %v2677 = vsel %vm2673, %v2662, %v2664
        %v2678 = vsel %vm2673, %v2666, %v2668
        %v2679 = vsel %vm2673, %v2670, %v2672
        %v2686 = vadd.f32 %v1973, %v2674
        %v2687 = vadd.f32 %v1974, %v2675
        %v2688 = vadd.f32 %v1975, %v2676
        %v2689 = vadd.f32 %v1976, %v2677
        %v2690 = vadd.f32 %v1977, %v2678
        %v2691 = vadd.f32 %v1978, %v2679
        %s2692 = sld [smem:[#allocation5 + $0x4]]
        %v2693 = vstv %s2692
        %v2694 = vmul.f32 %v537, %v2693
        %v2695 = vmul.f32 %v538, %v2693
        %v2696 = vmul.f32 %v539, %v2693
        %v2697 = vmul.f32 %v540, %v2693
        %v2698 = vmul.f32 %v541, %v2693
        %v2699 = vmul.f32 %v542, %v2693
        %v2700 = vmul.f32 %v543, %v2693
        %v2701 = vmul.f32 %v544, %v2693
        %v2702 = vmul.f32 %v545, %v2693
        %v2703 = vmul.f32 %v546, %v2693
        %v2704 = vmul.f32 %v547, %v2693
        %v2705 = vmul.f32 %v548, %v2693
        %s2706 = sld [smem:[#allocation5 + $0xf]]
        %v2707 = vstv %s2706
        %v2708 = vmul.f32 %v537, %v2707
        %v2709 = vmul.f32 %v538, %v2707
        %v2710 = vmul.f32 %v539, %v2707
        %v2711 = vmul.f32 %v540, %v2707
        %v2712 = vmul.f32 %v541, %v2707
        %v2713 = vmul.f32 %v542, %v2707
        %v2714 = vmul.f32 %v543, %v2707
        %v2715 = vmul.f32 %v544, %v2707
        %v2716 = vmul.f32 %v545, %v2707
        %v2717 = vmul.f32 %v546, %v2707
        %v2718 = vmul.f32 %v547, %v2707
        %v2719 = vmul.f32 %v548, %v2707
        %v2732 = vrot.slane %v2708, 2
        %v2733 = vrot.slane %v2710, 2
        %v2734 = vsel %vm210, %v2732, %v2733
        %v2735 = vrot.slane %v2709, 2
        %v2736 = vrot.slane %v2711, 2
        %v2737 = vsel %vm210, %v2735, %v2736
        %v2738 = vrot.slane %v2712, 2
        %v2739 = vsel %vm210, %v2733, %v2738
        %v2740 = vrot.slane %v2713, 2
        %v2741 = vsel %vm210, %v2736, %v2740
        %v2742 = vrot.slane %v2714, 2
        %v2743 = vsel %vm210, %v2738, %v2742
        %v2744 = vrot.slane %v2715, 2
        %v2745 = vsel %vm210, %v2740, %v2744
        %v2746 = vrot.slane %v2716, 2
        %v2747 = vsel %vm210, %v2742, %v2746
        %v2748 = vrot.slane %v2717, 2
        %v2749 = vsel %vm210, %v2744, %v2748
        %v2750 = vrot.slane %v2718, 2
        %v2751 = vsel %vm210, %v2746, %v2750
        %v2752 = vrot.slane %v2719, 2
        %v2753 = vsel %vm210, %v2748, %v2752
        %v2766 = vadd.f32 %v2694, %v2734
        %v2767 = vadd.f32 %v2695, %v2737
        %v2768 = vadd.f32 %v2696, %v2739
        %v2769 = vadd.f32 %v2697, %v2741
        %v2770 = vadd.f32 %v2698, %v2743
        %v2771 = vadd.f32 %v2699, %v2745
        %v2772 = vadd.f32 %v2700, %v2747
        %v2773 = vadd.f32 %v2701, %v2749
        %v2774 = vadd.f32 %v2702, %v2751
        %v2775 = vadd.f32 %v2703, %v2753
        %v2776 = vadd.f32 %v2704, %v2750
        %v2777 = vadd.f32 %v2705, %v2752
        %s2778 = sld [smem:[#allocation5 + $0x1a]]
        %v2779 = vstv %s2778
        %v2780 = vmul.f32 %v537, %v2779
        %v2781 = vmul.f32 %v538, %v2779
        %v2782 = vmul.f32 %v539, %v2779
        %v2783 = vmul.f32 %v540, %v2779
        %v2784 = vmul.f32 %v541, %v2779
        %v2785 = vmul.f32 %v542, %v2779
        %v2786 = vmul.f32 %v543, %v2779
        %v2787 = vmul.f32 %v544, %v2779
        %v2788 = vmul.f32 %v545, %v2779
        %v2789 = vmul.f32 %v546, %v2779
        %v2790 = vmul.f32 %v547, %v2779
        %v2791 = vmul.f32 %v548, %v2779
        %v2804 = vrot.slane %v2780, 4
        %v2805 = vrot.slane %v2782, 4
        %v2806 = vsel %vm248, %v2804, %v2805
        %v2807 = vrot.slane %v2781, 4
        %v2808 = vrot.slane %v2783, 4
        %v2809 = vsel %vm248, %v2807, %v2808
        %v2810 = vrot.slane %v2784, 4
        %v2811 = vsel %vm248, %v2805, %v2810
        %v2812 = vrot.slane %v2785, 4
        %v2813 = vsel %vm248, %v2808, %v2812
        %v2814 = vrot.slane %v2786, 4
        %v2815 = vsel %vm248, %v2810, %v2814
        %v2816 = vrot.slane %v2787, 4
        %v2817 = vsel %vm248, %v2812, %v2816
        %v2818 = vrot.slane %v2788, 4
        %v2819 = vsel %vm248, %v2814, %v2818
        %v2820 = vrot.slane %v2789, 4
        %v2821 = vsel %vm248, %v2816, %v2820
        %v2822 = vrot.slane %v2790, 4
        %v2823 = vsel %vm248, %v2818, %v2822
        %v2824 = vrot.slane %v2791, 4
        %v2825 = vsel %vm248, %v2820, %v2824
        %v2838 = vadd.f32 %v2766, %v2806
        %v2839 = vadd.f32 %v2767, %v2809
        %v2840 = vadd.f32 %v2768, %v2811
        %v2841 = vadd.f32 %v2769, %v2813
        %v2842 = vadd.f32 %v2770, %v2815
        %v2843 = vadd.f32 %v2771, %v2817
        %v2844 = vadd.f32 %v2772, %v2819
        %v2845 = vadd.f32 %v2773, %v2821
        %v2846 = vadd.f32 %v2774, %v2823
        %v2847 = vadd.f32 %v2775, %v2825
        %v2848 = vadd.f32 %v2776, %v2822
        %v2849 = vadd.f32 %v2777, %v2824
        %s2850 = sld [smem:[#allocation5 + $0x25]]
        %v2851 = vstv %s2850
        %v2852 = vmul.f32 %v537, %v2851
        %v2853 = vmul.f32 %v538, %v2851
        %v2854 = vmul.f32 %v539, %v2851
        %v2855 = vmul.f32 %v540, %v2851
        %v2856 = vmul.f32 %v541, %v2851
        %v2857 = vmul.f32 %v542, %v2851
        %v2858 = vmul.f32 %v543, %v2851
        %v2859 = vmul.f32 %v544, %v2851
        %v2860 = vmul.f32 %v545, %v2851
        %v2861 = vmul.f32 %v546, %v2851
        %v2862 = vmul.f32 %v547, %v2851
        %v2863 = vmul.f32 %v548, %v2851
        %v2864 = vmul.f32 %v549, %v2851
        %v2865 = vmul.f32 %v550, %v2851
        %v2880 = vrot.slane %v2852, 6
        %v2881 = vrot.slane %v2854, 6
        %v2882 = vsel %vm288, %v2880, %v2881
        %v2883 = vrot.slane %v2853, 6
        %v2884 = vrot.slane %v2855, 6
        %v2885 = vsel %vm288, %v2883, %v2884
        %v2886 = vrot.slane %v2856, 6
        %v2887 = vsel %vm288, %v2881, %v2886
        %v2888 = vrot.slane %v2857, 6
        %v2889 = vsel %vm288, %v2884, %v2888
        %v2890 = vrot.slane %v2858, 6
        %v2891 = vsel %vm288, %v2886, %v2890
        %v2892 = vrot.slane %v2859, 6
        %v2893 = vsel %vm288, %v2888, %v2892
        %v2894 = vrot.slane %v2860, 6
        %v2895 = vsel %vm288, %v2890, %v2894
        %v2896 = vrot.slane %v2861, 6
        %v2897 = vsel %vm288, %v2892, %v2896
        %v2898 = vrot.slane %v2862, 6
        %v2899 = vsel %vm288, %v2894, %v2898
        %v2900 = vrot.slane %v2863, 6
        %v2901 = vsel %vm288, %v2896, %v2900
        %v2902 = vrot.slane %v2864, 6
        %v2903 = vsel %vm288, %v2898, %v2902
        %v2904 = vrot.slane %v2865, 6
        %v2905 = vsel %vm288, %v2900, %v2904
        %v2918 = vadd.f32 %v2838, %v2882
        %v2919 = vadd.f32 %v2839, %v2885
        %v2920 = vadd.f32 %v2840, %v2887
        %v2921 = vadd.f32 %v2841, %v2889
        %v2922 = vadd.f32 %v2842, %v2891
        %v2923 = vadd.f32 %v2843, %v2893
        %v2924 = vadd.f32 %v2844, %v2895
        %v2925 = vadd.f32 %v2845, %v2897
        %v2926 = vadd.f32 %v2846, %v2899
        %v2927 = vadd.f32 %v2847, %v2901
        %v2928 = vadd.f32 %v2848, %v2903
        %v2929 = vadd.f32 %v2849, %v2905
        %s2930 = sld [smem:[#allocation5 + $0x30]]
        %v2931 = vstv %s2930
        %v2932 = vmul.f32 %v539, %v2931
        %v2933 = vmul.f32 %v540, %v2931
        %v2934 = vmul.f32 %v541, %v2931
        %v2935 = vmul.f32 %v542, %v2931
        %v2936 = vmul.f32 %v543, %v2931
        %v2937 = vmul.f32 %v544, %v2931
        %v2938 = vmul.f32 %v545, %v2931
        %v2939 = vmul.f32 %v546, %v2931
        %v2940 = vmul.f32 %v547, %v2931
        %v2941 = vmul.f32 %v548, %v2931
        %v2942 = vmul.f32 %v549, %v2931
        %v2943 = vmul.f32 %v550, %v2931
        %v2944 = vadd.f32 %v2918, %v2932
        %v2945 = vadd.f32 %v2919, %v2933
        %v2946 = vadd.f32 %v2920, %v2934
        %v2947 = vadd.f32 %v2921, %v2935
        %v2948 = vadd.f32 %v2922, %v2936
        %v2949 = vadd.f32 %v2923, %v2937
        %v2950 = vadd.f32 %v2924, %v2938
        %v2951 = vadd.f32 %v2925, %v2939
        %v2952 = vadd.f32 %v2926, %v2940
        %v2953 = vadd.f32 %v2927, %v2941
        %v2954 = vadd.f32 %v2928, %v2942
        %v2955 = vadd.f32 %v2929, %v2943
        %s2956 = sld [smem:[#allocation5 + $0x3b]]
        %v2957 = vstv %s2956
        %v2958 = vmul.f32 %v539, %v2957
        %v2959 = vmul.f32 %v540, %v2957
        %v2960 = vmul.f32 %v541, %v2957
        %v2961 = vmul.f32 %v542, %v2957
        %v2962 = vmul.f32 %v543, %v2957
        %v2963 = vmul.f32 %v544, %v2957
        %v2964 = vmul.f32 %v545, %v2957
        %v2965 = vmul.f32 %v546, %v2957
        %v2966 = vmul.f32 %v547, %v2957
        %v2967 = vmul.f32 %v548, %v2957
        %v2968 = vmul.f32 %v549, %v2957
        %v2969 = vmul.f32 %v550, %v2957
        %v2982 = vrot.slane %v2958, 2
        %v2983 = vrot.slane %v2960, 2
        %v2984 = vsel %vm210, %v2982, %v2983
        %v2985 = vrot.slane %v2959, 2
        %v2986 = vrot.slane %v2961, 2
        %v2987 = vsel %vm210, %v2985, %v2986
        %v2988 = vrot.slane %v2962, 2
        %v2989 = vsel %vm210, %v2983, %v2988
        %v2990 = vrot.slane %v2963, 2
        %v2991 = vsel %vm210, %v2986, %v2990
        %v2992 = vrot.slane %v2964, 2
        %v2993 = vsel %vm210, %v2988, %v2992
        %v2994 = vrot.slane %v2965, 2
        %v2995 = vsel %vm210, %v2990, %v2994
        %v2996 = vrot.slane %v2966, 2
        %v2997 = vsel %vm210, %v2992, %v2996
        %v2998 = vrot.slane %v2967, 2
        %v2999 = vsel %vm210, %v2994, %v2998
        %v3000 = vrot.slane %v2968, 2
        %v3001 = vsel %vm210, %v2996, %v3000
        %v3002 = vrot.slane %v2969, 2
        %v3003 = vsel %vm210, %v2998, %v3002
        %v3016 = vadd.f32 %v2944, %v2984
        %v3017 = vadd.f32 %v2945, %v2987
        %v3018 = vadd.f32 %v2946, %v2989
        %v3019 = vadd.f32 %v2947, %v2991
        %v3020 = vadd.f32 %v2948, %v2993
        %v3021 = vadd.f32 %v2949, %v2995
        %v3022 = vadd.f32 %v2950, %v2997
        %v3023 = vadd.f32 %v2951, %v2999
        %v3024 = vadd.f32 %v2952, %v3001
        %v3025 = vadd.f32 %v2953, %v3003
        %v3026 = vadd.f32 %v2954, %v3000
        %v3027 = vadd.f32 %v2955, %v3002
        %s3028 = sld [smem:[#allocation5 + $0x46]]
        %v3029 = vstv %s3028
        %v3030 = vmul.f32 %v539, %v3029
        %v3031 = vmul.f32 %v540, %v3029
        %v3032 = vmul.f32 %v541, %v3029
        %v3033 = vmul.f32 %v542, %v3029
        %v3034 = vmul.f32 %v543, %v3029
        %v3035 = vmul.f32 %v544, %v3029
        %v3036 = vmul.f32 %v545, %v3029
        %v3037 = vmul.f32 %v546, %v3029
        %v3038 = vmul.f32 %v547, %v3029
        %v3039 = vmul.f32 %v548, %v3029
        %v3040 = vmul.f32 %v549, %v3029
        %v3041 = vmul.f32 %v550, %v3029
        %v3054 = vrot.slane %v3030, 4
        %v3055 = vrot.slane %v3032, 4
        %v3056 = vsel %vm248, %v3054, %v3055
        %v3057 = vrot.slane %v3031, 4
        %v3058 = vrot.slane %v3033, 4
        %v3059 = vsel %vm248, %v3057, %v3058
        %v3060 = vrot.slane %v3034, 4
        %v3061 = vsel %vm248, %v3055, %v3060
        %v3062 = vrot.slane %v3035, 4
        %v3063 = vsel %vm248, %v3058, %v3062
        %v3064 = vrot.slane %v3036, 4
        %v3065 = vsel %vm248, %v3060, %v3064
        %v3066 = vrot.slane %v3037, 4
        %v3067 = vsel %vm248, %v3062, %v3066
        %v3068 = vrot.slane %v3038, 4
        %v3069 = vsel %vm248, %v3064, %v3068
        %v3070 = vrot.slane %v3039, 4
        %v3071 = vsel %vm248, %v3066, %v3070
        %v3072 = vrot.slane %v3040, 4
        %v3073 = vsel %vm248, %v3068, %v3072
        %v3074 = vrot.slane %v3041, 4
        %v3075 = vsel %vm248, %v3070, %v3074
        %v3088 = vadd.f32 %v3016, %v3056
        %v3089 = vadd.f32 %v3017, %v3059
        %v3090 = vadd.f32 %v3018, %v3061
        %v3091 = vadd.f32 %v3019, %v3063
        %v3092 = vadd.f32 %v3020, %v3065
        %v3093 = vadd.f32 %v3021, %v3067
        %v3094 = vadd.f32 %v3022, %v3069
        %v3095 = vadd.f32 %v3023, %v3071
        %v3096 = vadd.f32 %v3024, %v3073
        %v3097 = vadd.f32 %v3025, %v3075
        %v3098 = vadd.f32 %v3026, %v3072
        %v3099 = vadd.f32 %v3027, %v3074
        %s3100 = sld [smem:[#allocation5 + $0x51]]
        %v3101 = vstv %s3100
        %v3102 = vmul.f32 %v539, %v3101
        %v3103 = vmul.f32 %v540, %v3101
        %v3104 = vmul.f32 %v541, %v3101
        %v3105 = vmul.f32 %v542, %v3101
        %v3106 = vmul.f32 %v543, %v3101
        %v3107 = vmul.f32 %v544, %v3101
        %v3108 = vmul.f32 %v545, %v3101
        %v3109 = vmul.f32 %v546, %v3101
        %v3110 = vmul.f32 %v547, %v3101
        %v3111 = vmul.f32 %v548, %v3101
        %v3112 = vmul.f32 %v549, %v3101
        %v3113 = vmul.f32 %v550, %v3101
        %v3114 = vmul.f32 %v551, %v3101
        %v3115 = vmul.f32 %v552, %v3101
        %v3130 = vrot.slane %v3102, 6
        %v3131 = vrot.slane %v3104, 6
        %v3132 = vsel %vm288, %v3130, %v3131
        %v3133 = vrot.slane %v3103, 6
        %v3134 = vrot.slane %v3105, 6
        %v3135 = vsel %vm288, %v3133, %v3134
        %v3136 = vrot.slane %v3106, 6
        %v3137 = vsel %vm288, %v3131, %v3136
        %v3138 = vrot.slane %v3107, 6
        %v3139 = vsel %vm288, %v3134, %v3138
        %v3140 = vrot.slane %v3108, 6
        %v3141 = vsel %vm288, %v3136, %v3140
        %v3142 = vrot.slane %v3109, 6
        %v3143 = vsel %vm288, %v3138, %v3142
        %v3144 = vrot.slane %v3110, 6
        %v3145 = vsel %vm288, %v3140, %v3144
        %v3146 = vrot.slane %v3111, 6
        %v3147 = vsel %vm288, %v3142, %v3146
        %v3148 = vrot.slane %v3112, 6
        %v3149 = vsel %vm288, %v3144, %v3148
        %v3150 = vrot.slane %v3113, 6
        %v3151 = vsel %vm288, %v3146, %v3150
        %v3152 = vrot.slane %v3114, 6
        %v3153 = vsel %vm288, %v3148, %v3152
        %v3154 = vrot.slane %v3115, 6
        %v3155 = vsel %vm288, %v3150, %v3154
        %v3168 = vadd.f32 %v3088, %v3132
        %v3169 = vadd.f32 %v3089, %v3135
        %v3170 = vadd.f32 %v3090, %v3137
        %v3171 = vadd.f32 %v3091, %v3139
        %v3172 = vadd.f32 %v3092, %v3141
        %v3173 = vadd.f32 %v3093, %v3143
        %v3174 = vadd.f32 %v3094, %v3145
        %v3175 = vadd.f32 %v3095, %v3147
        %v3176 = vadd.f32 %v3096, %v3149
        %v3177 = vadd.f32 %v3097, %v3151
        %v3178 = vadd.f32 %v3098, %v3153
        %v3179 = vadd.f32 %v3099, %v3155
        %s3180 = sld [smem:[#allocation5 + $0x5c]]
        %v3181 = vstv %s3180
        %v3182 = vmul.f32 %v541, %v3181
        %v3183 = vmul.f32 %v542, %v3181
        %v3184 = vmul.f32 %v543, %v3181
        %v3185 = vmul.f32 %v544, %v3181
        %v3186 = vmul.f32 %v545, %v3181
        %v3187 = vmul.f32 %v546, %v3181
        %v3188 = vmul.f32 %v547, %v3181
        %v3189 = vmul.f32 %v548, %v3181
        %v3190 = vmul.f32 %v549, %v3181
        %v3191 = vmul.f32 %v550, %v3181
        %v3192 = vmul.f32 %v551, %v3181
        %v3193 = vmul.f32 %v552, %v3181
        %v3194 = vadd.f32 %v3168, %v3182
        %v3195 = vadd.f32 %v3169, %v3183
        %v3196 = vadd.f32 %v3170, %v3184
        %v3197 = vadd.f32 %v3171, %v3185
        %v3198 = vadd.f32 %v3172, %v3186
        %v3199 = vadd.f32 %v3173, %v3187
        %v3200 = vadd.f32 %v3174, %v3188
        %v3201 = vadd.f32 %v3175, %v3189
        %v3202 = vadd.f32 %v3176, %v3190
        %v3203 = vadd.f32 %v3177, %v3191
        %v3204 = vadd.f32 %v3178, %v3192
        %v3205 = vadd.f32 %v3179, %v3193
        %s3206 = sld [smem:[#allocation5 + $0x67]]
        %v3207 = vstv %s3206
        %v3208 = vmul.f32 %v541, %v3207
        %v3209 = vmul.f32 %v542, %v3207
        %v3210 = vmul.f32 %v543, %v3207
        %v3211 = vmul.f32 %v544, %v3207
        %v3212 = vmul.f32 %v545, %v3207
        %v3213 = vmul.f32 %v546, %v3207
        %v3214 = vmul.f32 %v547, %v3207
        %v3215 = vmul.f32 %v548, %v3207
        %v3216 = vmul.f32 %v549, %v3207
        %v3217 = vmul.f32 %v550, %v3207
        %v3218 = vmul.f32 %v551, %v3207
        %v3219 = vmul.f32 %v552, %v3207
        %v3232 = vrot.slane %v3208, 2
        %v3233 = vrot.slane %v3210, 2
        %v3234 = vsel %vm210, %v3232, %v3233
        %v3235 = vrot.slane %v3209, 2
        %v3236 = vrot.slane %v3211, 2
        %v3237 = vsel %vm210, %v3235, %v3236
        %v3238 = vrot.slane %v3212, 2
        %v3239 = vsel %vm210, %v3233, %v3238
        %v3240 = vrot.slane %v3213, 2
        %v3241 = vsel %vm210, %v3236, %v3240
        %v3242 = vrot.slane %v3214, 2
        %v3243 = vsel %vm210, %v3238, %v3242
        %v3244 = vrot.slane %v3215, 2
        %v3245 = vsel %vm210, %v3240, %v3244
        %v3246 = vrot.slane %v3216, 2
        %v3247 = vsel %vm210, %v3242, %v3246
        %v3248 = vrot.slane %v3217, 2
        %v3249 = vsel %vm210, %v3244, %v3248
        %v3250 = vrot.slane %v3218, 2
        %v3251 = vsel %vm210, %v3246, %v3250
        %v3252 = vrot.slane %v3219, 2
        %v3253 = vsel %vm210, %v3248, %v3252
        %v3266 = vadd.f32 %v3194, %v3234
        %v3267 = vadd.f32 %v3195, %v3237
        %v3268 = vadd.f32 %v3196, %v3239
        %v3269 = vadd.f32 %v3197, %v3241
        %v3270 = vadd.f32 %v3198, %v3243
        %v3271 = vadd.f32 %v3199, %v3245
        %v3272 = vadd.f32 %v3200, %v3247
        %v3273 = vadd.f32 %v3201, %v3249
        %v3274 = vadd.f32 %v3202, %v3251
        %v3275 = vadd.f32 %v3203, %v3253
        %v3276 = vadd.f32 %v3204, %v3250
        %v3277 = vadd.f32 %v3205, %v3252
        %s3278 = sld [smem:[#allocation5 + $0x72]]
        %v3279 = vstv %s3278
        %v3280 = vmul.f32 %v541, %v3279
        %v3281 = vmul.f32 %v542, %v3279
        %v3282 = vmul.f32 %v543, %v3279
        %v3283 = vmul.f32 %v544, %v3279
        %v3284 = vmul.f32 %v545, %v3279
        %v3285 = vmul.f32 %v546, %v3279
        %v3286 = vmul.f32 %v547, %v3279
        %v3287 = vmul.f32 %v548, %v3279
        %v3288 = vmul.f32 %v549, %v3279
        %v3289 = vmul.f32 %v550, %v3279
        %v3290 = vmul.f32 %v551, %v3279
        %v3291 = vmul.f32 %v552, %v3279
        %v3304 = vrot.slane %v3280, 4
        %v3305 = vrot.slane %v3282, 4
        %v3306 = vsel %vm248, %v3304, %v3305
        %v3307 = vrot.slane %v3281, 4
        %v3308 = vrot.slane %v3283, 4
        %v3309 = vsel %vm248, %v3307, %v3308
        %v3310 = vrot.slane %v3284, 4
        %v3311 = vsel %vm248, %v3305, %v3310
        %v3312 = vrot.slane %v3285, 4
        %v3313 = vsel %vm248, %v3308, %v3312
        %v3314 = vrot.slane %v3286, 4
        %v3315 = vsel %vm248, %v3310, %v3314
        %v3316 = vrot.slane %v3287, 4
        %v3317 = vsel %vm248, %v3312, %v3316
        %v3318 = vrot.slane %v3288, 4
        %v3319 = vsel %vm248, %v3314, %v3318
        %v3320 = vrot.slane %v3289, 4
        %v3321 = vsel %vm248, %v3316, %v3320
        %v3322 = vrot.slane %v3290, 4
        %v3323 = vsel %vm248, %v3318, %v3322
        %v3324 = vrot.slane %v3291, 4
        %v3325 = vsel %vm248, %v3320, %v3324
        %v3338 = vadd.f32 %v3266, %v3306
        %v3339 = vadd.f32 %v3267, %v3309
        %v3340 = vadd.f32 %v3268, %v3311
        %v3341 = vadd.f32 %v3269, %v3313
        %v3342 = vadd.f32 %v3270, %v3315
        %v3343 = vadd.f32 %v3271, %v3317
        %v3344 = vadd.f32 %v3272, %v3319
        %v3345 = vadd.f32 %v3273, %v3321
        %v3346 = vadd.f32 %v3274, %v3323
        %v3347 = vadd.f32 %v3275, %v3325
        %v3348 = vadd.f32 %v3276, %v3322
        %v3349 = vadd.f32 %v3277, %v3324
        %3362 = vrot.lane.b32.xlu0 %v3338, 120
        %v3363 = vpop.permute.xlu0 %3362
        %3364 = vrot.lane.b32.xlu0 %v3339, 120
        %v3365 = vpop.permute.xlu0 %3364
        %3366 = vrot.lane.b32.xlu0 %v3340, 120
        %v3367 = vpop.permute.xlu0 %3366
        %3368 = vrot.lane.b32.xlu0 %v3341, 120
        %v3369 = vpop.permute.xlu0 %3368
        %3370 = vrot.lane.b32.xlu0 %v3342, 120
        %v3371 = vpop.permute.xlu0 %3370
        %3372 = vrot.lane.b32.xlu0 %v3343, 120
        %v3373 = vpop.permute.xlu0 %3372
        %3374 = vrot.lane.b32.xlu0 %v3344, 120
        %v3375 = vpop.permute.xlu0 %3374
        %3376 = vrot.lane.b32.xlu0 %v3345, 120
        %v3377 = vpop.permute.xlu0 %3376
        %3378 = vrot.lane.b32.xlu0 %v3346, 120
        %v3379 = vpop.permute.xlu0 %3378
        %3380 = vrot.lane.b32.xlu0 %v3347, 120
        %v3381 = vpop.permute.xlu0 %3380
        %3382 = vrot.lane.b32.xlu0 %v3348, 120
        %v3383 = vpop.permute.xlu0 %3382
        %3384 = vrot.lane.b32.xlu0 %v3349, 120
        %v3385 = vpop.permute.xlu0 %3384
        %vm3386 = vcmask 982016
        %v3387 = vsel %vm3386, %v3363, %v3365
        %v3388 = vsel %vm3386, %v3367, %v3369
        %v3389 = vsel %vm3386, %v3371, %v3373
        %v3390 = vsel %vm3386, %v3375, %v3377
        %v3391 = vsel %vm3386, %v3379, %v3381
        %v3392 = vsel %vm3386, %v3383, %v3385
        %v3399 = vadd.f32 %v2686, %v3387
        %v3400 = vadd.f32 %v2687, %v3388
        %v3401 = vadd.f32 %v2688, %v3389
        %v3402 = vadd.f32 %v2689, %v3390
        %v3403 = vadd.f32 %v2690, %v3391
        %v3404 = vadd.f32 %v2691, %v3392
        %s3405 = sld [smem:[#allocation5 + $0x5]]
        %v3406 = vstv %s3405
        %v3407 = vmul.f32 %v537, %v3406
        %v3408 = vmul.f32 %v538, %v3406
        %v3409 = vmul.f32 %v539, %v3406
        %v3410 = vmul.f32 %v540, %v3406
        %v3411 = vmul.f32 %v541, %v3406
        %v3412 = vmul.f32 %v542, %v3406
        %v3413 = vmul.f32 %v543, %v3406
        %v3414 = vmul.f32 %v544, %v3406
        %v3415 = vmul.f32 %v545, %v3406
        %v3416 = vmul.f32 %v546, %v3406
        %v3417 = vmul.f32 %v547, %v3406
        %v3418 = vmul.f32 %v548, %v3406
        %s3419 = sld [smem:[#allocation5 + $0x10]]
        %v3420 = vstv %s3419
        %v3421 = vmul.f32 %v537, %v3420
        %v3422 = vmul.f32 %v538, %v3420
        %v3423 = vmul.f32 %v539, %v3420
        %v3424 = vmul.f32 %v540, %v3420
        %v3425 = vmul.f32 %v541, %v3420
        %v3426 = vmul.f32 %v542, %v3420
        %v3427 = vmul.f32 %v543, %v3420
        %v3428 = vmul.f32 %v544, %v3420
        %v3429 = vmul.f32 %v545, %v3420
        %v3430 = vmul.f32 %v546, %v3420
        %v3431 = vmul.f32 %v547, %v3420
        %v3432 = vmul.f32 %v548, %v3420
        %v3445 = vrot.slane %v3421, 2
        %v3446 = vrot.slane %v3423, 2
        %v3447 = vsel %vm210, %v3445, %v3446
        %v3448 = vrot.slane %v3422, 2
        %v3449 = vrot.slane %v3424, 2
        %v3450 = vsel %vm210, %v3448, %v3449
        %v3451 = vrot.slane %v3425, 2
        %v3452 = vsel %vm210, %v3446, %v3451
        %v3453 = vrot.slane %v3426, 2
        %v3454 = vsel %vm210, %v3449, %v3453
        %v3455 = vrot.slane %v3427, 2
        %v3456 = vsel %vm210, %v3451, %v3455
        %v3457 = vrot.slane %v3428, 2
        %v3458 = vsel %vm210, %v3453, %v3457
        %v3459 = vrot.slane %v3429, 2
        %v3460 = vsel %vm210, %v3455, %v3459
        %v3461 = vrot.slane %v3430, 2
        %v3462 = vsel %vm210, %v3457, %v3461
        %v3463 = vrot.slane %v3431, 2
        %v3464 = vsel %vm210, %v3459, %v3463
        %v3465 = vrot.slane %v3432, 2
        %v3466 = vsel %vm210, %v3461, %v3465
        %v3479 = vadd.f32 %v3407, %v3447
        %v3480 = vadd.f32 %v3408, %v3450
        %v3481 = vadd.f32 %v3409, %v3452
        %v3482 = vadd.f32 %v3410, %v3454
        %v3483 = vadd.f32 %v3411, %v3456
        %v3484 = vadd.f32 %v3412, %v3458
        %v3485 = vadd.f32 %v3413, %v3460
        %v3486 = vadd.f32 %v3414, %v3462
        %v3487 = vadd.f32 %v3415, %v3464
        %v3488 = vadd.f32 %v3416, %v3466
        %v3489 = vadd.f32 %v3417, %v3463
        %v3490 = vadd.f32 %v3418, %v3465
        %s3491 = sld [smem:[#allocation5 + $0x1b]]
        %v3492 = vstv %s3491
        %v3493 = vmul.f32 %v537, %v3492
        %v3494 = vmul.f32 %v538, %v3492
        %v3495 = vmul.f32 %v539, %v3492
        %v3496 = vmul.f32 %v540, %v3492
        %v3497 = vmul.f32 %v541, %v3492
        %v3498 = vmul.f32 %v542, %v3492
        %v3499 = vmul.f32 %v543, %v3492
        %v3500 = vmul.f32 %v544, %v3492
        %v3501 = vmul.f32 %v545, %v3492
        %v3502 = vmul.f32 %v546, %v3492
        %v3503 = vmul.f32 %v547, %v3492
        %v3504 = vmul.f32 %v548, %v3492
        %v3517 = vrot.slane %v3493, 4
        %v3518 = vrot.slane %v3495, 4
        %v3519 = vsel %vm248, %v3517, %v3518
        %v3520 = vrot.slane %v3494, 4
        %v3521 = vrot.slane %v3496, 4
        %v3522 = vsel %vm248, %v3520, %v3521
        %v3523 = vrot.slane %v3497, 4
        %v3524 = vsel %vm248, %v3518, %v3523
        %v3525 = vrot.slane %v3498, 4
        %v3526 = vsel %vm248, %v3521, %v3525
        %v3527 = vrot.slane %v3499, 4
        %v3528 = vsel %vm248, %v3523, %v3527
        %v3529 = vrot.slane %v3500, 4
        %v3530 = vsel %vm248, %v3525, %v3529
        %v3531 = vrot.slane %v3501, 4
        %v3532 = vsel %vm248, %v3527, %v3531
        %v3533 = vrot.slane %v3502, 4
        %v3534 = vsel %vm248, %v3529, %v3533
        %v3535 = vrot.slane %v3503, 4
        %v3536 = vsel %vm248, %v3531, %v3535
        %v3537 = vrot.slane %v3504, 4
        %v3538 = vsel %vm248, %v3533, %v3537
        %v3551 = vadd.f32 %v3479, %v3519
        %v3552 = vadd.f32 %v3480, %v3522
        %v3553 = vadd.f32 %v3481, %v3524
        %v3554 = vadd.f32 %v3482, %v3526
        %v3555 = vadd.f32 %v3483, %v3528
        %v3556 = vadd.f32 %v3484, %v3530
        %v3557 = vadd.f32 %v3485, %v3532
        %v3558 = vadd.f32 %v3486, %v3534
        %v3559 = vadd.f32 %v3487, %v3536
        %v3560 = vadd.f32 %v3488, %v3538
        %v3561 = vadd.f32 %v3489, %v3535
        %v3562 = vadd.f32 %v3490, %v3537
        %s3563 = sld [smem:[#allocation5 + $0x26]]
        %v3564 = vstv %s3563
        %v3565 = vmul.f32 %v537, %v3564
        %v3566 = vmul.f32 %v538, %v3564
        %v3567 = vmul.f32 %v539, %v3564
        %v3568 = vmul.f32 %v540, %v3564
        %v3569 = vmul.f32 %v541, %v3564
        %v3570 = vmul.f32 %v542, %v3564
        %v3571 = vmul.f32 %v543, %v3564
        %v3572 = vmul.f32 %v544, %v3564
        %v3573 = vmul.f32 %v545, %v3564
        %v3574 = vmul.f32 %v546, %v3564
        %v3575 = vmul.f32 %v547, %v3564
        %v3576 = vmul.f32 %v548, %v3564
        %v3577 = vmul.f32 %v549, %v3564
        %v3578 = vmul.f32 %v550, %v3564
        %v3593 = vrot.slane %v3565, 6
        %v3594 = vrot.slane %v3567, 6
        %v3595 = vsel %vm288, %v3593, %v3594
        %v3596 = vrot.slane %v3566, 6
        %v3597 = vrot.slane %v3568, 6
        %v3598 = vsel %vm288, %v3596, %v3597
        %v3599 = vrot.slane %v3569, 6
        %v3600 = vsel %vm288, %v3594, %v3599
        %v3601 = vrot.slane %v3570, 6
        %v3602 = vsel %vm288, %v3597, %v3601
        %v3603 = vrot.slane %v3571, 6
        %v3604 = vsel %vm288, %v3599, %v3603
        %v3605 = vrot.slane %v3572, 6
        %v3606 = vsel %vm288, %v3601, %v3605
        %v3607 = vrot.slane %v3573, 6
        %v3608 = vsel %vm288, %v3603, %v3607
        %v3609 = vrot.slane %v3574, 6
        %v3610 = vsel %vm288, %v3605, %v3609
        %v3611 = vrot.slane %v3575, 6
        %v3612 = vsel %vm288, %v3607, %v3611
        %v3613 = vrot.slane %v3576, 6
        %v3614 = vsel %vm288, %v3609, %v3613
        %v3615 = vrot.slane %v3577, 6
        %v3616 = vsel %vm288, %v3611, %v3615
        %v3617 = vrot.slane %v3578, 6
        %v3618 = vsel %vm288, %v3613, %v3617
        %v3631 = vadd.f32 %v3551, %v3595
        %v3632 = vadd.f32 %v3552, %v3598
        %v3633 = vadd.f32 %v3553, %v3600
        %v3634 = vadd.f32 %v3554, %v3602
        %v3635 = vadd.f32 %v3555, %v3604
        %v3636 = vadd.f32 %v3556, %v3606
        %v3637 = vadd.f32 %v3557, %v3608
        %v3638 = vadd.f32 %v3558, %v3610
        %v3639 = vadd.f32 %v3559, %v3612
        %v3640 = vadd.f32 %v3560, %v3614
        %v3641 = vadd.f32 %v3561, %v3616
        %v3642 = vadd.f32 %v3562, %v3618
        %s3643 = sld [smem:[#allocation5 + $0x31]]
        %v3644 = vstv %s3643
        %v3645 = vmul.f32 %v539, %v3644
        %v3646 = vmul.f32 %v540, %v3644
        %v3647 = vmul.f32 %v541, %v3644
        %v3648 = vmul.f32 %v542, %v3644
        %v3649 = vmul.f32 %v543, %v3644
        %v3650 = vmul.f32 %v544, %v3644
        %v3651 = vmul.f32 %v545, %v3644
        %v3652 = vmul.f32 %v546, %v3644
        %v3653 = vmul.f32 %v547, %v3644
        %v3654 = vmul.f32 %v548, %v3644
        %v3655 = vmul.f32 %v549, %v3644
        %v3656 = vmul.f32 %v550, %v3644
        %v3657 = vadd.f32 %v3631, %v3645
        %v3658 = vadd.f32 %v3632, %v3646
        %v3659 = vadd.f32 %v3633, %v3647
        %v3660 = vadd.f32 %v3634, %v3648
        %v3661 = vadd.f32 %v3635, %v3649
        %v3662 = vadd.f32 %v3636, %v3650
        %v3663 = vadd.f32 %v3637, %v3651
        %v3664 = vadd.f32 %v3638, %v3652
        %v3665 = vadd.f32 %v3639, %v3653
        %v3666 = vadd.f32 %v3640, %v3654
        %v3667 = vadd.f32 %v3641, %v3655
        %v3668 = vadd.f32 %v3642, %v3656
        %s3669 = sld [smem:[#allocation5 + $0x3c]]
        %v3670 = vstv %s3669
        %v3671 = vmul.f32 %v539, %v3670
        %v3672 = vmul.f32 %v540, %v3670
        %v3673 = vmul.f32 %v541, %v3670
        %v3674 = vmul.f32 %v542, %v3670
        %v3675 = vmul.f32 %v543, %v3670
        %v3676 = vmul.f32 %v544, %v3670
        %v3677 = vmul.f32 %v545, %v3670
        %v3678 = vmul.f32 %v546, %v3670
        %v3679 = vmul.f32 %v547, %v3670
        %v3680 = vmul.f32 %v548, %v3670
        %v3681 = vmul.f32 %v549, %v3670
        %v3682 = vmul.f32 %v550, %v3670
        %v3695 = vrot.slane %v3671, 2
        %v3696 = vrot.slane %v3673, 2
        %v3697 = vsel %vm210, %v3695, %v3696
        %v3698 = vrot.slane %v3672, 2
        %v3699 = vrot.slane %v3674, 2
        %v3700 = vsel %vm210, %v3698, %v3699
        %v3701 = vrot.slane %v3675, 2
        %v3702 = vsel %vm210, %v3696, %v3701
        %v3703 = vrot.slane %v3676, 2
        %v3704 = vsel %vm210, %v3699, %v3703
        %v3705 = vrot.slane %v3677, 2
        %v3706 = vsel %vm210, %v3701, %v3705
        %v3707 = vrot.slane %v3678, 2
        %v3708 = vsel %vm210, %v3703, %v3707
        %v3709 = vrot.slane %v3679, 2
        %v3710 = vsel %vm210, %v3705, %v3709
        %v3711 = vrot.slane %v3680, 2
        %v3712 = vsel %vm210, %v3707, %v3711
        %v3713 = vrot.slane %v3681, 2
        %v3714 = vsel %vm210, %v3709, %v3713
        %v3715 = vrot.slane %v3682, 2
        %v3716 = vsel %vm210, %v3711, %v3715
        %v3729 = vadd.f32 %v3657, %v3697
        %v3730 = vadd.f32 %v3658, %v3700
        %v3731 = vadd.f32 %v3659, %v3702
        %v3732 = vadd.f32 %v3660, %v3704
        %v3733 = vadd.f32 %v3661, %v3706
        %v3734 = vadd.f32 %v3662, %v3708
        %v3735 = vadd.f32 %v3663, %v3710
        %v3736 = vadd.f32 %v3664, %v3712
        %v3737 = vadd.f32 %v3665, %v3714
        %v3738 = vadd.f32 %v3666, %v3716
        %v3739 = vadd.f32 %v3667, %v3713
        %v3740 = vadd.f32 %v3668, %v3715
        %s3741 = sld [smem:[#allocation5 + $0x47]]
        %v3742 = vstv %s3741
        %v3743 = vmul.f32 %v539, %v3742
        %v3744 = vmul.f32 %v540, %v3742
        %v3745 = vmul.f32 %v541, %v3742
        %v3746 = vmul.f32 %v542, %v3742
        %v3747 = vmul.f32 %v543, %v3742
        %v3748 = vmul.f32 %v544, %v3742
        %v3749 = vmul.f32 %v545, %v3742
        %v3750 = vmul.f32 %v546, %v3742
        %v3751 = vmul.f32 %v547, %v3742
        %v3752 = vmul.f32 %v548, %v3742
        %v3753 = vmul.f32 %v549, %v3742
        %v3754 = vmul.f32 %v550, %v3742
        %v3767 = vrot.slane %v3743, 4
        %v3768 = vrot.slane %v3745, 4
        %v3769 = vsel %vm248, %v3767, %v3768
        %v3770 = vrot.slane %v3744, 4
        %v3771 = vrot.slane %v3746, 4
        %v3772 = vsel %vm248, %v3770, %v3771
        %v3773 = vrot.slane %v3747, 4
        %v3774 = vsel %vm248, %v3768, %v3773
        %v3775 = vrot.slane %v3748, 4
        %v3776 = vsel %vm248, %v3771, %v3775
        %v3777 = vrot.slane %v3749, 4
        %v3778 = vsel %vm248, %v3773, %v3777
        %v3779 = vrot.slane %v3750, 4
        %v3780 = vsel %vm248, %v3775, %v3779
        %v3781 = vrot.slane %v3751, 4
        %v3782 = vsel %vm248, %v3777, %v3781
        %v3783 = vrot.slane %v3752, 4
        %v3784 = vsel %vm248, %v3779, %v3783
        %v3785 = vrot.slane %v3753, 4
        %v3786 = vsel %vm248, %v3781, %v3785
        %v3787 = vrot.slane %v3754, 4
        %v3788 = vsel %vm248, %v3783, %v3787
        %v3801 = vadd.f32 %v3729, %v3769
        %v3802 = vadd.f32 %v3730, %v3772
        %v3803 = vadd.f32 %v3731, %v3774
        %v3804 = vadd.f32 %v3732, %v3776
        %v3805 = vadd.f32 %v3733, %v3778
        %v3806 = vadd.f32 %v3734, %v3780
        %v3807 = vadd.f32 %v3735, %v3782
        %v3808 = vadd.f32 %v3736, %v3784
        %v3809 = vadd.f32 %v3737, %v3786
        %v3810 = vadd.f32 %v3738, %v3788
        %v3811 = vadd.f32 %v3739, %v3785
        %v3812 = vadd.f32 %v3740, %v3787
        %s3813 = sld [smem:[#allocation5 + $0x52]]
        %v3814 = vstv %s3813
        %v3815 = vmul.f32 %v539, %v3814
        %v3816 = vmul.f32 %v540, %v3814
        %v3817 = vmul.f32 %v541, %v3814
        %v3818 = vmul.f32 %v542, %v3814
        %v3819 = vmul.f32 %v543, %v3814
        %v3820 = vmul.f32 %v544, %v3814
        %v3821 = vmul.f32 %v545, %v3814
        %v3822 = vmul.f32 %v546, %v3814
        %v3823 = vmul.f32 %v547, %v3814
        %v3824 = vmul.f32 %v548, %v3814
        %v3825 = vmul.f32 %v549, %v3814
        %v3826 = vmul.f32 %v550, %v3814
        %v3827 = vmul.f32 %v551, %v3814
        %v3828 = vmul.f32 %v552, %v3814
        %v3843 = vrot.slane %v3815, 6
        %v3844 = vrot.slane %v3817, 6
        %v3845 = vsel %vm288, %v3843, %v3844
        %v3846 = vrot.slane %v3816, 6
        %v3847 = vrot.slane %v3818, 6
        %v3848 = vsel %vm288, %v3846, %v3847
        %v3849 = vrot.slane %v3819, 6
        %v3850 = vsel %vm288, %v3844, %v3849
        %v3851 = vrot.slane %v3820, 6
        %v3852 = vsel %vm288, %v3847, %v3851
        %v3853 = vrot.slane %v3821, 6
        %v3854 = vsel %vm288, %v3849, %v3853
        %v3855 = vrot.slane %v3822, 6
        %v3856 = vsel %vm288, %v3851, %v3855
        %v3857 = vrot.slane %v3823, 6
        %v3858 = vsel %vm288, %v3853, %v3857
        %v3859 = vrot.slane %v3824, 6
        %v3860 = vsel %vm288, %v3855, %v3859
        %v3861 = vrot.slane %v3825, 6
        %v3862 = vsel %vm288, %v3857, %v3861
        %v3863 = vrot.slane %v3826, 6
        %v3864 = vsel %vm288, %v3859, %v3863
        %v3865 = vrot.slane %v3827, 6
        %v3866 = vsel %vm288, %v3861, %v3865
        %v3867 = vrot.slane %v3828, 6
        %v3868 = vsel %vm288, %v3863, %v3867
        %v3881 = vadd.f32 %v3801, %v3845
        %v3882 = vadd.f32 %v3802, %v3848
        %v3883 = vadd.f32 %v3803, %v3850
        %v3884 = vadd.f32 %v3804, %v3852
        %v3885 = vadd.f32 %v3805, %v3854
        %v3886 = vadd.f32 %v3806, %v3856
        %v3887 = vadd.f32 %v3807, %v3858
        %v3888 = vadd.f32 %v3808, %v3860
        %v3889 = vadd.f32 %v3809, %v3862
        %v3890 = vadd.f32 %v3810, %v3864
        %v3891 = vadd.f32 %v3811, %v3866
        %v3892 = vadd.f32 %v3812, %v3868
        %s3893 = sld [smem:[#allocation5 + $0x5d]]
        %v3894 = vstv %s3893
        %v3895 = vmul.f32 %v541, %v3894
        %v3896 = vmul.f32 %v542, %v3894
        %v3897 = vmul.f32 %v543, %v3894
        %v3898 = vmul.f32 %v544, %v3894
        %v3899 = vmul.f32 %v545, %v3894
        %v3900 = vmul.f32 %v546, %v3894
        %v3901 = vmul.f32 %v547, %v3894
        %v3902 = vmul.f32 %v548, %v3894
        %v3903 = vmul.f32 %v549, %v3894
        %v3904 = vmul.f32 %v550, %v3894
        %v3905 = vmul.f32 %v551, %v3894
        %v3906 = vmul.f32 %v552, %v3894
        %v3907 = vadd.f32 %v3881, %v3895
        %v3908 = vadd.f32 %v3882, %v3896
        %v3909 = vadd.f32 %v3883, %v3897
        %v3910 = vadd.f32 %v3884, %v3898
        %v3911 = vadd.f32 %v3885, %v3899
        %v3912 = vadd.f32 %v3886, %v3900
        %v3913 = vadd.f32 %v3887, %v3901
        %v3914 = vadd.f32 %v3888, %v3902
        %v3915 = vadd.f32 %v3889, %v3903
        %v3916 = vadd.f32 %v3890, %v3904
        %v3917 = vadd.f32 %v3891, %v3905
        %v3918 = vadd.f32 %v3892, %v3906
        %s3919 = sld [smem:[#allocation5 + $0x68]]
        %v3920 = vstv %s3919
        %v3921 = vmul.f32 %v541, %v3920
        %v3922 = vmul.f32 %v542, %v3920
        %v3923 = vmul.f32 %v543, %v3920
        %v3924 = vmul.f32 %v544, %v3920
        %v3925 = vmul.f32 %v545, %v3920
        %v3926 = vmul.f32 %v546, %v3920
        %v3927 = vmul.f32 %v547, %v3920
        %v3928 = vmul.f32 %v548, %v3920
        %v3929 = vmul.f32 %v549, %v3920
        %v3930 = vmul.f32 %v550, %v3920
        %v3931 = vmul.f32 %v551, %v3920
        %v3932 = vmul.f32 %v552, %v3920
        %v3945 = vrot.slane %v3921, 2
        %v3946 = vrot.slane %v3923, 2
        %v3947 = vsel %vm210, %v3945, %v3946
        %v3948 = vrot.slane %v3922, 2
        %v3949 = vrot.slane %v3924, 2
        %v3950 = vsel %vm210, %v3948, %v3949
        %v3951 = vrot.slane %v3925, 2
        %v3952 = vsel %vm210, %v3946, %v3951
        %v3953 = vrot.slane %v3926, 2
        %v3954 = vsel %vm210, %v3949, %v3953
        %v3955 = vrot.slane %v3927, 2
        %v3956 = vsel %vm210, %v3951, %v3955
        %v3957 = vrot.slane %v3928, 2
        %v3958 = vsel %vm210, %v3953, %v3957
        %v3959 = vrot.slane %v3929, 2
        %v3960 = vsel %vm210, %v3955, %v3959
        %v3961 = vrot.slane %v3930, 2
        %v3962 = vsel %vm210, %v3957, %v3961
        %v3963 = vrot.slane %v3931, 2
        %v3964 = vsel %vm210, %v3959, %v3963
        %v3965 = vrot.slane %v3932, 2
        %v3966 = vsel %vm210, %v3961, %v3965
        %v3979 = vadd.f32 %v3907, %v3947
        %v3980 = vadd.f32 %v3908, %v3950
        %v3981 = vadd.f32 %v3909, %v3952
        %v3982 = vadd.f32 %v3910, %v3954
        %v3983 = vadd.f32 %v3911, %v3956
        %v3984 = vadd.f32 %v3912, %v3958
        %v3985 = vadd.f32 %v3913, %v3960
        %v3986 = vadd.f32 %v3914, %v3962
        %v3987 = vadd.f32 %v3915, %v3964
        %v3988 = vadd.f32 %v3916, %v3966
        %v3989 = vadd.f32 %v3917, %v3963
        %v3990 = vadd.f32 %v3918, %v3965
        %s3991 = sld [smem:[#allocation5 + $0x73]]
        %v3992 = vstv %s3991
        %v3993 = vmul.f32 %v541, %v3992
        %v3994 = vmul.f32 %v542, %v3992
        %v3995 = vmul.f32 %v543, %v3992
        %v3996 = vmul.f32 %v544, %v3992
        %v3997 = vmul.f32 %v545, %v3992
        %v3998 = vmul.f32 %v546, %v3992
        %v3999 = vmul.f32 %v547, %v3992
        %v4000 = vmul.f32 %v548, %v3992
        %v4001 = vmul.f32 %v549, %v3992
        %v4002 = vmul.f32 %v550, %v3992
        %v4003 = vmul.f32 %v551, %v3992
        %v4004 = vmul.f32 %v552, %v3992
        %v4017 = vrot.slane %v3993, 4
        %v4018 = vrot.slane %v3995, 4
        %v4019 = vsel %vm248, %v4017, %v4018
        %v4020 = vrot.slane %v3994, 4
        %v4021 = vrot.slane %v3996, 4
        %v4022 = vsel %vm248, %v4020, %v4021
        %v4023 = vrot.slane %v3997, 4
        %v4024 = vsel %vm248, %v4018, %v4023
        %v4025 = vrot.slane %v3998, 4
        %v4026 = vsel %vm248, %v4021, %v4025
        %v4027 = vrot.slane %v3999, 4
        %v4028 = vsel %vm248, %v4023, %v4027
        %v4029 = vrot.slane %v4000, 4
        %v4030 = vsel %vm248, %v4025, %v4029
        %v4031 = vrot.slane %v4001, 4
        %v4032 = vsel %vm248, %v4027, %v4031
        %v4033 = vrot.slane %v4002, 4
        %v4034 = vsel %vm248, %v4029, %v4033
        %v4035 = vrot.slane %v4003, 4
        %v4036 = vsel %vm248, %v4031, %v4035
        %v4037 = vrot.slane %v4004, 4
        %v4038 = vsel %vm248, %v4033, %v4037
        %v4051 = vadd.f32 %v3979, %v4019
        %v4052 = vadd.f32 %v3980, %v4022
        %v4053 = vadd.f32 %v3981, %v4024
        %v4054 = vadd.f32 %v3982, %v4026
        %v4055 = vadd.f32 %v3983, %v4028
        %v4056 = vadd.f32 %v3984, %v4030
        %v4057 = vadd.f32 %v3985, %v4032
        %v4058 = vadd.f32 %v3986, %v4034
        %v4059 = vadd.f32 %v3987, %v4036
        %v4060 = vadd.f32 %v3988, %v4038
        %v4061 = vadd.f32 %v3989, %v4035
        %v4062 = vadd.f32 %v3990, %v4037
        %4075 = vrot.lane.b32.xlu0 %v4051, 118
        %v4076 = vpop.permute.xlu0 %4075
        %4077 = vrot.lane.b32.xlu0 %v4052, 118
        %v4078 = vpop.permute.xlu0 %4077
        %4079 = vrot.lane.b32.xlu0 %v4053, 118
        %v4080 = vpop.permute.xlu0 %4079
        %4081 = vrot.lane.b32.xlu0 %v4054, 118
        %v4082 = vpop.permute.xlu0 %4081
        %4083 = vrot.lane.b32.xlu0 %v4055, 118
        %v4084 = vpop.permute.xlu0 %4083
        %4085 = vrot.lane.b32.xlu0 %v4056, 118
        %v4086 = vpop.permute.xlu0 %4085
        %4087 = vrot.lane.b32.xlu0 %v4057, 118
        %v4088 = vpop.permute.xlu0 %4087
        %4089 = vrot.lane.b32.xlu0 %v4058, 118
        %v4090 = vpop.permute.xlu0 %4089
        %4091 = vrot.lane.b32.xlu0 %v4059, 118
        %v4092 = vpop.permute.xlu0 %4091
        %4093 = vrot.lane.b32.xlu0 %v4060, 118
        %v4094 = vpop.permute.xlu0 %4093
        %4095 = vrot.lane.b32.xlu0 %v4061, 118
        %v4096 = vpop.permute.xlu0 %4095
        %4097 = vrot.lane.b32.xlu0 %v4062, 118
        %v4098 = vpop.permute.xlu0 %4097
        %vm4099 = vcmask 965632
        %v4100 = vsel %vm4099, %v4076, %v4078
        %v4101 = vsel %vm4099, %v4080, %v4082
        %v4102 = vsel %vm4099, %v4084, %v4086
        %v4103 = vsel %vm4099, %v4088, %v4090
        %v4104 = vsel %vm4099, %v4092, %v4094
        %v4105 = vsel %vm4099, %v4096, %v4098
        %v4112 = vadd.f32 %v3399, %v4100
        %v4113 = vadd.f32 %v3400, %v4101
        %v4114 = vadd.f32 %v3401, %v4102
        %v4115 = vadd.f32 %v3402, %v4103
        %v4116 = vadd.f32 %v3403, %v4104
        %v4117 = vadd.f32 %v3404, %v4105
        %s4118 = sld [smem:[#allocation5 + $0x6]]
        %v4119 = vstv %s4118
        %v4120 = vmul.f32 %v537, %v4119
        %v4121 = vmul.f32 %v538, %v4119
        %v4122 = vmul.f32 %v539, %v4119
        %v4123 = vmul.f32 %v540, %v4119
        %v4124 = vmul.f32 %v541, %v4119
        %v4125 = vmul.f32 %v542, %v4119
        %v4126 = vmul.f32 %v543, %v4119
        %v4127 = vmul.f32 %v544, %v4119
        %v4128 = vmul.f32 %v545, %v4119
        %v4129 = vmul.f32 %v546, %v4119
        %v4130 = vmul.f32 %v547, %v4119
        %v4131 = vmul.f32 %v548, %v4119
        %s4132 = sld [smem:[#allocation5 + $0x11]]
        %v4133 = vstv %s4132
        %v4134 = vmul.f32 %v537, %v4133
        %v4135 = vmul.f32 %v538, %v4133
        %v4136 = vmul.f32 %v539, %v4133
        %v4137 = vmul.f32 %v540, %v4133
        %v4138 = vmul.f32 %v541, %v4133
        %v4139 = vmul.f32 %v542, %v4133
        %v4140 = vmul.f32 %v543, %v4133
        %v4141 = vmul.f32 %v544, %v4133
        %v4142 = vmul.f32 %v545, %v4133
        %v4143 = vmul.f32 %v546, %v4133
        %v4144 = vmul.f32 %v547, %v4133
        %v4145 = vmul.f32 %v548, %v4133
        %v4158 = vrot.slane %v4134, 2
        %v4159 = vrot.slane %v4136, 2
        %v4160 = vsel %vm210, %v4158, %v4159
        %v4161 = vrot.slane %v4135, 2
        %v4162 = vrot.slane %v4137, 2
        %v4163 = vsel %vm210, %v4161, %v4162
        %v4164 = vrot.slane %v4138, 2
        %v4165 = vsel %vm210, %v4159, %v4164
        %v4166 = vrot.slane %v4139, 2
        %v4167 = vsel %vm210, %v4162, %v4166
        %v4168 = vrot.slane %v4140, 2
        %v4169 = vsel %vm210, %v4164, %v4168
        %v4170 = vrot.slane %v4141, 2
        %v4171 = vsel %vm210, %v4166, %v4170
        %v4172 = vrot.slane %v4142, 2
        %v4173 = vsel %vm210, %v4168, %v4172
        %v4174 = vrot.slane %v4143, 2
        %v4175 = vsel %vm210, %v4170, %v4174
        %v4176 = vrot.slane %v4144, 2
        %v4177 = vsel %vm210, %v4172, %v4176
        %v4178 = vrot.slane %v4145, 2
        %v4179 = vsel %vm210, %v4174, %v4178
        %v4192 = vadd.f32 %v4120, %v4160
        %v4193 = vadd.f32 %v4121, %v4163
        %v4194 = vadd.f32 %v4122, %v4165
        %v4195 = vadd.f32 %v4123, %v4167
        %v4196 = vadd.f32 %v4124, %v4169
        %v4197 = vadd.f32 %v4125, %v4171
        %v4198 = vadd.f32 %v4126, %v4173
        %v4199 = vadd.f32 %v4127, %v4175
        %v4200 = vadd.f32 %v4128, %v4177
        %v4201 = vadd.f32 %v4129, %v4179
        %v4202 = vadd.f32 %v4130, %v4176
        %v4203 = vadd.f32 %v4131, %v4178
        %s4204 = sld [smem:[#allocation5 + $0x1c]]
        %v4205 = vstv %s4204
        %v4206 = vmul.f32 %v537, %v4205
        %v4207 = vmul.f32 %v538, %v4205
        %v4208 = vmul.f32 %v539, %v4205
        %v4209 = vmul.f32 %v540, %v4205
        %v4210 = vmul.f32 %v541, %v4205
        %v4211 = vmul.f32 %v542, %v4205
        %v4212 = vmul.f32 %v543, %v4205
        %v4213 = vmul.f32 %v544, %v4205
        %v4214 = vmul.f32 %v545, %v4205
        %v4215 = vmul.f32 %v546, %v4205
        %v4216 = vmul.f32 %v547, %v4205
        %v4217 = vmul.f32 %v548, %v4205
        %v4230 = vrot.slane %v4206, 4
        %v4231 = vrot.slane %v4208, 4
        %v4232 = vsel %vm248, %v4230, %v4231
        %v4233 = vrot.slane %v4207, 4
        %v4234 = vrot.slane %v4209, 4
        %v4235 = vsel %vm248, %v4233, %v4234
        %v4236 = vrot.slane %v4210, 4
        %v4237 = vsel %vm248, %v4231, %v4236
        %v4238 = vrot.slane %v4211, 4
        %v4239 = vsel %vm248, %v4234, %v4238
        %v4240 = vrot.slane %v4212, 4
        %v4241 = vsel %vm248, %v4236, %v4240
        %v4242 = vrot.slane %v4213, 4
        %v4243 = vsel %vm248, %v4238, %v4242
        %v4244 = vrot.slane %v4214, 4
        %v4245 = vsel %vm248, %v4240, %v4244
        %v4246 = vrot.slane %v4215, 4
        %v4247 = vsel %vm248, %v4242, %v4246
        %v4248 = vrot.slane %v4216, 4
        %v4249 = vsel %vm248, %v4244, %v4248
        %v4250 = vrot.slane %v4217, 4
        %v4251 = vsel %vm248, %v4246, %v4250
        %v4264 = vadd.f32 %v4192, %v4232
        %v4265 = vadd.f32 %v4193, %v4235
        %v4266 = vadd.f32 %v4194, %v4237
        %v4267 = vadd.f32 %v4195, %v4239
        %v4268 = vadd.f32 %v4196, %v4241
        %v4269 = vadd.f32 %v4197, %v4243
        %v4270 = vadd.f32 %v4198, %v4245
        %v4271 = vadd.f32 %v4199, %v4247
        %v4272 = vadd.f32 %v4200, %v4249
        %v4273 = vadd.f32 %v4201, %v4251
        %v4274 = vadd.f32 %v4202, %v4248
        %v4275 = vadd.f32 %v4203, %v4250
        %s4276 = sld [smem:[#allocation5 + $0x27]]
        %v4277 = vstv %s4276
        %v4278 = vmul.f32 %v537, %v4277
        %v4279 = vmul.f32 %v538, %v4277
        %v4280 = vmul.f32 %v539, %v4277
        %v4281 = vmul.f32 %v540, %v4277
        %v4282 = vmul.f32 %v541, %v4277
        %v4283 = vmul.f32 %v542, %v4277
        %v4284 = vmul.f32 %v543, %v4277
        %v4285 = vmul.f32 %v544, %v4277
        %v4286 = vmul.f32 %v545, %v4277
        %v4287 = vmul.f32 %v546, %v4277
        %v4288 = vmul.f32 %v547, %v4277
        %v4289 = vmul.f32 %v548, %v4277
        %v4290 = vmul.f32 %v549, %v4277
        %v4291 = vmul.f32 %v550, %v4277
        %v4306 = vrot.slane %v4278, 6
        %v4307 = vrot.slane %v4280, 6
        %v4308 = vsel %vm288, %v4306, %v4307
        %v4309 = vrot.slane %v4279, 6
        %v4310 = vrot.slane %v4281, 6
        %v4311 = vsel %vm288, %v4309, %v4310
        %v4312 = vrot.slane %v4282, 6
        %v4313 = vsel %vm288, %v4307, %v4312
        %v4314 = vrot.slane %v4283, 6
        %v4315 = vsel %vm288, %v4310, %v4314
        %v4316 = vrot.slane %v4284, 6
        %v4317 = vsel %vm288, %v4312, %v4316
        %v4318 = vrot.slane %v4285, 6
        %v4319 = vsel %vm288, %v4314, %v4318
        %v4320 = vrot.slane %v4286, 6
        %v4321 = vsel %vm288, %v4316, %v4320
        %v4322 = vrot.slane %v4287, 6
        %v4323 = vsel %vm288, %v4318, %v4322
        %v4324 = vrot.slane %v4288, 6
        %v4325 = vsel %vm288, %v4320, %v4324
        %v4326 = vrot.slane %v4289, 6
        %v4327 = vsel %vm288, %v4322, %v4326
        %v4328 = vrot.slane %v4290, 6
        %v4329 = vsel %vm288, %v4324, %v4328
        %v4330 = vrot.slane %v4291, 6
        %v4331 = vsel %vm288, %v4326, %v4330
        %v4344 = vadd.f32 %v4264, %v4308
        %v4345 = vadd.f32 %v4265, %v4311
        %v4346 = vadd.f32 %v4266, %v4313
        %v4347 = vadd.f32 %v4267, %v4315
        %v4348 = vadd.f32 %v4268, %v4317
        %v4349 = vadd.f32 %v4269, %v4319
        %v4350 = vadd.f32 %v4270, %v4321
        %v4351 = vadd.f32 %v4271, %v4323
        %v4352 = vadd.f32 %v4272, %v4325
        %v4353 = vadd.f32 %v4273, %v4327
        %v4354 = vadd.f32 %v4274, %v4329
        %v4355 = vadd.f32 %v4275, %v4331
        %s4356 = sld [smem:[#allocation5 + $0x32]]
        %v4357 = vstv %s4356
        %v4358 = vmul.f32 %v539, %v4357
        %v4359 = vmul.f32 %v540, %v4357
        %v4360 = vmul.f32 %v541, %v4357
        %v4361 = vmul.f32 %v542, %v4357
        %v4362 = vmul.f32 %v543, %v4357
        %v4363 = vmul.f32 %v544, %v4357
        %v4364 = vmul.f32 %v545, %v4357
        %v4365 = vmul.f32 %v546, %v4357
        %v4366 = vmul.f32 %v547, %v4357
        %v4367 = vmul.f32 %v548, %v4357
        %v4368 = vmul.f32 %v549, %v4357
        %v4369 = vmul.f32 %v550, %v4357
        %v4370 = vadd.f32 %v4344, %v4358
        %v4371 = vadd.f32 %v4345, %v4359
        %v4372 = vadd.f32 %v4346, %v4360
        %v4373 = vadd.f32 %v4347, %v4361
        %v4374 = vadd.f32 %v4348, %v4362
        %v4375 = vadd.f32 %v4349, %v4363
        %v4376 = vadd.f32 %v4350, %v4364
        %v4377 = vadd.f32 %v4351, %v4365
        %v4378 = vadd.f32 %v4352, %v4366
        %v4379 = vadd.f32 %v4353, %v4367
        %v4380 = vadd.f32 %v4354, %v4368
        %v4381 = vadd.f32 %v4355, %v4369
        %s4382 = sld [smem:[#allocation5 + $0x3d]]
        %v4383 = vstv %s4382
        %v4384 = vmul.f32 %v539, %v4383
        %v4385 = vmul.f32 %v540, %v4383
        %v4386 = vmul.f32 %v541, %v4383
        %v4387 = vmul.f32 %v542, %v4383
        %v4388 = vmul.f32 %v543, %v4383
        %v4389 = vmul.f32 %v544, %v4383
        %v4390 = vmul.f32 %v545, %v4383
        %v4391 = vmul.f32 %v546, %v4383
        %v4392 = vmul.f32 %v547, %v4383
        %v4393 = vmul.f32 %v548, %v4383
        %v4394 = vmul.f32 %v549, %v4383
        %v4395 = vmul.f32 %v550, %v4383
        %v4408 = vrot.slane %v4384, 2
        %v4409 = vrot.slane %v4386, 2
        %v4410 = vsel %vm210, %v4408, %v4409
        %v4411 = vrot.slane %v4385, 2
        %v4412 = vrot.slane %v4387, 2
        %v4413 = vsel %vm210, %v4411, %v4412
        %v4414 = vrot.slane %v4388, 2
        %v4415 = vsel %vm210, %v4409, %v4414
        %v4416 = vrot.slane %v4389, 2
        %v4417 = vsel %vm210, %v4412, %v4416
        %v4418 = vrot.slane %v4390, 2
        %v4419 = vsel %vm210, %v4414, %v4418
        %v4420 = vrot.slane %v4391, 2
        %v4421 = vsel %vm210, %v4416, %v4420
        %v4422 = vrot.slane %v4392, 2
        %v4423 = vsel %vm210, %v4418, %v4422
        %v4424 = vrot.slane %v4393, 2
        %v4425 = vsel %vm210, %v4420, %v4424
        %v4426 = vrot.slane %v4394, 2
        %v4427 = vsel %vm210, %v4422, %v4426
        %v4428 = vrot.slane %v4395, 2
        %v4429 = vsel %vm210, %v4424, %v4428
        %v4442 = vadd.f32 %v4370, %v4410
        %v4443 = vadd.f32 %v4371, %v4413
        %v4444 = vadd.f32 %v4372, %v4415
        %v4445 = vadd.f32 %v4373, %v4417
        %v4446 = vadd.f32 %v4374, %v4419
        %v4447 = vadd.f32 %v4375, %v4421
        %v4448 = vadd.f32 %v4376, %v4423
        %v4449 = vadd.f32 %v4377, %v4425
        %v4450 = vadd.f32 %v4378, %v4427
        %v4451 = vadd.f32 %v4379, %v4429
        %v4452 = vadd.f32 %v4380, %v4426
        %v4453 = vadd.f32 %v4381, %v4428
        %s4454 = sld [smem:[#allocation5 + $0x48]]
        %v4455 = vstv %s4454
        %v4456 = vmul.f32 %v539, %v4455
        %v4457 = vmul.f32 %v540, %v4455
        %v4458 = vmul.f32 %v541, %v4455
        %v4459 = vmul.f32 %v542, %v4455
        %v4460 = vmul.f32 %v543, %v4455
        %v4461 = vmul.f32 %v544, %v4455
        %v4462 = vmul.f32 %v545, %v4455
        %v4463 = vmul.f32 %v546, %v4455
        %v4464 = vmul.f32 %v547, %v4455
        %v4465 = vmul.f32 %v548, %v4455
        %v4466 = vmul.f32 %v549, %v4455
        %v4467 = vmul.f32 %v550, %v4455
        %v4480 = vrot.slane %v4456, 4
        %v4481 = vrot.slane %v4458, 4
        %v4482 = vsel %vm248, %v4480, %v4481
        %v4483 = vrot.slane %v4457, 4
        %v4484 = vrot.slane %v4459, 4
        %v4485 = vsel %vm248, %v4483, %v4484
        %v4486 = vrot.slane %v4460, 4
        %v4487 = vsel %vm248, %v4481, %v4486
        %v4488 = vrot.slane %v4461, 4
        %v4489 = vsel %vm248, %v4484, %v4488
        %v4490 = vrot.slane %v4462, 4
        %v4491 = vsel %vm248, %v4486, %v4490
        %v4492 = vrot.slane %v4463, 4
        %v4493 = vsel %vm248, %v4488, %v4492
        %v4494 = vrot.slane %v4464, 4
        %v4495 = vsel %vm248, %v4490, %v4494
        %v4496 = vrot.slane %v4465, 4
        %v4497 = vsel %vm248, %v4492, %v4496
        %v4498 = vrot.slane %v4466, 4
        %v4499 = vsel %vm248, %v4494, %v4498
        %v4500 = vrot.slane %v4467, 4
        %v4501 = vsel %vm248, %v4496, %v4500
        %v4514 = vadd.f32 %v4442, %v4482
        %v4515 = vadd.f32 %v4443, %v4485
        %v4516 = vadd.f32 %v4444, %v4487
        %v4517 = vadd.f32 %v4445, %v4489
        %v4518 = vadd.f32 %v4446, %v4491
        %v4519 = vadd.f32 %v4447, %v4493
        %v4520 = vadd.f32 %v4448, %v4495
        %v4521 = vadd.f32 %v4449, %v4497
        %v4522 = vadd.f32 %v4450, %v4499
        %v4523 = vadd.f32 %v4451, %v4501
        %v4524 = vadd.f32 %v4452, %v4498
        %v4525 = vadd.f32 %v4453, %v4500
        %s4526 = sld [smem:[#allocation5 + $0x53]]
        %v4527 = vstv %s4526
        %v4528 = vmul.f32 %v539, %v4527
        %v4529 = vmul.f32 %v540, %v4527
        %v4530 = vmul.f32 %v541, %v4527
        %v4531 = vmul.f32 %v542, %v4527
        %v4532 = vmul.f32 %v543, %v4527
        %v4533 = vmul.f32 %v544, %v4527
        %v4534 = vmul.f32 %v545, %v4527
        %v4535 = vmul.f32 %v546, %v4527
        %v4536 = vmul.f32 %v547, %v4527
        %v4537 = vmul.f32 %v548, %v4527
        %v4538 = vmul.f32 %v549, %v4527
        %v4539 = vmul.f32 %v550, %v4527
        %v4540 = vmul.f32 %v551, %v4527
        %v4541 = vmul.f32 %v552, %v4527
        %v4556 = vrot.slane %v4528, 6
        %v4557 = vrot.slane %v4530, 6
        %v4558 = vsel %vm288, %v4556, %v4557
        %v4559 = vrot.slane %v4529, 6
        %v4560 = vrot.slane %v4531, 6
        %v4561 = vsel %vm288, %v4559, %v4560
        %v4562 = vrot.slane %v4532, 6
        %v4563 = vsel %vm288, %v4557, %v4562
        %v4564 = vrot.slane %v4533, 6
        %v4565 = vsel %vm288, %v4560, %v4564
        %v4566 = vrot.slane %v4534, 6
        %v4567 = vsel %vm288, %v4562, %v4566
        %v4568 = vrot.slane %v4535, 6
        %v4569 = vsel %vm288, %v4564, %v4568
        %v4570 = vrot.slane %v4536, 6
        %v4571 = vsel %vm288, %v4566, %v4570
        %v4572 = vrot.slane %v4537, 6
        %v4573 = vsel %vm288, %v4568, %v4572
        %v4574 = vrot.slane %v4538, 6
        %v4575 = vsel %vm288, %v4570, %v4574
        %v4576 = vrot.slane %v4539, 6
        %v4577 = vsel %vm288, %v4572, %v4576
        %v4578 = vrot.slane %v4540, 6
        %v4579 = vsel %vm288, %v4574, %v4578
        %v4580 = vrot.slane %v4541, 6
        %v4581 = vsel %vm288, %v4576, %v4580
        %v4594 = vadd.f32 %v4514, %v4558
        %v4595 = vadd.f32 %v4515, %v4561
        %v4596 = vadd.f32 %v4516, %v4563
        %v4597 = vadd.f32 %v4517, %v4565
        %v4598 = vadd.f32 %v4518, %v4567
        %v4599 = vadd.f32 %v4519, %v4569
        %v4600 = vadd.f32 %v4520, %v4571
        %v4601 = vadd.f32 %v4521, %v4573
        %v4602 = vadd.f32 %v4522, %v4575
        %v4603 = vadd.f32 %v4523, %v4577
        %v4604 = vadd.f32 %v4524, %v4579
        %v4605 = vadd.f32 %v4525, %v4581
        %s4606 = sld [smem:[#allocation5 + $0x5e]]
        %v4607 = vstv %s4606
        %v4608 = vmul.f32 %v541, %v4607
        %v4609 = vmul.f32 %v542, %v4607
        %v4610 = vmul.f32 %v543, %v4607
        %v4611 = vmul.f32 %v544, %v4607
        %v4612 = vmul.f32 %v545, %v4607
        %v4613 = vmul.f32 %v546, %v4607
        %v4614 = vmul.f32 %v547, %v4607
        %v4615 = vmul.f32 %v548, %v4607
        %v4616 = vmul.f32 %v549, %v4607
        %v4617 = vmul.f32 %v550, %v4607
        %v4618 = vmul.f32 %v551, %v4607
        %v4619 = vmul.f32 %v552, %v4607
        %v4620 = vadd.f32 %v4594, %v4608
        %v4621 = vadd.f32 %v4595, %v4609
        %v4622 = vadd.f32 %v4596, %v4610
        %v4623 = vadd.f32 %v4597, %v4611
        %v4624 = vadd.f32 %v4598, %v4612
        %v4625 = vadd.f32 %v4599, %v4613
        %v4626 = vadd.f32 %v4600, %v4614
        %v4627 = vadd.f32 %v4601, %v4615
        %v4628 = vadd.f32 %v4602, %v4616
        %v4629 = vadd.f32 %v4603, %v4617
        %v4630 = vadd.f32 %v4604, %v4618
        %v4631 = vadd.f32 %v4605, %v4619
        %s4632 = sld [smem:[#allocation5 + $0x69]]
        %v4633 = vstv %s4632
        %v4634 = vmul.f32 %v541, %v4633
        %v4635 = vmul.f32 %v542, %v4633
        %v4636 = vmul.f32 %v543, %v4633
        %v4637 = vmul.f32 %v544, %v4633
        %v4638 = vmul.f32 %v545, %v4633
        %v4639 = vmul.f32 %v546, %v4633
        %v4640 = vmul.f32 %v547, %v4633
        %v4641 = vmul.f32 %v548, %v4633
        %v4642 = vmul.f32 %v549, %v4633
        %v4643 = vmul.f32 %v550, %v4633
        %v4644 = vmul.f32 %v551, %v4633
        %v4645 = vmul.f32 %v552, %v4633
        %v4658 = vrot.slane %v4634, 2
        %v4659 = vrot.slane %v4636, 2
        %v4660 = vsel %vm210, %v4658, %v4659
        %v4661 = vrot.slane %v4635, 2
        %v4662 = vrot.slane %v4637, 2
        %v4663 = vsel %vm210, %v4661, %v4662
        %v4664 = vrot.slane %v4638, 2
        %v4665 = vsel %vm210, %v4659, %v4664
        %v4666 = vrot.slane %v4639, 2
        %v4667 = vsel %vm210, %v4662, %v4666
        %v4668 = vrot.slane %v4640, 2
        %v4669 = vsel %vm210, %v4664, %v4668
        %v4670 = vrot.slane %v4641, 2
        %v4671 = vsel %vm210, %v4666, %v4670
        %v4672 = vrot.slane %v4642, 2
        %v4673 = vsel %vm210, %v4668, %v4672
        %v4674 = vrot.slane %v4643, 2
        %v4675 = vsel %vm210, %v4670, %v4674
        %v4676 = vrot.slane %v4644, 2
        %v4677 = vsel %vm210, %v4672, %v4676
        %v4678 = vrot.slane %v4645, 2
        %v4679 = vsel %vm210, %v4674, %v4678
        %v4692 = vadd.f32 %v4620, %v4660
        %v4693 = vadd.f32 %v4621, %v4663
        %v4694 = vadd.f32 %v4622, %v4665
        %v4695 = vadd.f32 %v4623, %v4667
        %v4696 = vadd.f32 %v4624, %v4669
        %v4697 = vadd.f32 %v4625, %v4671
        %v4698 = vadd.f32 %v4626, %v4673
        %v4699 = vadd.f32 %v4627, %v4675
        %v4700 = vadd.f32 %v4628, %v4677
        %v4701 = vadd.f32 %v4629, %v4679
        %v4702 = vadd.f32 %v4630, %v4676
        %v4703 = vadd.f32 %v4631, %v4678
        %s4704 = sld [smem:[#allocation5 + $0x74]]
        %v4705 = vstv %s4704
        %v4706 = vmul.f32 %v541, %v4705
        %v4707 = vmul.f32 %v542, %v4705
        %v4708 = vmul.f32 %v543, %v4705
        %v4709 = vmul.f32 %v544, %v4705
        %v4710 = vmul.f32 %v545, %v4705
        %v4711 = vmul.f32 %v546, %v4705
        %v4712 = vmul.f32 %v547, %v4705
        %v4713 = vmul.f32 %v548, %v4705
        %v4714 = vmul.f32 %v549, %v4705
        %v4715 = vmul.f32 %v550, %v4705
        %v4716 = vmul.f32 %v551, %v4705
        %v4717 = vmul.f32 %v552, %v4705
        %v4730 = vrot.slane %v4706, 4
        %v4731 = vrot.slane %v4708, 4
        %v4732 = vsel %vm248, %v4730, %v4731
        %v4733 = vrot.slane %v4707, 4
        %v4734 = vrot.slane %v4709, 4
        %v4735 = vsel %vm248, %v4733, %v4734
        %v4736 = vrot.slane %v4710, 4
        %v4737 = vsel %vm248, %v4731, %v4736
        %v4738 = vrot.slane %v4711, 4
        %v4739 = vsel %vm248, %v4734, %v4738
        %v4740 = vrot.slane %v4712, 4
        %v4741 = vsel %vm248, %v4736, %v4740
        %v4742 = vrot.slane %v4713, 4
        %v4743 = vsel %vm248, %v4738, %v4742
        %v4744 = vrot.slane %v4714, 4
        %v4745 = vsel %vm248, %v4740, %v4744
        %v4746 = vrot.slane %v4715, 4
        %v4747 = vsel %vm248, %v4742, %v4746
        %v4748 = vrot.slane %v4716, 4
        %v4749 = vsel %vm248, %v4744, %v4748
        %v4750 = vrot.slane %v4717, 4
        %v4751 = vsel %vm248, %v4746, %v4750
        %v4764 = vadd.f32 %v4692, %v4732
        %v4765 = vadd.f32 %v4693, %v4735
        %v4766 = vadd.f32 %v4694, %v4737
        %v4767 = vadd.f32 %v4695, %v4739
        %v4768 = vadd.f32 %v4696, %v4741
        %v4769 = vadd.f32 %v4697, %v4743
        %v4770 = vadd.f32 %v4698, %v4745
        %v4771 = vadd.f32 %v4699, %v4747
        %v4772 = vadd.f32 %v4700, %v4749
        %v4773 = vadd.f32 %v4701, %v4751
        %v4774 = vadd.f32 %v4702, %v4748
        %v4775 = vadd.f32 %v4703, %v4750
        %4788 = vrot.lane.b32.xlu0 %v4764, 116
        %v4789 = vpop.permute.xlu0 %4788
        %4790 = vrot.lane.b32.xlu0 %v4765, 116
        %v4791 = vpop.permute.xlu0 %4790
        %4792 = vrot.lane.b32.xlu0 %v4766, 116
        %v4793 = vpop.permute.xlu0 %4792
        %4794 = vrot.lane.b32.xlu0 %v4767, 116
        %v4795 = vpop.permute.xlu0 %4794
        %4796 = vrot.lane.b32.xlu0 %v4768, 116
        %v4797 = vpop.permute.xlu0 %4796
        %4798 = vrot.lane.b32.xlu0 %v4769, 116
        %v4799 = vpop.permute.xlu0 %4798
        %4800 = vrot.lane.b32.xlu0 %v4770, 116
        %v4801 = vpop.permute.xlu0 %4800
        %4802 = vrot.lane.b32.xlu0 %v4771, 116
        %v4803 = vpop.permute.xlu0 %4802
        %4804 = vrot.lane.b32.xlu0 %v4772, 116
        %v4805 = vpop.permute.xlu0 %4804
        %4806 = vrot.lane.b32.xlu0 %v4773, 116
        %v4807 = vpop.permute.xlu0 %4806
        %4808 = vrot.lane.b32.xlu0 %v4774, 116
        %v4809 = vpop.permute.xlu0 %4808
        %4810 = vrot.lane.b32.xlu0 %v4775, 116
        %v4811 = vpop.permute.xlu0 %4810
        %vm4812 = vcmask 949248
        %v4813 = vsel %vm4812, %v4789, %v4791
        %v4814 = vsel %vm4812, %v4793, %v4795
        %v4815 = vsel %vm4812, %v4797, %v4799
        %v4816 = vsel %vm4812, %v4801, %v4803
        %v4817 = vsel %vm4812, %v4805, %v4807
        %v4818 = vsel %vm4812, %v4809, %v4811
        %v4825 = vadd.f32 %v4112, %v4813
        %v4826 = vadd.f32 %v4113, %v4814
        %v4827 = vadd.f32 %v4114, %v4815
        %v4828 = vadd.f32 %v4115, %v4816
        %v4829 = vadd.f32 %v4116, %v4817
        %v4830 = vadd.f32 %v4117, %v4818
        %s4831 = sld [smem:[#allocation5 + $0x7]]
        %v4832 = vstv %s4831
        %v4833 = vmul.f32 %v537, %v4832
        %v4834 = vmul.f32 %v538, %v4832
        %v4835 = vmul.f32 %v539, %v4832
        %v4836 = vmul.f32 %v540, %v4832
        %v4837 = vmul.f32 %v541, %v4832
        %v4838 = vmul.f32 %v542, %v4832
        %v4839 = vmul.f32 %v543, %v4832
        %v4840 = vmul.f32 %v544, %v4832
        %v4841 = vmul.f32 %v545, %v4832
        %v4842 = vmul.f32 %v546, %v4832
        %v4843 = vmul.f32 %v547, %v4832
        %v4844 = vmul.f32 %v548, %v4832
        %s4845 = sld [smem:[#allocation5 + $0x12]]
        %v4846 = vstv %s4845
        %v4847 = vmul.f32 %v537, %v4846
        %v4848 = vmul.f32 %v538, %v4846
        %v4849 = vmul.f32 %v539, %v4846
        %v4850 = vmul.f32 %v540, %v4846
        %v4851 = vmul.f32 %v541, %v4846
        %v4852 = vmul.f32 %v542, %v4846
        %v4853 = vmul.f32 %v543, %v4846
        %v4854 = vmul.f32 %v544, %v4846
        %v4855 = vmul.f32 %v545, %v4846
        %v4856 = vmul.f32 %v546, %v4846
        %v4857 = vmul.f32 %v547, %v4846
        %v4858 = vmul.f32 %v548, %v4846
        %v4871 = vrot.slane %v4847, 2
        %v4872 = vrot.slane %v4849, 2
        %v4873 = vsel %vm210, %v4871, %v4872
        %v4874 = vrot.slane %v4848, 2
        %v4875 = vrot.slane %v4850, 2
        %v4876 = vsel %vm210, %v4874, %v4875
        %v4877 = vrot.slane %v4851, 2
        %v4878 = vsel %vm210, %v4872, %v4877
        %v4879 = vrot.slane %v4852, 2
        %v4880 = vsel %vm210, %v4875, %v4879
        %v4881 = vrot.slane %v4853, 2
        %v4882 = vsel %vm210, %v4877, %v4881
        %v4883 = vrot.slane %v4854, 2
        %v4884 = vsel %vm210, %v4879, %v4883
        %v4885 = vrot.slane %v4855, 2
        %v4886 = vsel %vm210, %v4881, %v4885
        %v4887 = vrot.slane %v4856, 2
        %v4888 = vsel %vm210, %v4883, %v4887
        %v4889 = vrot.slane %v4857, 2
        %v4890 = vsel %vm210, %v4885, %v4889
        %v4891 = vrot.slane %v4858, 2
        %v4892 = vsel %vm210, %v4887, %v4891
        %v4905 = vadd.f32 %v4833, %v4873
        %v4906 = vadd.f32 %v4834, %v4876
        %v4907 = vadd.f32 %v4835, %v4878
        %v4908 = vadd.f32 %v4836, %v4880
        %v4909 = vadd.f32 %v4837, %v4882
        %v4910 = vadd.f32 %v4838, %v4884
        %v4911 = vadd.f32 %v4839, %v4886
        %v4912 = vadd.f32 %v4840, %v4888
        %v4913 = vadd.f32 %v4841, %v4890
        %v4914 = vadd.f32 %v4842, %v4892
        %v4915 = vadd.f32 %v4843, %v4889
        %v4916 = vadd.f32 %v4844, %v4891
        %s4917 = sld [smem:[#allocation5 + $0x1d]]
        %v4918 = vstv %s4917
        %v4919 = vmul.f32 %v537, %v4918
        %v4920 = vmul.f32 %v538, %v4918
        %v4921 = vmul.f32 %v539, %v4918
        %v4922 = vmul.f32 %v540, %v4918
        %v4923 = vmul.f32 %v541, %v4918
        %v4924 = vmul.f32 %v542, %v4918
        %v4925 = vmul.f32 %v543, %v4918
        %v4926 = vmul.f32 %v544, %v4918
        %v4927 = vmul.f32 %v545, %v4918
        %v4928 = vmul.f32 %v546, %v4918
        %v4929 = vmul.f32 %v547, %v4918
        %v4930 = vmul.f32 %v548, %v4918
        %v4943 = vrot.slane %v4919, 4
        %v4944 = vrot.slane %v4921, 4
        %v4945 = vsel %vm248, %v4943, %v4944
        %v4946 = vrot.slane %v4920, 4
        %v4947 = vrot.slane %v4922, 4
        %v4948 = vsel %vm248, %v4946, %v4947
        %v4949 = vrot.slane %v4923, 4
        %v4950 = vsel %vm248, %v4944, %v4949
        %v4951 = vrot.slane %v4924, 4
        %v4952 = vsel %vm248, %v4947, %v4951
        %v4953 = vrot.slane %v4925, 4
        %v4954 = vsel %vm248, %v4949, %v4953
        %v4955 = vrot.slane %v4926, 4
        %v4956 = vsel %vm248, %v4951, %v4955
        %v4957 = vrot.slane %v4927, 4
        %v4958 = vsel %vm248, %v4953, %v4957
        %v4959 = vrot.slane %v4928, 4
        %v4960 = vsel %vm248, %v4955, %v4959
        %v4961 = vrot.slane %v4929, 4
        %v4962 = vsel %vm248, %v4957, %v4961
        %v4963 = vrot.slane %v4930, 4
        %v4964 = vsel %vm248, %v4959, %v4963
        %v4977 = vadd.f32 %v4905, %v4945
        %v4978 = vadd.f32 %v4906, %v4948
        %v4979 = vadd.f32 %v4907, %v4950
        %v4980 = vadd.f32 %v4908, %v4952
        %v4981 = vadd.f32 %v4909, %v4954
        %v4982 = vadd.f32 %v4910, %v4956
        %v4983 = vadd.f32 %v4911, %v4958
        %v4984 = vadd.f32 %v4912, %v4960
        %v4985 = vadd.f32 %v4913, %v4962
        %v4986 = vadd.f32 %v4914, %v4964
        %v4987 = vadd.f32 %v4915, %v4961
        %v4988 = vadd.f32 %v4916, %v4963
        %s4989 = sld [smem:[#allocation5 + $0x28]]
        %v4990 = vstv %s4989
        %v4991 = vmul.f32 %v537, %v4990
        %v4992 = vmul.f32 %v538, %v4990
        %v4993 = vmul.f32 %v539, %v4990
        %v4994 = vmul.f32 %v540, %v4990
        %v4995 = vmul.f32 %v541, %v4990
        %v4996 = vmul.f32 %v542, %v4990
        %v4997 = vmul.f32 %v543, %v4990
        %v4998 = vmul.f32 %v544, %v4990
        %v4999 = vmul.f32 %v545, %v4990
        %v5000 = vmul.f32 %v546, %v4990
        %v5001 = vmul.f32 %v547, %v4990
        %v5002 = vmul.f32 %v548, %v4990
        %v5003 = vmul.f32 %v549, %v4990
        %v5004 = vmul.f32 %v550, %v4990
        %v5019 = vrot.slane %v4991, 6
        %v5020 = vrot.slane %v4993, 6
        %v5021 = vsel %vm288, %v5019, %v5020
        %v5022 = vrot.slane %v4992, 6
        %v5023 = vrot.slane %v4994, 6
        %v5024 = vsel %vm288, %v5022, %v5023
        %v5025 = vrot.slane %v4995, 6
        %v5026 = vsel %vm288, %v5020, %v5025
        %v5027 = vrot.slane %v4996, 6
        %v5028 = vsel %vm288, %v5023, %v5027
        %v5029 = vrot.slane %v4997, 6
        %v5030 = vsel %vm288, %v5025, %v5029
        %v5031 = vrot.slane %v4998, 6
        %v5032 = vsel %vm288, %v5027, %v5031
        %v5033 = vrot.slane %v4999, 6
        %v5034 = vsel %vm288, %v5029, %v5033
        %v5035 = vrot.slane %v5000, 6
        %v5036 = vsel %vm288, %v5031, %v5035
        %v5037 = vrot.slane %v5001, 6
        %v5038 = vsel %vm288, %v5033, %v5037
        %v5039 = vrot.slane %v5002, 6
        %v5040 = vsel %vm288, %v5035, %v5039
        %v5041 = vrot.slane %v5003, 6
        %v5042 = vsel %vm288, %v5037, %v5041
        %v5043 = vrot.slane %v5004, 6
        %v5044 = vsel %vm288, %v5039, %v5043
        %v5057 = vadd.f32 %v4977, %v5021
        %v5058 = vadd.f32 %v4978, %v5024
        %v5059 = vadd.f32 %v4979, %v5026
        %v5060 = vadd.f32 %v4980, %v5028
        %v5061 = vadd.f32 %v4981, %v5030
        %v5062 = vadd.f32 %v4982, %v5032
        %v5063 = vadd.f32 %v4983, %v5034
        %v5064 = vadd.f32 %v4984, %v5036
        %v5065 = vadd.f32 %v4985, %v5038
        %v5066 = vadd.f32 %v4986, %v5040
        %v5067 = vadd.f32 %v4987, %v5042
        %v5068 = vadd.f32 %v4988, %v5044
        %s5069 = sld [smem:[#allocation5 + $0x33]]
        %v5070 = vstv %s5069
        %v5071 = vmul.f32 %v539, %v5070
        %v5072 = vmul.f32 %v540, %v5070
        %v5073 = vmul.f32 %v541, %v5070
        %v5074 = vmul.f32 %v542, %v5070
        %v5075 = vmul.f32 %v543, %v5070
        %v5076 = vmul.f32 %v544, %v5070
        %v5077 = vmul.f32 %v545, %v5070
        %v5078 = vmul.f32 %v546, %v5070
        %v5079 = vmul.f32 %v547, %v5070
        %v5080 = vmul.f32 %v548, %v5070
        %v5081 = vmul.f32 %v549, %v5070
        %v5082 = vmul.f32 %v550, %v5070
        %v5083 = vadd.f32 %v5057, %v5071
        %v5084 = vadd.f32 %v5058, %v5072
        %v5085 = vadd.f32 %v5059, %v5073
        %v5086 = vadd.f32 %v5060, %v5074
        %v5087 = vadd.f32 %v5061, %v5075
        %v5088 = vadd.f32 %v5062, %v5076
        %v5089 = vadd.f32 %v5063, %v5077
        %v5090 = vadd.f32 %v5064, %v5078
        %v5091 = vadd.f32 %v5065, %v5079
        %v5092 = vadd.f32 %v5066, %v5080
        %v5093 = vadd.f32 %v5067, %v5081
        %v5094 = vadd.f32 %v5068, %v5082
        %s5095 = sld [smem:[#allocation5 + $0x3e]]
        %v5096 = vstv %s5095
        %v5097 = vmul.f32 %v539, %v5096
        %v5098 = vmul.f32 %v540, %v5096
        %v5099 = vmul.f32 %v541, %v5096
        %v5100 = vmul.f32 %v542, %v5096
        %v5101 = vmul.f32 %v543, %v5096
        %v5102 = vmul.f32 %v544, %v5096
        %v5103 = vmul.f32 %v545, %v5096
        %v5104 = vmul.f32 %v546, %v5096
        %v5105 = vmul.f32 %v547, %v5096
        %v5106 = vmul.f32 %v548, %v5096
        %v5107 = vmul.f32 %v549, %v5096
        %v5108 = vmul.f32 %v550, %v5096
        %v5121 = vrot.slane %v5097, 2
        %v5122 = vrot.slane %v5099, 2
        %v5123 = vsel %vm210, %v5121, %v5122
        %v5124 = vrot.slane %v5098, 2
        %v5125 = vrot.slane %v5100, 2
        %v5126 = vsel %vm210, %v5124, %v5125
        %v5127 = vrot.slane %v5101, 2
        %v5128 = vsel %vm210, %v5122, %v5127
        %v5129 = vrot.slane %v5102, 2
        %v5130 = vsel %vm210, %v5125, %v5129
        %v5131 = vrot.slane %v5103, 2
        %v5132 = vsel %vm210, %v5127, %v5131
        %v5133 = vrot.slane %v5104, 2
        %v5134 = vsel %vm210, %v5129, %v5133
        %v5135 = vrot.slane %v5105, 2
        %v5136 = vsel %vm210, %v5131, %v5135
        %v5137 = vrot.slane %v5106, 2
        %v5138 = vsel %vm210, %v5133, %v5137
        %v5139 = vrot.slane %v5107, 2
        %v5140 = vsel %vm210, %v5135, %v5139
        %v5141 = vrot.slane %v5108, 2
        %v5142 = vsel %vm210, %v5137, %v5141
        %v5155 = vadd.f32 %v5083, %v5123
        %v5156 = vadd.f32 %v5084, %v5126
        %v5157 = vadd.f32 %v5085, %v5128
        %v5158 = vadd.f32 %v5086, %v5130
        %v5159 = vadd.f32 %v5087, %v5132
        %v5160 = vadd.f32 %v5088, %v5134
        %v5161 = vadd.f32 %v5089, %v5136
        %v5162 = vadd.f32 %v5090, %v5138
        %v5163 = vadd.f32 %v5091, %v5140
        %v5164 = vadd.f32 %v5092, %v5142
        %v5165 = vadd.f32 %v5093, %v5139
        %v5166 = vadd.f32 %v5094, %v5141
        %s5167 = sld [smem:[#allocation5 + $0x49]]
        %v5168 = vstv %s5167
        %v5169 = vmul.f32 %v539, %v5168
        %v5170 = vmul.f32 %v540, %v5168
        %v5171 = vmul.f32 %v541, %v5168
        %v5172 = vmul.f32 %v542, %v5168
        %v5173 = vmul.f32 %v543, %v5168
        %v5174 = vmul.f32 %v544, %v5168
        %v5175 = vmul.f32 %v545, %v5168
        %v5176 = vmul.f32 %v546, %v5168
        %v5177 = vmul.f32 %v547, %v5168
        %v5178 = vmul.f32 %v548, %v5168
        %v5179 = vmul.f32 %v549, %v5168
        %v5180 = vmul.f32 %v550, %v5168
        %v5193 = vrot.slane %v5169, 4
        %v5194 = vrot.slane %v5171, 4
        %v5195 = vsel %vm248, %v5193, %v5194
        %v5196 = vrot.slane %v5170, 4
        %v5197 = vrot.slane %v5172, 4
        %v5198 = vsel %vm248, %v5196, %v5197
        %v5199 = vrot.slane %v5173, 4
        %v5200 = vsel %vm248, %v5194, %v5199
        %v5201 = vrot.slane %v5174, 4
        %v5202 = vsel %vm248, %v5197, %v5201
        %v5203 = vrot.slane %v5175, 4
        %v5204 = vsel %vm248, %v5199, %v5203
        %v5205 = vrot.slane %v5176, 4
        %v5206 = vsel %vm248, %v5201, %v5205
        %v5207 = vrot.slane %v5177, 4
        %v5208 = vsel %vm248, %v5203, %v5207
        %v5209 = vrot.slane %v5178, 4
        %v5210 = vsel %vm248, %v5205, %v5209
        %v5211 = vrot.slane %v5179, 4
        %v5212 = vsel %vm248, %v5207, %v5211
        %v5213 = vrot.slane %v5180, 4
        %v5214 = vsel %vm248, %v5209, %v5213
        %v5227 = vadd.f32 %v5155, %v5195
        %v5228 = vadd.f32 %v5156, %v5198
        %v5229 = vadd.f32 %v5157, %v5200
        %v5230 = vadd.f32 %v5158, %v5202
        %v5231 = vadd.f32 %v5159, %v5204
        %v5232 = vadd.f32 %v5160, %v5206
        %v5233 = vadd.f32 %v5161, %v5208
        %v5234 = vadd.f32 %v5162, %v5210
        %v5235 = vadd.f32 %v5163, %v5212
        %v5236 = vadd.f32 %v5164, %v5214
        %v5237 = vadd.f32 %v5165, %v5211
        %v5238 = vadd.f32 %v5166, %v5213
        %s5239 = sld [smem:[#allocation5 + $0x54]]
        %v5240 = vstv %s5239
        %v5241 = vmul.f32 %v539, %v5240
        %v5242 = vmul.f32 %v540, %v5240
        %v5243 = vmul.f32 %v541, %v5240
        %v5244 = vmul.f32 %v542, %v5240
        %v5245 = vmul.f32 %v543, %v5240
        %v5246 = vmul.f32 %v544, %v5240
        %v5247 = vmul.f32 %v545, %v5240
        %v5248 = vmul.f32 %v546, %v5240
        %v5249 = vmul.f32 %v547, %v5240
        %v5250 = vmul.f32 %v548, %v5240
        %v5251 = vmul.f32 %v549, %v5240
        %v5252 = vmul.f32 %v550, %v5240
        %v5253 = vmul.f32 %v551, %v5240
        %v5254 = vmul.f32 %v552, %v5240
        %v5269 = vrot.slane %v5241, 6
        %v5270 = vrot.slane %v5243, 6
        %v5271 = vsel %vm288, %v5269, %v5270
        %v5272 = vrot.slane %v5242, 6
        %v5273 = vrot.slane %v5244, 6
        %v5274 = vsel %vm288, %v5272, %v5273
        %v5275 = vrot.slane %v5245, 6
        %v5276 = vsel %vm288, %v5270, %v5275
        %v5277 = vrot.slane %v5246, 6
        %v5278 = vsel %vm288, %v5273, %v5277
        %v5279 = vrot.slane %v5247, 6
        %v5280 = vsel %vm288, %v5275, %v5279
        %v5281 = vrot.slane %v5248, 6
        %v5282 = vsel %vm288, %v5277, %v5281
        %v5283 = vrot.slane %v5249, 6
        %v5284 = vsel %vm288, %v5279, %v5283
        %v5285 = vrot.slane %v5250, 6
        %v5286 = vsel %vm288, %v5281, %v5285
        %v5287 = vrot.slane %v5251, 6
        %v5288 = vsel %vm288, %v5283, %v5287
        %v5289 = vrot.slane %v5252, 6
        %v5290 = vsel %vm288, %v5285, %v5289
        %v5291 = vrot.slane %v5253, 6
        %v5292 = vsel %vm288, %v5287, %v5291
        %v5293 = vrot.slane %v5254, 6
        %v5294 = vsel %vm288, %v5289, %v5293
        %v5307 = vadd.f32 %v5227, %v5271
        %v5308 = vadd.f32 %v5228, %v5274
        %v5309 = vadd.f32 %v5229, %v5276
        %v5310 = vadd.f32 %v5230, %v5278
        %v5311 = vadd.f32 %v5231, %v5280
        %v5312 = vadd.f32 %v5232, %v5282
        %v5313 = vadd.f32 %v5233, %v5284
        %v5314 = vadd.f32 %v5234, %v5286
        %v5315 = vadd.f32 %v5235, %v5288
        %v5316 = vadd.f32 %v5236, %v5290
        %v5317 = vadd.f32 %v5237, %v5292
        %v5318 = vadd.f32 %v5238, %v5294
        %s5319 = sld [smem:[#allocation5 + $0x5f]]
        %v5320 = vstv %s5319
        %v5321 = vmul.f32 %v541, %v5320
        %v5322 = vmul.f32 %v542, %v5320
        %v5323 = vmul.f32 %v543, %v5320
        %v5324 = vmul.f32 %v544, %v5320
        %v5325 = vmul.f32 %v545, %v5320
        %v5326 = vmul.f32 %v546, %v5320
        %v5327 = vmul.f32 %v547, %v5320
        %v5328 = vmul.f32 %v548, %v5320
        %v5329 = vmul.f32 %v549, %v5320
        %v5330 = vmul.f32 %v550, %v5320
        %v5331 = vmul.f32 %v551, %v5320
        %v5332 = vmul.f32 %v552, %v5320
        %v5333 = vadd.f32 %v5307, %v5321
        %v5334 = vadd.f32 %v5308, %v5322
        %v5335 = vadd.f32 %v5309, %v5323
        %v5336 = vadd.f32 %v5310, %v5324
        %v5337 = vadd.f32 %v5311, %v5325
        %v5338 = vadd.f32 %v5312, %v5326
        %v5339 = vadd.f32 %v5313, %v5327
        %v5340 = vadd.f32 %v5314, %v5328
        %v5341 = vadd.f32 %v5315, %v5329
        %v5342 = vadd.f32 %v5316, %v5330
        %v5343 = vadd.f32 %v5317, %v5331
        %v5344 = vadd.f32 %v5318, %v5332
        %s5345 = sld [smem:[#allocation5 + $0x6a]]
        %v5346 = vstv %s5345
        %v5347 = vmul.f32 %v541, %v5346
        %v5348 = vmul.f32 %v542, %v5346
        %v5349 = vmul.f32 %v543, %v5346
        %v5350 = vmul.f32 %v544, %v5346
        %v5351 = vmul.f32 %v545, %v5346
        %v5352 = vmul.f32 %v546, %v5346
        %v5353 = vmul.f32 %v547, %v5346
        %v5354 = vmul.f32 %v548, %v5346
        %v5355 = vmul.f32 %v549, %v5346
        %v5356 = vmul.f32 %v550, %v5346
        %v5357 = vmul.f32 %v551, %v5346
        %v5358 = vmul.f32 %v552, %v5346
        %v5371 = vrot.slane %v5347, 2
        %v5372 = vrot.slane %v5349, 2
        %v5373 = vsel %vm210, %v5371, %v5372
        %v5374 = vrot.slane %v5348, 2
        %v5375 = vrot.slane %v5350, 2
        %v5376 = vsel %vm210, %v5374, %v5375
        %v5377 = vrot.slane %v5351, 2
        %v5378 = vsel %vm210, %v5372, %v5377
        %v5379 = vrot.slane %v5352, 2
        %v5380 = vsel %vm210, %v5375, %v5379
        %v5381 = vrot.slane %v5353, 2
        %v5382 = vsel %vm210, %v5377, %v5381
        %v5383 = vrot.slane %v5354, 2
        %v5384 = vsel %vm210, %v5379, %v5383
        %v5385 = vrot.slane %v5355, 2
        %v5386 = vsel %vm210, %v5381, %v5385
        %v5387 = vrot.slane %v5356, 2
        %v5388 = vsel %vm210, %v5383, %v5387
        %v5389 = vrot.slane %v5357, 2
        %v5390 = vsel %vm210, %v5385, %v5389
        %v5391 = vrot.slane %v5358, 2
        %v5392 = vsel %vm210, %v5387, %v5391
        %v5405 = vadd.f32 %v5333, %v5373
        %v5406 = vadd.f32 %v5334, %v5376
        %v5407 = vadd.f32 %v5335, %v5378
        %v5408 = vadd.f32 %v5336, %v5380
        %v5409 = vadd.f32 %v5337, %v5382
        %v5410 = vadd.f32 %v5338, %v5384
        %v5411 = vadd.f32 %v5339, %v5386
        %v5412 = vadd.f32 %v5340, %v5388
        %v5413 = vadd.f32 %v5341, %v5390
        %v5414 = vadd.f32 %v5342, %v5392
        %v5415 = vadd.f32 %v5343, %v5389
        %v5416 = vadd.f32 %v5344, %v5391
        %s5417 = sld [smem:[#allocation5 + $0x75]]
        %v5418 = vstv %s5417
        %v5419 = vmul.f32 %v541, %v5418
        %v5420 = vmul.f32 %v542, %v5418
        %v5421 = vmul.f32 %v543, %v5418
        %v5422 = vmul.f32 %v544, %v5418
        %v5423 = vmul.f32 %v545, %v5418
        %v5424 = vmul.f32 %v546, %v5418
        %v5425 = vmul.f32 %v547, %v5418
        %v5426 = vmul.f32 %v548, %v5418
        %v5427 = vmul.f32 %v549, %v5418
        %v5428 = vmul.f32 %v550, %v5418
        %v5429 = vmul.f32 %v551, %v5418
        %v5430 = vmul.f32 %v552, %v5418
        %v5443 = vrot.slane %v5419, 4
        %v5444 = vrot.slane %v5421, 4
        %v5445 = vsel %vm248, %v5443, %v5444
        %v5446 = vrot.slane %v5420, 4
        %v5447 = vrot.slane %v5422, 4
        %v5448 = vsel %vm248, %v5446, %v5447
        %v5449 = vrot.slane %v5423, 4
        %v5450 = vsel %vm248, %v5444, %v5449
        %v5451 = vrot.slane %v5424, 4
        %v5452 = vsel %vm248, %v5447, %v5451
        %v5453 = vrot.slane %v5425, 4
        %v5454 = vsel %vm248, %v5449, %v5453
        %v5455 = vrot.slane %v5426, 4
        %v5456 = vsel %vm248, %v5451, %v5455
        %v5457 = vrot.slane %v5427, 4
        %v5458 = vsel %vm248, %v5453, %v5457
        %v5459 = vrot.slane %v5428, 4
        %v5460 = vsel %vm248, %v5455, %v5459
        %v5461 = vrot.slane %v5429, 4
        %v5462 = vsel %vm248, %v5457, %v5461
        %v5463 = vrot.slane %v5430, 4
        %v5464 = vsel %vm248, %v5459, %v5463
        %v5477 = vadd.f32 %v5405, %v5445
        %v5478 = vadd.f32 %v5406, %v5448
        %v5479 = vadd.f32 %v5407, %v5450
        %v5480 = vadd.f32 %v5408, %v5452
        %v5481 = vadd.f32 %v5409, %v5454
        %v5482 = vadd.f32 %v5410, %v5456
        %v5483 = vadd.f32 %v5411, %v5458
        %v5484 = vadd.f32 %v5412, %v5460
        %v5485 = vadd.f32 %v5413, %v5462
        %v5486 = vadd.f32 %v5414, %v5464
        %v5487 = vadd.f32 %v5415, %v5461
        %v5488 = vadd.f32 %v5416, %v5463
        %5501 = vrot.lane.b32.xlu0 %v5477, 114
        %v5502 = vpop.permute.xlu0 %5501
        %5503 = vrot.lane.b32.xlu0 %v5478, 114
        %v5504 = vpop.permute.xlu0 %5503
        %5505 = vrot.lane.b32.xlu0 %v5479, 114
        %v5506 = vpop.permute.xlu0 %5505
        %5507 = vrot.lane.b32.xlu0 %v5480, 114
        %v5508 = vpop.permute.xlu0 %5507
        %5509 = vrot.lane.b32.xlu0 %v5481, 114
        %v5510 = vpop.permute.xlu0 %5509
        %5511 = vrot.lane.b32.xlu0 %v5482, 114
        %v5512 = vpop.permute.xlu0 %5511
        %5513 = vrot.lane.b32.xlu0 %v5483, 114
        %v5514 = vpop.permute.xlu0 %5513
        %5515 = vrot.lane.b32.xlu0 %v5484, 114
        %v5516 = vpop.permute.xlu0 %5515
        %5517 = vrot.lane.b32.xlu0 %v5485, 114
        %v5518 = vpop.permute.xlu0 %5517
        %5519 = vrot.lane.b32.xlu0 %v5486, 114
        %v5520 = vpop.permute.xlu0 %5519
        %5521 = vrot.lane.b32.xlu0 %v5487, 114
        %v5522 = vpop.permute.xlu0 %5521
        %5523 = vrot.lane.b32.xlu0 %v5488, 114
        %v5524 = vpop.permute.xlu0 %5523
        %vm5525 = vcmask 932864
        %v5526 = vsel %vm5525, %v5502, %v5504
        %v5527 = vsel %vm5525, %v5506, %v5508
        %v5528 = vsel %vm5525, %v5510, %v5512
        %v5529 = vsel %vm5525, %v5514, %v5516
        %v5530 = vsel %vm5525, %v5518, %v5520
        %v5531 = vsel %vm5525, %v5522, %v5524
        %v5538 = vadd.f32 %v4825, %v5526
        %v5539 = vadd.f32 %v4826, %v5527
        %v5540 = vadd.f32 %v4827, %v5528
        %v5541 = vadd.f32 %v4828, %v5529
        %v5542 = vadd.f32 %v4829, %v5530
        %v5543 = vadd.f32 %v4830, %v5531
        %s5544 = sld [smem:[#allocation5 + $0x8]]
        %v5545 = vstv %s5544
        %v5546 = vmul.f32 %v537, %v5545
        %v5547 = vmul.f32 %v538, %v5545
        %v5548 = vmul.f32 %v539, %v5545
        %v5549 = vmul.f32 %v540, %v5545
        %v5550 = vmul.f32 %v541, %v5545
        %v5551 = vmul.f32 %v542, %v5545
        %v5552 = vmul.f32 %v543, %v5545
        %v5553 = vmul.f32 %v544, %v5545
        %v5554 = vmul.f32 %v545, %v5545
        %v5555 = vmul.f32 %v546, %v5545
        %v5556 = vmul.f32 %v547, %v5545
        %v5557 = vmul.f32 %v548, %v5545
        %s5558 = sld [smem:[#allocation5 + $0x13]]
        %v5559 = vstv %s5558
        %v5560 = vmul.f32 %v537, %v5559
        %v5561 = vmul.f32 %v538, %v5559
        %v5562 = vmul.f32 %v539, %v5559
        %v5563 = vmul.f32 %v540, %v5559
        %v5564 = vmul.f32 %v541, %v5559
        %v5565 = vmul.f32 %v542, %v5559
        %v5566 = vmul.f32 %v543, %v5559
        %v5567 = vmul.f32 %v544, %v5559
        %v5568 = vmul.f32 %v545, %v5559
        %v5569 = vmul.f32 %v546, %v5559
        %v5570 = vmul.f32 %v547, %v5559
        %v5571 = vmul.f32 %v548, %v5559
        %v5584 = vrot.slane %v5560, 2
        %v5585 = vrot.slane %v5562, 2
        %v5586 = vsel %vm210, %v5584, %v5585
        %v5587 = vrot.slane %v5561, 2
        %v5588 = vrot.slane %v5563, 2
        %v5589 = vsel %vm210, %v5587, %v5588
        %v5590 = vrot.slane %v5564, 2
        %v5591 = vsel %vm210, %v5585, %v5590
        %v5592 = vrot.slane %v5565, 2
        %v5593 = vsel %vm210, %v5588, %v5592
        %v5594 = vrot.slane %v5566, 2
        %v5595 = vsel %vm210, %v5590, %v5594
        %v5596 = vrot.slane %v5567, 2
        %v5597 = vsel %vm210, %v5592, %v5596
        %v5598 = vrot.slane %v5568, 2
        %v5599 = vsel %vm210, %v5594, %v5598
        %v5600 = vrot.slane %v5569, 2
        %v5601 = vsel %vm210, %v5596, %v5600
        %v5602 = vrot.slane %v5570, 2
        %v5603 = vsel %vm210, %v5598, %v5602
        %v5604 = vrot.slane %v5571, 2
        %v5605 = vsel %vm210, %v5600, %v5604
        %v5618 = vadd.f32 %v5546, %v5586
        %v5619 = vadd.f32 %v5547, %v5589
        %v5620 = vadd.f32 %v5548, %v5591
        %v5621 = vadd.f32 %v5549, %v5593
        %v5622 = vadd.f32 %v5550, %v5595
        %v5623 = vadd.f32 %v5551, %v5597
        %v5624 = vadd.f32 %v5552, %v5599
        %v5625 = vadd.f32 %v5553, %v5601
        %v5626 = vadd.f32 %v5554, %v5603
        %v5627 = vadd.f32 %v5555, %v5605
        %v5628 = vadd.f32 %v5556, %v5602
        %v5629 = vadd.f32 %v5557, %v5604
        %s5630 = sld [smem:[#allocation5 + $0x1e]]
        %v5631 = vstv %s5630
        %v5632 = vmul.f32 %v537, %v5631
        %v5633 = vmul.f32 %v538, %v5631
        %v5634 = vmul.f32 %v539, %v5631
        %v5635 = vmul.f32 %v540, %v5631
        %v5636 = vmul.f32 %v541, %v5631
        %v5637 = vmul.f32 %v542, %v5631
        %v5638 = vmul.f32 %v543, %v5631
        %v5639 = vmul.f32 %v544, %v5631
        %v5640 = vmul.f32 %v545, %v5631
        %v5641 = vmul.f32 %v546, %v5631
        %v5642 = vmul.f32 %v547, %v5631
        %v5643 = vmul.f32 %v548, %v5631
        %v5656 = vrot.slane %v5632, 4
        %v5657 = vrot.slane %v5634, 4
        %v5658 = vsel %vm248, %v5656, %v5657
        %v5659 = vrot.slane %v5633, 4
        %v5660 = vrot.slane %v5635, 4
        %v5661 = vsel %vm248, %v5659, %v5660
        %v5662 = vrot.slane %v5636, 4
        %v5663 = vsel %vm248, %v5657, %v5662
        %v5664 = vrot.slane %v5637, 4
        %v5665 = vsel %vm248, %v5660, %v5664
        %v5666 = vrot.slane %v5638, 4
        %v5667 = vsel %vm248, %v5662, %v5666
        %v5668 = vrot.slane %v5639, 4
        %v5669 = vsel %vm248, %v5664, %v5668
        %v5670 = vrot.slane %v5640, 4
        %v5671 = vsel %vm248, %v5666, %v5670
        %v5672 = vrot.slane %v5641, 4
        %v5673 = vsel %vm248, %v5668, %v5672
        %v5674 = vrot.slane %v5642, 4
        %v5675 = vsel %vm248, %v5670, %v5674
        %v5676 = vrot.slane %v5643, 4
        %v5677 = vsel %vm248, %v5672, %v5676
        %v5690 = vadd.f32 %v5618, %v5658
        %v5691 = vadd.f32 %v5619, %v5661
        %v5692 = vadd.f32 %v5620, %v5663
        %v5693 = vadd.f32 %v5621, %v5665
        %v5694 = vadd.f32 %v5622, %v5667
        %v5695 = vadd.f32 %v5623, %v5669
        %v5696 = vadd.f32 %v5624, %v5671
        %v5697 = vadd.f32 %v5625, %v5673
        %v5698 = vadd.f32 %v5626, %v5675
        %v5699 = vadd.f32 %v5627, %v5677
        %v5700 = vadd.f32 %v5628, %v5674
        %v5701 = vadd.f32 %v5629, %v5676
        %s5702 = sld [smem:[#allocation5 + $0x29]]
        %v5703 = vstv %s5702
        %v5704 = vmul.f32 %v537, %v5703
        %v5705 = vmul.f32 %v538, %v5703
        %v5706 = vmul.f32 %v539, %v5703
        %v5707 = vmul.f32 %v540, %v5703
        %v5708 = vmul.f32 %v541, %v5703
        %v5709 = vmul.f32 %v542, %v5703
        %v5710 = vmul.f32 %v543, %v5703
        %v5711 = vmul.f32 %v544, %v5703
        %v5712 = vmul.f32 %v545, %v5703
        %v5713 = vmul.f32 %v546, %v5703
        %v5714 = vmul.f32 %v547, %v5703
        %v5715 = vmul.f32 %v548, %v5703
        %v5716 = vmul.f32 %v549, %v5703
        %v5717 = vmul.f32 %v550, %v5703
        %v5732 = vrot.slane %v5704, 6
        %v5733 = vrot.slane %v5706, 6
        %v5734 = vsel %vm288, %v5732, %v5733
        %v5735 = vrot.slane %v5705, 6
        %v5736 = vrot.slane %v5707, 6
        %v5737 = vsel %vm288, %v5735, %v5736
        %v5738 = vrot.slane %v5708, 6
        %v5739 = vsel %vm288, %v5733, %v5738
        %v5740 = vrot.slane %v5709, 6
        %v5741 = vsel %vm288, %v5736, %v5740
        %v5742 = vrot.slane %v5710, 6
        %v5743 = vsel %vm288, %v5738, %v5742
        %v5744 = vrot.slane %v5711, 6
        %v5745 = vsel %vm288, %v5740, %v5744
        %v5746 = vrot.slane %v5712, 6
        %v5747 = vsel %vm288, %v5742, %v5746
        %v5748 = vrot.slane %v5713, 6
        %v5749 = vsel %vm288, %v5744, %v5748
        %v5750 = vrot.slane %v5714, 6
        %v5751 = vsel %vm288, %v5746, %v5750
        %v5752 = vrot.slane %v5715, 6
        %v5753 = vsel %vm288, %v5748, %v5752
        %v5754 = vrot.slane %v5716, 6
        %v5755 = vsel %vm288, %v5750, %v5754
        %v5756 = vrot.slane %v5717, 6
        %v5757 = vsel %vm288, %v5752, %v5756
        %v5770 = vadd.f32 %v5690, %v5734
        %v5771 = vadd.f32 %v5691, %v5737
        %v5772 = vadd.f32 %v5692, %v5739
        %v5773 = vadd.f32 %v5693, %v5741
        %v5774 = vadd.f32 %v5694, %v5743
        %v5775 = vadd.f32 %v5695, %v5745
        %v5776 = vadd.f32 %v5696, %v5747
        %v5777 = vadd.f32 %v5697, %v5749
        %v5778 = vadd.f32 %v5698, %v5751
        %v5779 = vadd.f32 %v5699, %v5753
        %v5780 = vadd.f32 %v5700, %v5755
        %v5781 = vadd.f32 %v5701, %v5757
        %s5782 = sld [smem:[#allocation5 + $0x34]]
        %v5783 = vstv %s5782
        %v5784 = vmul.f32 %v539, %v5783
        %v5785 = vmul.f32 %v540, %v5783
        %v5786 = vmul.f32 %v541, %v5783
        %v5787 = vmul.f32 %v542, %v5783
        %v5788 = vmul.f32 %v543, %v5783
        %v5789 = vmul.f32 %v544, %v5783
        %v5790 = vmul.f32 %v545, %v5783
        %v5791 = vmul.f32 %v546, %v5783
        %v5792 = vmul.f32 %v547, %v5783
        %v5793 = vmul.f32 %v548, %v5783
        %v5794 = vmul.f32 %v549, %v5783
        %v5795 = vmul.f32 %v550, %v5783
        %v5796 = vadd.f32 %v5770, %v5784
        %v5797 = vadd.f32 %v5771, %v5785
        %v5798 = vadd.f32 %v5772, %v5786
        %v5799 = vadd.f32 %v5773, %v5787
        %v5800 = vadd.f32 %v5774, %v5788
        %v5801 = vadd.f32 %v5775, %v5789
        %v5802 = vadd.f32 %v5776, %v5790
        %v5803 = vadd.f32 %v5777, %v5791
        %v5804 = vadd.f32 %v5778, %v5792
        %v5805 = vadd.f32 %v5779, %v5793
        %v5806 = vadd.f32 %v5780, %v5794
        %v5807 = vadd.f32 %v5781, %v5795
        %s5808 = sld [smem:[#allocation5 + $0x3f]]
        %v5809 = vstv %s5808
        %v5810 = vmul.f32 %v539, %v5809
        %v5811 = vmul.f32 %v540, %v5809
        %v5812 = vmul.f32 %v541, %v5809
        %v5813 = vmul.f32 %v542, %v5809
        %v5814 = vmul.f32 %v543, %v5809
        %v5815 = vmul.f32 %v544, %v5809
        %v5816 = vmul.f32 %v545, %v5809
        %v5817 = vmul.f32 %v546, %v5809
        %v5818 = vmul.f32 %v547, %v5809
        %v5819 = vmul.f32 %v548, %v5809
        %v5820 = vmul.f32 %v549, %v5809
        %v5821 = vmul.f32 %v550, %v5809
        %v5834 = vrot.slane %v5810, 2
        %v5835 = vrot.slane %v5812, 2
        %v5836 = vsel %vm210, %v5834, %v5835
        %v5837 = vrot.slane %v5811, 2
        %v5838 = vrot.slane %v5813, 2
        %v5839 = vsel %vm210, %v5837, %v5838
        %v5840 = vrot.slane %v5814, 2
        %v5841 = vsel %vm210, %v5835, %v5840
        %v5842 = vrot.slane %v5815, 2
        %v5843 = vsel %vm210, %v5838, %v5842
        %v5844 = vrot.slane %v5816, 2
        %v5845 = vsel %vm210, %v5840, %v5844
        %v5846 = vrot.slane %v5817, 2
        %v5847 = vsel %vm210, %v5842, %v5846
        %v5848 = vrot.slane %v5818, 2
        %v5849 = vsel %vm210, %v5844, %v5848
        %v5850 = vrot.slane %v5819, 2
        %v5851 = vsel %vm210, %v5846, %v5850
        %v5852 = vrot.slane %v5820, 2
        %v5853 = vsel %vm210, %v5848, %v5852
        %v5854 = vrot.slane %v5821, 2
        %v5855 = vsel %vm210, %v5850, %v5854
        %v5868 = vadd.f32 %v5796, %v5836
        %v5869 = vadd.f32 %v5797, %v5839
        %v5870 = vadd.f32 %v5798, %v5841
        %v5871 = vadd.f32 %v5799, %v5843
        %v5872 = vadd.f32 %v5800, %v5845
        %v5873 = vadd.f32 %v5801, %v5847
        %v5874 = vadd.f32 %v5802, %v5849
        %v5875 = vadd.f32 %v5803, %v5851
        %v5876 = vadd.f32 %v5804, %v5853
        %v5877 = vadd.f32 %v5805, %v5855
        %v5878 = vadd.f32 %v5806, %v5852
        %v5879 = vadd.f32 %v5807, %v5854
        %s5880 = sld [smem:[#allocation5 + $0x4a]]
        %v5881 = vstv %s5880
        %v5882 = vmul.f32 %v539, %v5881
        %v5883 = vmul.f32 %v540, %v5881
        %v5884 = vmul.f32 %v541, %v5881
        %v5885 = vmul.f32 %v542, %v5881
        %v5886 = vmul.f32 %v543, %v5881
        %v5887 = vmul.f32 %v544, %v5881
        %v5888 = vmul.f32 %v545, %v5881
        %v5889 = vmul.f32 %v546, %v5881
        %v5890 = vmul.f32 %v547, %v5881
        %v5891 = vmul.f32 %v548, %v5881
        %v5892 = vmul.f32 %v549, %v5881
        %v5893 = vmul.f32 %v550, %v5881
        %v5906 = vrot.slane %v5882, 4
        %v5907 = vrot.slane %v5884, 4
        %v5908 = vsel %vm248, %v5906, %v5907
        %v5909 = vrot.slane %v5883, 4
        %v5910 = vrot.slane %v5885, 4
        %v5911 = vsel %vm248, %v5909, %v5910
        %v5912 = vrot.slane %v5886, 4
        %v5913 = vsel %vm248, %v5907, %v5912
        %v5914 = vrot.slane %v5887, 4
        %v5915 = vsel %vm248, %v5910, %v5914
        %v5916 = vrot.slane %v5888, 4
        %v5917 = vsel %vm248, %v5912, %v5916
        %v5918 = vrot.slane %v5889, 4
        %v5919 = vsel %vm248, %v5914, %v5918
        %v5920 = vrot.slane %v5890, 4
        %v5921 = vsel %vm248, %v5916, %v5920
        %v5922 = vrot.slane %v5891, 4
        %v5923 = vsel %vm248, %v5918, %v5922
        %v5924 = vrot.slane %v5892, 4
        %v5925 = vsel %vm248, %v5920, %v5924
        %v5926 = vrot.slane %v5893, 4
        %v5927 = vsel %vm248, %v5922, %v5926
        %v5940 = vadd.f32 %v5868, %v5908
        %v5941 = vadd.f32 %v5869, %v5911
        %v5942 = vadd.f32 %v5870, %v5913
        %v5943 = vadd.f32 %v5871, %v5915
        %v5944 = vadd.f32 %v5872, %v5917
        %v5945 = vadd.f32 %v5873, %v5919
        %v5946 = vadd.f32 %v5874, %v5921
        %v5947 = vadd.f32 %v5875, %v5923
        %v5948 = vadd.f32 %v5876, %v5925
        %v5949 = vadd.f32 %v5877, %v5927
        %v5950 = vadd.f32 %v5878, %v5924
        %v5951 = vadd.f32 %v5879, %v5926
        %s5952 = sld [smem:[#allocation5 + $0x55]]
        %v5953 = vstv %s5952
        %v5954 = vmul.f32 %v539, %v5953
        %v5955 = vmul.f32 %v540, %v5953
        %v5956 = vmul.f32 %v541, %v5953
        %v5957 = vmul.f32 %v542, %v5953
        %v5958 = vmul.f32 %v543, %v5953
        %v5959 = vmul.f32 %v544, %v5953
        %v5960 = vmul.f32 %v545, %v5953
        %v5961 = vmul.f32 %v546, %v5953
        %v5962 = vmul.f32 %v547, %v5953
        %v5963 = vmul.f32 %v548, %v5953
        %v5964 = vmul.f32 %v549, %v5953
        %v5965 = vmul.f32 %v550, %v5953
        %v5966 = vmul.f32 %v551, %v5953
        %v5967 = vmul.f32 %v552, %v5953
        %v5982 = vrot.slane %v5954, 6
        %v5983 = vrot.slane %v5956, 6
        %v5984 = vsel %vm288, %v5982, %v5983
        %v5985 = vrot.slane %v5955, 6
        %v5986 = vrot.slane %v5957, 6
        %v5987 = vsel %vm288, %v5985, %v5986
        %v5988 = vrot.slane %v5958, 6
        %v5989 = vsel %vm288, %v5983, %v5988
        %v5990 = vrot.slane %v5959, 6
        %v5991 = vsel %vm288, %v5986, %v5990
        %v5992 = vrot.slane %v5960, 6
        %v5993 = vsel %vm288, %v5988, %v5992
        %v5994 = vrot.slane %v5961, 6
        %v5995 = vsel %vm288, %v5990, %v5994
        %v5996 = vrot.slane %v5962, 6
        %v5997 = vsel %vm288, %v5992, %v5996
        %v5998 = vrot.slane %v5963, 6
        %v5999 = vsel %vm288, %v5994, %v5998
        %v6000 = vrot.slane %v5964, 6
        %v6001 = vsel %vm288, %v5996, %v6000
        %v6002 = vrot.slane %v5965, 6
        %v6003 = vsel %vm288, %v5998, %v6002
        %v6004 = vrot.slane %v5966, 6
        %v6005 = vsel %vm288, %v6000, %v6004
        %v6006 = vrot.slane %v5967, 6
        %v6007 = vsel %vm288, %v6002, %v6006
        %v6020 = vadd.f32 %v5940, %v5984
        %v6021 = vadd.f32 %v5941, %v5987
        %v6022 = vadd.f32 %v5942, %v5989
        %v6023 = vadd.f32 %v5943, %v5991
        %v6024 = vadd.f32 %v5944, %v5993
        %v6025 = vadd.f32 %v5945, %v5995
        %v6026 = vadd.f32 %v5946, %v5997
        %v6027 = vadd.f32 %v5947, %v5999
        %v6028 = vadd.f32 %v5948, %v6001
        %v6029 = vadd.f32 %v5949, %v6003
        %v6030 = vadd.f32 %v5950, %v6005
        %v6031 = vadd.f32 %v5951, %v6007
        %s6032 = sld [smem:[#allocation5 + $0x60]]
        %v6033 = vstv %s6032
        %v6034 = vmul.f32 %v541, %v6033
        %v6035 = vmul.f32 %v542, %v6033
        %v6036 = vmul.f32 %v543, %v6033
        %v6037 = vmul.f32 %v544, %v6033
        %v6038 = vmul.f32 %v545, %v6033
        %v6039 = vmul.f32 %v546, %v6033
        %v6040 = vmul.f32 %v547, %v6033
        %v6041 = vmul.f32 %v548, %v6033
        %v6042 = vmul.f32 %v549, %v6033
        %v6043 = vmul.f32 %v550, %v6033
        %v6044 = vmul.f32 %v551, %v6033
        %v6045 = vmul.f32 %v552, %v6033
        %v6046 = vadd.f32 %v6020, %v6034
        %v6047 = vadd.f32 %v6021, %v6035
        %v6048 = vadd.f32 %v6022, %v6036
        %v6049 = vadd.f32 %v6023, %v6037
        %v6050 = vadd.f32 %v6024, %v6038
        %v6051 = vadd.f32 %v6025, %v6039
        %v6052 = vadd.f32 %v6026, %v6040
        %v6053 = vadd.f32 %v6027, %v6041
        %v6054 = vadd.f32 %v6028, %v6042
        %v6055 = vadd.f32 %v6029, %v6043
        %v6056 = vadd.f32 %v6030, %v6044
        %v6057 = vadd.f32 %v6031, %v6045
        %s6058 = sld [smem:[#allocation5 + $0x6b]]
        %v6059 = vstv %s6058
        %v6060 = vmul.f32 %v541, %v6059
        %v6061 = vmul.f32 %v542, %v6059
        %v6062 = vmul.f32 %v543, %v6059
        %v6063 = vmul.f32 %v544, %v6059
        %v6064 = vmul.f32 %v545, %v6059
        %v6065 = vmul.f32 %v546, %v6059
        %v6066 = vmul.f32 %v547, %v6059
        %v6067 = vmul.f32 %v548, %v6059
        %v6068 = vmul.f32 %v549, %v6059
        %v6069 = vmul.f32 %v550, %v6059
        %v6070 = vmul.f32 %v551, %v6059
        %v6071 = vmul.f32 %v552, %v6059
        %v6084 = vrot.slane %v6060, 2
        %v6085 = vrot.slane %v6062, 2
        %v6086 = vsel %vm210, %v6084, %v6085
        %v6087 = vrot.slane %v6061, 2
        %v6088 = vrot.slane %v6063, 2
        %v6089 = vsel %vm210, %v6087, %v6088
        %v6090 = vrot.slane %v6064, 2
        %v6091 = vsel %vm210, %v6085, %v6090
        %v6092 = vrot.slane %v6065, 2
        %v6093 = vsel %vm210, %v6088, %v6092
        %v6094 = vrot.slane %v6066, 2
        %v6095 = vsel %vm210, %v6090, %v6094
        %v6096 = vrot.slane %v6067, 2
        %v6097 = vsel %vm210, %v6092, %v6096
        %v6098 = vrot.slane %v6068, 2
        %v6099 = vsel %vm210, %v6094, %v6098
        %v6100 = vrot.slane %v6069, 2
        %v6101 = vsel %vm210, %v6096, %v6100
        %v6102 = vrot.slane %v6070, 2
        %v6103 = vsel %vm210, %v6098, %v6102
        %v6104 = vrot.slane %v6071, 2
        %v6105 = vsel %vm210, %v6100, %v6104
        %v6118 = vadd.f32 %v6046, %v6086
        %v6119 = vadd.f32 %v6047, %v6089
        %v6120 = vadd.f32 %v6048, %v6091
        %v6121 = vadd.f32 %v6049, %v6093
        %v6122 = vadd.f32 %v6050, %v6095
        %v6123 = vadd.f32 %v6051, %v6097
        %v6124 = vadd.f32 %v6052, %v6099
        %v6125 = vadd.f32 %v6053, %v6101
        %v6126 = vadd.f32 %v6054, %v6103
        %v6127 = vadd.f32 %v6055, %v6105
        %v6128 = vadd.f32 %v6056, %v6102
        %v6129 = vadd.f32 %v6057, %v6104
        %s6130 = sld [smem:[#allocation5 + $0x76]]
        %v6131 = vstv %s6130
        %v6132 = vmul.f32 %v541, %v6131
        %v6133 = vmul.f32 %v542, %v6131
        %v6134 = vmul.f32 %v543, %v6131
        %v6135 = vmul.f32 %v544, %v6131
        %v6136 = vmul.f32 %v545, %v6131
        %v6137 = vmul.f32 %v546, %v6131
        %v6138 = vmul.f32 %v547, %v6131
        %v6139 = vmul.f32 %v548, %v6131
        %v6140 = vmul.f32 %v549, %v6131
        %v6141 = vmul.f32 %v550, %v6131
        %v6142 = vmul.f32 %v551, %v6131
        %v6143 = vmul.f32 %v552, %v6131
        %v6156 = vrot.slane %v6132, 4
        %v6157 = vrot.slane %v6134, 4
        %v6158 = vsel %vm248, %v6156, %v6157
        %v6159 = vrot.slane %v6133, 4
        %v6160 = vrot.slane %v6135, 4
        %v6161 = vsel %vm248, %v6159, %v6160
        %v6162 = vrot.slane %v6136, 4
        %v6163 = vsel %vm248, %v6157, %v6162
        %v6164 = vrot.slane %v6137, 4
        %v6165 = vsel %vm248, %v6160, %v6164
        %v6166 = vrot.slane %v6138, 4
        %v6167 = vsel %vm248, %v6162, %v6166
        %v6168 = vrot.slane %v6139, 4
        %v6169 = vsel %vm248, %v6164, %v6168
        %v6170 = vrot.slane %v6140, 4
        %v6171 = vsel %vm248, %v6166, %v6170
        %v6172 = vrot.slane %v6141, 4
        %v6173 = vsel %vm248, %v6168, %v6172
        %v6174 = vrot.slane %v6142, 4
        %v6175 = vsel %vm248, %v6170, %v6174
        %v6176 = vrot.slane %v6143, 4
        %v6177 = vsel %vm248, %v6172, %v6176
        %v6190 = vadd.f32 %v6118, %v6158
        %v6191 = vadd.f32 %v6119, %v6161
        %v6192 = vadd.f32 %v6120, %v6163
        %v6193 = vadd.f32 %v6121, %v6165
        %v6194 = vadd.f32 %v6122, %v6167
        %v6195 = vadd.f32 %v6123, %v6169
        %v6196 = vadd.f32 %v6124, %v6171
        %v6197 = vadd.f32 %v6125, %v6173
        %v6198 = vadd.f32 %v6126, %v6175
        %v6199 = vadd.f32 %v6127, %v6177
        %v6200 = vadd.f32 %v6128, %v6174
        %v6201 = vadd.f32 %v6129, %v6176
        %6214 = vrot.lane.b32.xlu0 %v6190, 112
        %v6215 = vpop.permute.xlu0 %6214
        %6216 = vrot.lane.b32.xlu0 %v6191, 112
        %v6217 = vpop.permute.xlu0 %6216
        %6218 = vrot.lane.b32.xlu0 %v6192, 112
        %v6219 = vpop.permute.xlu0 %6218
        %6220 = vrot.lane.b32.xlu0 %v6193, 112
        %v6221 = vpop.permute.xlu0 %6220
        %6222 = vrot.lane.b32.xlu0 %v6194, 112
        %v6223 = vpop.permute.xlu0 %6222
        %6224 = vrot.lane.b32.xlu0 %v6195, 112
        %v6225 = vpop.permute.xlu0 %6224
        %6226 = vrot.lane.b32.xlu0 %v6196, 112
        %v6227 = vpop.permute.xlu0 %6226
        %6228 = vrot.lane.b32.xlu0 %v6197, 112
        %v6229 = vpop.permute.xlu0 %6228
        %6230 = vrot.lane.b32.xlu0 %v6198, 112
        %v6231 = vpop.permute.xlu0 %6230
        %6232 = vrot.lane.b32.xlu0 %v6199, 112
        %v6233 = vpop.permute.xlu0 %6232
        %6234 = vrot.lane.b32.xlu0 %v6200, 112
        %v6235 = vpop.permute.xlu0 %6234
        %6236 = vrot.lane.b32.xlu0 %v6201, 112
        %v6237 = vpop.permute.xlu0 %6236
        %vm6238 = vcmask 916480
        %v6239 = vsel %vm6238, %v6215, %v6217
        %v6240 = vsel %vm6238, %v6219, %v6221
        %v6241 = vsel %vm6238, %v6223, %v6225
        %v6242 = vsel %vm6238, %v6227, %v6229
        %v6243 = vsel %vm6238, %v6231, %v6233
        %v6244 = vsel %vm6238, %v6235, %v6237
        %v6251 = vadd.f32 %v5538, %v6239
        %v6252 = vadd.f32 %v5539, %v6240
        %v6253 = vadd.f32 %v5540, %v6241
        %v6254 = vadd.f32 %v5541, %v6242
        %v6255 = vadd.f32 %v5542, %v6243
        %v6256 = vadd.f32 %v5543, %v6244
        %s6257 = sld [smem:[#allocation5 + $0x9]]
        %v6258 = vstv %s6257
        %v6259 = vmul.f32 %v537, %v6258
        %v6260 = vmul.f32 %v538, %v6258
        %v6261 = vmul.f32 %v539, %v6258
        %v6262 = vmul.f32 %v540, %v6258
        %v6263 = vmul.f32 %v541, %v6258
        %v6264 = vmul.f32 %v542, %v6258
        %v6265 = vmul.f32 %v543, %v6258
        %v6266 = vmul.f32 %v544, %v6258
        %v6267 = vmul.f32 %v545, %v6258
        %v6268 = vmul.f32 %v546, %v6258
        %v6269 = vmul.f32 %v547, %v6258
        %v6270 = vmul.f32 %v548, %v6258
        %s6271 = sld [smem:[#allocation5 + $0x14]]
        %v6272 = vstv %s6271
        %v6273 = vmul.f32 %v537, %v6272
        %v6274 = vmul.f32 %v538, %v6272
        %v6275 = vmul.f32 %v539, %v6272
        %v6276 = vmul.f32 %v540, %v6272
        %v6277 = vmul.f32 %v541, %v6272
        %v6278 = vmul.f32 %v542, %v6272
        %v6279 = vmul.f32 %v543, %v6272
        %v6280 = vmul.f32 %v544, %v6272
        %v6281 = vmul.f32 %v545, %v6272
        %v6282 = vmul.f32 %v546, %v6272
        %v6283 = vmul.f32 %v547, %v6272
        %v6284 = vmul.f32 %v548, %v6272
        %v6297 = vrot.slane %v6273, 2
        %v6298 = vrot.slane %v6275, 2
        %v6299 = vsel %vm210, %v6297, %v6298
        %v6300 = vrot.slane %v6274, 2
        %v6301 = vrot.slane %v6276, 2
        %v6302 = vsel %vm210, %v6300, %v6301
        %v6303 = vrot.slane %v6277, 2
        %v6304 = vsel %vm210, %v6298, %v6303
        %v6305 = vrot.slane %v6278, 2
        %v6306 = vsel %vm210, %v6301, %v6305
        %v6307 = vrot.slane %v6279, 2
        %v6308 = vsel %vm210, %v6303, %v6307
        %v6309 = vrot.slane %v6280, 2
        %v6310 = vsel %vm210, %v6305, %v6309
        %v6311 = vrot.slane %v6281, 2
        %v6312 = vsel %vm210, %v6307, %v6311
        %v6313 = vrot.slane %v6282, 2
        %v6314 = vsel %vm210, %v6309, %v6313
        %v6315 = vrot.slane %v6283, 2
        %v6316 = vsel %vm210, %v6311, %v6315
        %v6317 = vrot.slane %v6284, 2
        %v6318 = vsel %vm210, %v6313, %v6317
        %v6331 = vadd.f32 %v6259, %v6299
        %v6332 = vadd.f32 %v6260, %v6302
        %v6333 = vadd.f32 %v6261, %v6304
        %v6334 = vadd.f32 %v6262, %v6306
        %v6335 = vadd.f32 %v6263, %v6308
        %v6336 = vadd.f32 %v6264, %v6310
        %v6337 = vadd.f32 %v6265, %v6312
        %v6338 = vadd.f32 %v6266, %v6314
        %v6339 = vadd.f32 %v6267, %v6316
        %v6340 = vadd.f32 %v6268, %v6318
        %v6341 = vadd.f32 %v6269, %v6315
        %v6342 = vadd.f32 %v6270, %v6317
        %s6343 = sld [smem:[#allocation5 + $0x1f]]
        %v6344 = vstv %s6343
        %v6345 = vmul.f32 %v537, %v6344
        %v6346 = vmul.f32 %v538, %v6344
        %v6347 = vmul.f32 %v539, %v6344
        %v6348 = vmul.f32 %v540, %v6344
        %v6349 = vmul.f32 %v541, %v6344
        %v6350 = vmul.f32 %v542, %v6344
        %v6351 = vmul.f32 %v543, %v6344
        %v6352 = vmul.f32 %v544, %v6344
        %v6353 = vmul.f32 %v545, %v6344
        %v6354 = vmul.f32 %v546, %v6344
        %v6355 = vmul.f32 %v547, %v6344
        %v6356 = vmul.f32 %v548, %v6344
        %v6369 = vrot.slane %v6345, 4
        %v6370 = vrot.slane %v6347, 4
        %v6371 = vsel %vm248, %v6369, %v6370
        %v6372 = vrot.slane %v6346, 4
        %v6373 = vrot.slane %v6348, 4
        %v6374 = vsel %vm248, %v6372, %v6373
        %v6375 = vrot.slane %v6349, 4
        %v6376 = vsel %vm248, %v6370, %v6375
        %v6377 = vrot.slane %v6350, 4
        %v6378 = vsel %vm248, %v6373, %v6377
        %v6379 = vrot.slane %v6351, 4
        %v6380 = vsel %vm248, %v6375, %v6379
        %v6381 = vrot.slane %v6352, 4
        %v6382 = vsel %vm248, %v6377, %v6381
        %v6383 = vrot.slane %v6353, 4
        %v6384 = vsel %vm248, %v6379, %v6383
        %v6385 = vrot.slane %v6354, 4
        %v6386 = vsel %vm248, %v6381, %v6385
        %v6387 = vrot.slane %v6355, 4
        %v6388 = vsel %vm248, %v6383, %v6387
        %v6389 = vrot.slane %v6356, 4
        %v6390 = vsel %vm248, %v6385, %v6389
        %v6403 = vadd.f32 %v6331, %v6371
        %v6404 = vadd.f32 %v6332, %v6374
        %v6405 = vadd.f32 %v6333, %v6376
        %v6406 = vadd.f32 %v6334, %v6378
        %v6407 = vadd.f32 %v6335, %v6380
        %v6408 = vadd.f32 %v6336, %v6382
        %v6409 = vadd.f32 %v6337, %v6384
        %v6410 = vadd.f32 %v6338, %v6386
        %v6411 = vadd.f32 %v6339, %v6388
        %v6412 = vadd.f32 %v6340, %v6390
        %v6413 = vadd.f32 %v6341, %v6387
        %v6414 = vadd.f32 %v6342, %v6389
        %s6415 = sld [smem:[#allocation5 + $0x2a]]
        %v6416 = vstv %s6415
        %v6417 = vmul.f32 %v537, %v6416
        %v6418 = vmul.f32 %v538, %v6416
        %v6419 = vmul.f32 %v539, %v6416
        %v6420 = vmul.f32 %v540, %v6416
        %v6421 = vmul.f32 %v541, %v6416
        %v6422 = vmul.f32 %v542, %v6416
        %v6423 = vmul.f32 %v543, %v6416
        %v6424 = vmul.f32 %v544, %v6416
        %v6425 = vmul.f32 %v545, %v6416
        %v6426 = vmul.f32 %v546, %v6416
        %v6427 = vmul.f32 %v547, %v6416
        %v6428 = vmul.f32 %v548, %v6416
        %v6429 = vmul.f32 %v549, %v6416
        %v6430 = vmul.f32 %v550, %v6416
        %v6445 = vrot.slane %v6417, 6
        %v6446 = vrot.slane %v6419, 6
        %v6447 = vsel %vm288, %v6445, %v6446
        %v6448 = vrot.slane %v6418, 6
        %v6449 = vrot.slane %v6420, 6
        %v6450 = vsel %vm288, %v6448, %v6449
        %v6451 = vrot.slane %v6421, 6
        %v6452 = vsel %vm288, %v6446, %v6451
        %v6453 = vrot.slane %v6422, 6
        %v6454 = vsel %vm288, %v6449, %v6453
        %v6455 = vrot.slane %v6423, 6
        %v6456 = vsel %vm288, %v6451, %v6455
        %v6457 = vrot.slane %v6424, 6
        %v6458 = vsel %vm288, %v6453, %v6457
        %v6459 = vrot.slane %v6425, 6
        %v6460 = vsel %vm288, %v6455, %v6459
        %v6461 = vrot.slane %v6426, 6
        %v6462 = vsel %vm288, %v6457, %v6461
        %v6463 = vrot.slane %v6427, 6
        %v6464 = vsel %vm288, %v6459, %v6463
        %v6465 = vrot.slane %v6428, 6
        %v6466 = vsel %vm288, %v6461, %v6465
        %v6467 = vrot.slane %v6429, 6
        %v6468 = vsel %vm288, %v6463, %v6467
        %v6469 = vrot.slane %v6430, 6
        %v6470 = vsel %vm288, %v6465, %v6469
        %v6483 = vadd.f32 %v6403, %v6447
        %v6484 = vadd.f32 %v6404, %v6450
        %v6485 = vadd.f32 %v6405, %v6452
        %v6486 = vadd.f32 %v6406, %v6454
        %v6487 = vadd.f32 %v6407, %v6456
        %v6488 = vadd.f32 %v6408, %v6458
        %v6489 = vadd.f32 %v6409, %v6460
        %v6490 = vadd.f32 %v6410, %v6462
        %v6491 = vadd.f32 %v6411, %v6464
        %v6492 = vadd.f32 %v6412, %v6466
        %v6493 = vadd.f32 %v6413, %v6468
        %v6494 = vadd.f32 %v6414, %v6470
        %s6495 = sld [smem:[#allocation5 + $0x35]]
        %v6496 = vstv %s6495
        %v6497 = vmul.f32 %v539, %v6496
        %v6498 = vmul.f32 %v540, %v6496
        %v6499 = vmul.f32 %v541, %v6496
        %v6500 = vmul.f32 %v542, %v6496
        %v6501 = vmul.f32 %v543, %v6496
        %v6502 = vmul.f32 %v544, %v6496
        %v6503 = vmul.f32 %v545, %v6496
        %v6504 = vmul.f32 %v546, %v6496
        %v6505 = vmul.f32 %v547, %v6496
        %v6506 = vmul.f32 %v548, %v6496
        %v6507 = vmul.f32 %v549, %v6496
        %v6508 = vmul.f32 %v550, %v6496
        %v6509 = vadd.f32 %v6483, %v6497
        %v6510 = vadd.f32 %v6484, %v6498
        %v6511 = vadd.f32 %v6485, %v6499
        %v6512 = vadd.f32 %v6486, %v6500
        %v6513 = vadd.f32 %v6487, %v6501
        %v6514 = vadd.f32 %v6488, %v6502
        %v6515 = vadd.f32 %v6489, %v6503
        %v6516 = vadd.f32 %v6490, %v6504
        %v6517 = vadd.f32 %v6491, %v6505
        %v6518 = vadd.f32 %v6492, %v6506
        %v6519 = vadd.f32 %v6493, %v6507
        %v6520 = vadd.f32 %v6494, %v6508
        %s6521 = sld [smem:[#allocation5 + $0x40]]
        %v6522 = vstv %s6521
        %v6523 = vmul.f32 %v539, %v6522
        %v6524 = vmul.f32 %v540, %v6522
        %v6525 = vmul.f32 %v541, %v6522
        %v6526 = vmul.f32 %v542, %v6522
        %v6527 = vmul.f32 %v543, %v6522
        %v6528 = vmul.f32 %v544, %v6522
        %v6529 = vmul.f32 %v545, %v6522
        %v6530 = vmul.f32 %v546, %v6522
        %v6531 = vmul.f32 %v547, %v6522
        %v6532 = vmul.f32 %v548, %v6522
        %v6533 = vmul.f32 %v549, %v6522
        %v6534 = vmul.f32 %v550, %v6522
        %v6547 = vrot.slane %v6523, 2
        %v6548 = vrot.slane %v6525, 2
        %v6549 = vsel %vm210, %v6547, %v6548
        %v6550 = vrot.slane %v6524, 2
        %v6551 = vrot.slane %v6526, 2
        %v6552 = vsel %vm210, %v6550, %v6551
        %v6553 = vrot.slane %v6527, 2
        %v6554 = vsel %vm210, %v6548, %v6553
        %v6555 = vrot.slane %v6528, 2
        %v6556 = vsel %vm210, %v6551, %v6555
        %v6557 = vrot.slane %v6529, 2
        %v6558 = vsel %vm210, %v6553, %v6557
        %v6559 = vrot.slane %v6530, 2
        %v6560 = vsel %vm210, %v6555, %v6559
        %v6561 = vrot.slane %v6531, 2
        %v6562 = vsel %vm210, %v6557, %v6561
        %v6563 = vrot.slane %v6532, 2
        %v6564 = vsel %vm210, %v6559, %v6563
        %v6565 = vrot.slane %v6533, 2
        %v6566 = vsel %vm210, %v6561, %v6565
        %v6567 = vrot.slane %v6534, 2
        %v6568 = vsel %vm210, %v6563, %v6567
        %v6581 = vadd.f32 %v6509, %v6549
        %v6582 = vadd.f32 %v6510, %v6552
        %v6583 = vadd.f32 %v6511, %v6554
        %v6584 = vadd.f32 %v6512, %v6556
        %v6585 = vadd.f32 %v6513, %v6558
        %v6586 = vadd.f32 %v6514, %v6560
        %v6587 = vadd.f32 %v6515, %v6562
        %v6588 = vadd.f32 %v6516, %v6564
        %v6589 = vadd.f32 %v6517, %v6566
        %v6590 = vadd.f32 %v6518, %v6568
        %v6591 = vadd.f32 %v6519, %v6565
        %v6592 = vadd.f32 %v6520, %v6567
        %s6593 = sld [smem:[#allocation5 + $0x4b]]
        %v6594 = vstv %s6593
        %v6595 = vmul.f32 %v539, %v6594
        %v6596 = vmul.f32 %v540, %v6594
        %v6597 = vmul.f32 %v541, %v6594
        %v6598 = vmul.f32 %v542, %v6594
        %v6599 = vmul.f32 %v543, %v6594
        %v6600 = vmul.f32 %v544, %v6594
        %v6601 = vmul.f32 %v545, %v6594
        %v6602 = vmul.f32 %v546, %v6594
        %v6603 = vmul.f32 %v547, %v6594
        %v6604 = vmul.f32 %v548, %v6594
        %v6605 = vmul.f32 %v549, %v6594
        %v6606 = vmul.f32 %v550, %v6594
        %v6619 = vrot.slane %v6595, 4
        %v6620 = vrot.slane %v6597, 4
        %v6621 = vsel %vm248, %v6619, %v6620
        %v6622 = vrot.slane %v6596, 4
        %v6623 = vrot.slane %v6598, 4
        %v6624 = vsel %vm248, %v6622, %v6623
        %v6625 = vrot.slane %v6599, 4
        %v6626 = vsel %vm248, %v6620, %v6625
        %v6627 = vrot.slane %v6600, 4
        %v6628 = vsel %vm248, %v6623, %v6627
        %v6629 = vrot.slane %v6601, 4
        %v6630 = vsel %vm248, %v6625, %v6629
        %v6631 = vrot.slane %v6602, 4
        %v6632 = vsel %vm248, %v6627, %v6631
        %v6633 = vrot.slane %v6603, 4
        %v6634 = vsel %vm248, %v6629, %v6633
        %v6635 = vrot.slane %v6604, 4
        %v6636 = vsel %vm248, %v6631, %v6635
        %v6637 = vrot.slane %v6605, 4
        %v6638 = vsel %vm248, %v6633, %v6637
        %v6639 = vrot.slane %v6606, 4
        %v6640 = vsel %vm248, %v6635, %v6639
        %v6653 = vadd.f32 %v6581, %v6621
        %v6654 = vadd.f32 %v6582, %v6624
        %v6655 = vadd.f32 %v6583, %v6626
        %v6656 = vadd.f32 %v6584, %v6628
        %v6657 = vadd.f32 %v6585, %v6630
        %v6658 = vadd.f32 %v6586, %v6632
        %v6659 = vadd.f32 %v6587, %v6634
        %v6660 = vadd.f32 %v6588, %v6636
        %v6661 = vadd.f32 %v6589, %v6638
        %v6662 = vadd.f32 %v6590, %v6640
        %v6663 = vadd.f32 %v6591, %v6637
        %v6664 = vadd.f32 %v6592, %v6639
        %s6665 = sld [smem:[#allocation5 + $0x56]]
        %v6666 = vstv %s6665
        %v6667 = vmul.f32 %v539, %v6666
        %v6668 = vmul.f32 %v540, %v6666
        %v6669 = vmul.f32 %v541, %v6666
        %v6670 = vmul.f32 %v542, %v6666
        %v6671 = vmul.f32 %v543, %v6666
        %v6672 = vmul.f32 %v544, %v6666
        %v6673 = vmul.f32 %v545, %v6666
        %v6674 = vmul.f32 %v546, %v6666
        %v6675 = vmul.f32 %v547, %v6666
        %v6676 = vmul.f32 %v548, %v6666
        %v6677 = vmul.f32 %v549, %v6666
        %v6678 = vmul.f32 %v550, %v6666
        %v6679 = vmul.f32 %v551, %v6666
        %v6680 = vmul.f32 %v552, %v6666
        %v6695 = vrot.slane %v6667, 6
        %v6696 = vrot.slane %v6669, 6
        %v6697 = vsel %vm288, %v6695, %v6696
        %v6698 = vrot.slane %v6668, 6
        %v6699 = vrot.slane %v6670, 6
        %v6700 = vsel %vm288, %v6698, %v6699
        %v6701 = vrot.slane %v6671, 6
        %v6702 = vsel %vm288, %v6696, %v6701
        %v6703 = vrot.slane %v6672, 6
        %v6704 = vsel %vm288, %v6699, %v6703
        %v6705 = vrot.slane %v6673, 6
        %v6706 = vsel %vm288, %v6701, %v6705
        %v6707 = vrot.slane %v6674, 6
        %v6708 = vsel %vm288, %v6703, %v6707
        %v6709 = vrot.slane %v6675, 6
        %v6710 = vsel %vm288, %v6705, %v6709
        %v6711 = vrot.slane %v6676, 6
        %v6712 = vsel %vm288, %v6707, %v6711
        %v6713 = vrot.slane %v6677, 6
        %v6714 = vsel %vm288, %v6709, %v6713
        %v6715 = vrot.slane %v6678, 6
        %v6716 = vsel %vm288, %v6711, %v6715
        %v6717 = vrot.slane %v6679, 6
        %v6718 = vsel %vm288, %v6713, %v6717
        %v6719 = vrot.slane %v6680, 6
        %v6720 = vsel %vm288, %v6715, %v6719
        %v6733 = vadd.f32 %v6653, %v6697
        %v6734 = vadd.f32 %v6654, %v6700
        %v6735 = vadd.f32 %v6655, %v6702
        %v6736 = vadd.f32 %v6656, %v6704
        %v6737 = vadd.f32 %v6657, %v6706
        %v6738 = vadd.f32 %v6658, %v6708
        %v6739 = vadd.f32 %v6659, %v6710
        %v6740 = vadd.f32 %v6660, %v6712
        %v6741 = vadd.f32 %v6661, %v6714
        %v6742 = vadd.f32 %v6662, %v6716
        %v6743 = vadd.f32 %v6663, %v6718
        %v6744 = vadd.f32 %v6664, %v6720
        %s6745 = sld [smem:[#allocation5 + $0x61]]
        %v6746 = vstv %s6745
        %v6747 = vmul.f32 %v541, %v6746
        %v6748 = vmul.f32 %v542, %v6746
        %v6749 = vmul.f32 %v543, %v6746
        %v6750 = vmul.f32 %v544, %v6746
        %v6751 = vmul.f32 %v545, %v6746
        %v6752 = vmul.f32 %v546, %v6746
        %v6753 = vmul.f32 %v547, %v6746
        %v6754 = vmul.f32 %v548, %v6746
        %v6755 = vmul.f32 %v549, %v6746
        %v6756 = vmul.f32 %v550, %v6746
        %v6757 = vmul.f32 %v551, %v6746
        %v6758 = vmul.f32 %v552, %v6746
        %v6759 = vadd.f32 %v6733, %v6747
        %v6760 = vadd.f32 %v6734, %v6748
        %v6761 = vadd.f32 %v6735, %v6749
        %v6762 = vadd.f32 %v6736, %v6750
        %v6763 = vadd.f32 %v6737, %v6751
        %v6764 = vadd.f32 %v6738, %v6752
        %v6765 = vadd.f32 %v6739, %v6753
        %v6766 = vadd.f32 %v6740, %v6754
        %v6767 = vadd.f32 %v6741, %v6755
        %v6768 = vadd.f32 %v6742, %v6756
        %v6769 = vadd.f32 %v6743, %v6757
        %v6770 = vadd.f32 %v6744, %v6758
        %s6771 = sld [smem:[#allocation5 + $0x6c]]
        %v6772 = vstv %s6771
        %v6773 = vmul.f32 %v541, %v6772
        %v6774 = vmul.f32 %v542, %v6772
        %v6775 = vmul.f32 %v543, %v6772
        %v6776 = vmul.f32 %v544, %v6772
        %v6777 = vmul.f32 %v545, %v6772
        %v6778 = vmul.f32 %v546, %v6772
        %v6779 = vmul.f32 %v547, %v6772
        %v6780 = vmul.f32 %v548, %v6772
        %v6781 = vmul.f32 %v549, %v6772
        %v6782 = vmul.f32 %v550, %v6772
        %v6783 = vmul.f32 %v551, %v6772
        %v6784 = vmul.f32 %v552, %v6772
        %v6797 = vrot.slane %v6773, 2
        %v6798 = vrot.slane %v6775, 2
        %v6799 = vsel %vm210, %v6797, %v6798
        %v6800 = vrot.slane %v6774, 2
        %v6801 = vrot.slane %v6776, 2
        %v6802 = vsel %vm210, %v6800, %v6801
        %v6803 = vrot.slane %v6777, 2
        %v6804 = vsel %vm210, %v6798, %v6803
        %v6805 = vrot.slane %v6778, 2
        %v6806 = vsel %vm210, %v6801, %v6805
        %v6807 = vrot.slane %v6779, 2
        %v6808 = vsel %vm210, %v6803, %v6807
        %v6809 = vrot.slane %v6780, 2
        %v6810 = vsel %vm210, %v6805, %v6809
        %v6811 = vrot.slane %v6781, 2
        %v6812 = vsel %vm210, %v6807, %v6811
        %v6813 = vrot.slane %v6782, 2
        %v6814 = vsel %vm210, %v6809, %v6813
        %v6815 = vrot.slane %v6783, 2
        %v6816 = vsel %vm210, %v6811, %v6815
        %v6817 = vrot.slane %v6784, 2
        %v6818 = vsel %vm210, %v6813, %v6817
        %v6831 = vadd.f32 %v6759, %v6799
        %v6832 = vadd.f32 %v6760, %v6802
        %v6833 = vadd.f32 %v6761, %v6804
        %v6834 = vadd.f32 %v6762, %v6806
        %v6835 = vadd.f32 %v6763, %v6808
        %v6836 = vadd.f32 %v6764, %v6810
        %v6837 = vadd.f32 %v6765, %v6812
        %v6838 = vadd.f32 %v6766, %v6814
        %v6839 = vadd.f32 %v6767, %v6816
        %v6840 = vadd.f32 %v6768, %v6818
        %v6841 = vadd.f32 %v6769, %v6815
        %v6842 = vadd.f32 %v6770, %v6817
        %s6843 = sld [smem:[#allocation5 + $0x77]]
        %v6844 = vstv %s6843
        %v6845 = vmul.f32 %v541, %v6844
        %v6846 = vmul.f32 %v542, %v6844
        %v6847 = vmul.f32 %v543, %v6844
        %v6848 = vmul.f32 %v544, %v6844
        %v6849 = vmul.f32 %v545, %v6844
        %v6850 = vmul.f32 %v546, %v6844
        %v6851 = vmul.f32 %v547, %v6844
        %v6852 = vmul.f32 %v548, %v6844
        %v6853 = vmul.f32 %v549, %v6844
        %v6854 = vmul.f32 %v550, %v6844
        %v6855 = vmul.f32 %v551, %v6844
        %v6856 = vmul.f32 %v552, %v6844
        %v6869 = vrot.slane %v6845, 4
        %v6870 = vrot.slane %v6847, 4
        %v6871 = vsel %vm248, %v6869, %v6870
        %v6872 = vrot.slane %v6846, 4
        %v6873 = vrot.slane %v6848, 4
        %v6874 = vsel %vm248, %v6872, %v6873
        %v6875 = vrot.slane %v6849, 4
        %v6876 = vsel %vm248, %v6870, %v6875
        %v6877 = vrot.slane %v6850, 4
        %v6878 = vsel %vm248, %v6873, %v6877
        %v6879 = vrot.slane %v6851, 4
        %v6880 = vsel %vm248, %v6875, %v6879
        %v6881 = vrot.slane %v6852, 4
        %v6882 = vsel %vm248, %v6877, %v6881
        %v6883 = vrot.slane %v6853, 4
        %v6884 = vsel %vm248, %v6879, %v6883
        %v6885 = vrot.slane %v6854, 4
        %v6886 = vsel %vm248, %v6881, %v6885
        %v6887 = vrot.slane %v6855, 4
        %v6888 = vsel %vm248, %v6883, %v6887
        %v6889 = vrot.slane %v6856, 4
        %v6890 = vsel %vm248, %v6885, %v6889
        %v6903 = vadd.f32 %v6831, %v6871
        %v6904 = vadd.f32 %v6832, %v6874
        %v6905 = vadd.f32 %v6833, %v6876
        %v6906 = vadd.f32 %v6834, %v6878
        %v6907 = vadd.f32 %v6835, %v6880
        %v6908 = vadd.f32 %v6836, %v6882
        %v6909 = vadd.f32 %v6837, %v6884
        %v6910 = vadd.f32 %v6838, %v6886
        %v6911 = vadd.f32 %v6839, %v6888
        %v6912 = vadd.f32 %v6840, %v6890
        %v6913 = vadd.f32 %v6841, %v6887
        %v6914 = vadd.f32 %v6842, %v6889
        %6927 = vrot.lane.b32.xlu0 %v6903, 110
        %v6928 = vpop.permute.xlu0 %6927
        %6929 = vrot.lane.b32.xlu0 %v6904, 110
        %v6930 = vpop.permute.xlu0 %6929
        %6931 = vrot.lane.b32.xlu0 %v6905, 110
        %v6932 = vpop.permute.xlu0 %6931
        %6933 = vrot.lane.b32.xlu0 %v6906, 110
        %v6934 = vpop.permute.xlu0 %6933
        %6935 = vrot.lane.b32.xlu0 %v6907, 110
        %v6936 = vpop.permute.xlu0 %6935
        %6937 = vrot.lane.b32.xlu0 %v6908, 110
        %v6938 = vpop.permute.xlu0 %6937
        %6939 = vrot.lane.b32.xlu0 %v6909, 110
        %v6940 = vpop.permute.xlu0 %6939
        %6941 = vrot.lane.b32.xlu0 %v6910, 110
        %v6942 = vpop.permute.xlu0 %6941
        %6943 = vrot.lane.b32.xlu0 %v6911, 110
        %v6944 = vpop.permute.xlu0 %6943
        %6945 = vrot.lane.b32.xlu0 %v6912, 110
        %v6946 = vpop.permute.xlu0 %6945
        %6947 = vrot.lane.b32.xlu0 %v6913, 110
        %v6948 = vpop.permute.xlu0 %6947
        %6949 = vrot.lane.b32.xlu0 %v6914, 110
        %v6950 = vpop.permute.xlu0 %6949
        %vm6951 = vcmask 900096
        %v6952 = vsel %vm6951, %v6928, %v6930
        %v6953 = vsel %vm6951, %v6932, %v6934
        %v6954 = vsel %vm6951, %v6936, %v6938
        %v6955 = vsel %vm6951, %v6940, %v6942
        %v6956 = vsel %vm6951, %v6944, %v6946
        %v6957 = vsel %vm6951, %v6948, %v6950
        %v6964 = vadd.f32 %v6251, %v6952
        %v6965 = vadd.f32 %v6252, %v6953
        %v6966 = vadd.f32 %v6253, %v6954
        %v6967 = vadd.f32 %v6254, %v6955
        %v6968 = vadd.f32 %v6255, %v6956
        %v6969 = vadd.f32 %v6256, %v6957
        %s6970 = sld [smem:[#allocation5 + $0xa]]
        %v6971 = vstv %s6970
        %v6972 = vmul.f32 %v537, %v6971
        %v6973 = vmul.f32 %v538, %v6971
        %v6974 = vmul.f32 %v539, %v6971
        %v6975 = vmul.f32 %v540, %v6971
        %v6976 = vmul.f32 %v541, %v6971
        %v6977 = vmul.f32 %v542, %v6971
        %v6978 = vmul.f32 %v543, %v6971
        %v6979 = vmul.f32 %v544, %v6971
        %v6980 = vmul.f32 %v545, %v6971
        %v6981 = vmul.f32 %v546, %v6971
        %v6982 = vmul.f32 %v547, %v6971
        %v6983 = vmul.f32 %v548, %v6971
        %s6984 = sld [smem:[#allocation5 + $0x15]]
        %v6985 = vstv %s6984
        %v6986 = vmul.f32 %v537, %v6985
        %v6987 = vmul.f32 %v538, %v6985
        %v6988 = vmul.f32 %v539, %v6985
        %v6989 = vmul.f32 %v540, %v6985
        %v6990 = vmul.f32 %v541, %v6985
        %v6991 = vmul.f32 %v542, %v6985
        %v6992 = vmul.f32 %v543, %v6985
        %v6993 = vmul.f32 %v544, %v6985
        %v6994 = vmul.f32 %v545, %v6985
        %v6995 = vmul.f32 %v546, %v6985
        %v6996 = vmul.f32 %v547, %v6985
        %v6997 = vmul.f32 %v548, %v6985
        %v7010 = vrot.slane %v6986, 2
        %v7011 = vrot.slane %v6988, 2
        %v7012 = vsel %vm210, %v7010, %v7011
        %v7013 = vrot.slane %v6987, 2
        %v7014 = vrot.slane %v6989, 2
        %v7015 = vsel %vm210, %v7013, %v7014
        %v7016 = vrot.slane %v6990, 2
        %v7017 = vsel %vm210, %v7011, %v7016
        %v7018 = vrot.slane %v6991, 2
        %v7019 = vsel %vm210, %v7014, %v7018
        %v7020 = vrot.slane %v6992, 2
        %v7021 = vsel %vm210, %v7016, %v7020
        %v7022 = vrot.slane %v6993, 2
        %v7023 = vsel %vm210, %v7018, %v7022
        %v7024 = vrot.slane %v6994, 2
        %v7025 = vsel %vm210, %v7020, %v7024
        %v7026 = vrot.slane %v6995, 2
        %v7027 = vsel %vm210, %v7022, %v7026
        %v7028 = vrot.slane %v6996, 2
        %v7029 = vsel %vm210, %v7024, %v7028
        %v7030 = vrot.slane %v6997, 2
        %v7031 = vsel %vm210, %v7026, %v7030
        %v7044 = vadd.f32 %v6972, %v7012
        %v7045 = vadd.f32 %v6973, %v7015
        %v7046 = vadd.f32 %v6974, %v7017
        %v7047 = vadd.f32 %v6975, %v7019
        %v7048 = vadd.f32 %v6976, %v7021
        %v7049 = vadd.f32 %v6977, %v7023
        %v7050 = vadd.f32 %v6978, %v7025
        %v7051 = vadd.f32 %v6979, %v7027
        %v7052 = vadd.f32 %v6980, %v7029
        %v7053 = vadd.f32 %v6981, %v7031
        %v7054 = vadd.f32 %v6982, %v7028
        %v7055 = vadd.f32 %v6983, %v7030
        %s7056 = sld [smem:[#allocation5 + $0x20]]
        %v7057 = vstv %s7056
        %v7058 = vmul.f32 %v537, %v7057
        %v7059 = vmul.f32 %v538, %v7057
        %v7060 = vmul.f32 %v539, %v7057
        %v7061 = vmul.f32 %v540, %v7057
        %v7062 = vmul.f32 %v541, %v7057
        %v7063 = vmul.f32 %v542, %v7057
        %v7064 = vmul.f32 %v543, %v7057
        %v7065 = vmul.f32 %v544, %v7057
        %v7066 = vmul.f32 %v545, %v7057
        %v7067 = vmul.f32 %v546, %v7057
        %v7068 = vmul.f32 %v547, %v7057
        %v7069 = vmul.f32 %v548, %v7057
        %v7082 = vrot.slane %v7058, 4
        %v7083 = vrot.slane %v7060, 4
        %v7084 = vsel %vm248, %v7082, %v7083
        %v7085 = vrot.slane %v7059, 4
        %v7086 = vrot.slane %v7061, 4
        %v7087 = vsel %vm248, %v7085, %v7086
        %v7088 = vrot.slane %v7062, 4
        %v7089 = vsel %vm248, %v7083, %v7088
        %v7090 = vrot.slane %v7063, 4
        %v7091 = vsel %vm248, %v7086, %v7090
        %v7092 = vrot.slane %v7064, 4
        %v7093 = vsel %vm248, %v7088, %v7092
        %v7094 = vrot.slane %v7065, 4
        %v7095 = vsel %vm248, %v7090, %v7094
        %v7096 = vrot.slane %v7066, 4
        %v7097 = vsel %vm248, %v7092, %v7096
        %v7098 = vrot.slane %v7067, 4
        %v7099 = vsel %vm248, %v7094, %v7098
        %v7100 = vrot.slane %v7068, 4
        %v7101 = vsel %vm248, %v7096, %v7100
        %v7102 = vrot.slane %v7069, 4
        %v7103 = vsel %vm248, %v7098, %v7102
        %v7116 = vadd.f32 %v7044, %v7084
        %v7117 = vadd.f32 %v7045, %v7087
        %v7118 = vadd.f32 %v7046, %v7089
        %v7119 = vadd.f32 %v7047, %v7091
        %v7120 = vadd.f32 %v7048, %v7093
        %v7121 = vadd.f32 %v7049, %v7095
        %v7122 = vadd.f32 %v7050, %v7097
        %v7123 = vadd.f32 %v7051, %v7099
        %v7124 = vadd.f32 %v7052, %v7101
        %v7125 = vadd.f32 %v7053, %v7103
        %v7126 = vadd.f32 %v7054, %v7100
        %v7127 = vadd.f32 %v7055, %v7102
        %s7128 = sld [smem:[#allocation5 + $0x2b]]
        %v7129 = vstv %s7128
        %v7130 = vmul.f32 %v537, %v7129
        %v7131 = vmul.f32 %v538, %v7129
        %v7132 = vmul.f32 %v539, %v7129
        %v7133 = vmul.f32 %v540, %v7129
        %v7134 = vmul.f32 %v541, %v7129
        %v7135 = vmul.f32 %v542, %v7129
        %v7136 = vmul.f32 %v543, %v7129
        %v7137 = vmul.f32 %v544, %v7129
        %v7138 = vmul.f32 %v545, %v7129
        %v7139 = vmul.f32 %v546, %v7129
        %v7140 = vmul.f32 %v547, %v7129
        %v7141 = vmul.f32 %v548, %v7129
        %v7142 = vmul.f32 %v549, %v7129
        %v7143 = vmul.f32 %v550, %v7129
        %v7158 = vrot.slane %v7130, 6
        %v7159 = vrot.slane %v7132, 6
        %v7160 = vsel %vm288, %v7158, %v7159
        %v7161 = vrot.slane %v7131, 6
        %v7162 = vrot.slane %v7133, 6
        %v7163 = vsel %vm288, %v7161, %v7162
        %v7164 = vrot.slane %v7134, 6
        %v7165 = vsel %vm288, %v7159, %v7164
        %v7166 = vrot.slane %v7135, 6
        %v7167 = vsel %vm288, %v7162, %v7166
        %v7168 = vrot.slane %v7136, 6
        %v7169 = vsel %vm288, %v7164, %v7168
        %v7170 = vrot.slane %v7137, 6
        %v7171 = vsel %vm288, %v7166, %v7170
        %v7172 = vrot.slane %v7138, 6
        %v7173 = vsel %vm288, %v7168, %v7172
        %v7174 = vrot.slane %v7139, 6
        %v7175 = vsel %vm288, %v7170, %v7174
        %v7176 = vrot.slane %v7140, 6
        %v7177 = vsel %vm288, %v7172, %v7176
        %v7178 = vrot.slane %v7141, 6
        %v7179 = vsel %vm288, %v7174, %v7178
        %v7180 = vrot.slane %v7142, 6
        %v7181 = vsel %vm288, %v7176, %v7180
        %v7182 = vrot.slane %v7143, 6
        %v7183 = vsel %vm288, %v7178, %v7182
        %v7196 = vadd.f32 %v7116, %v7160
        %v7197 = vadd.f32 %v7117, %v7163
        %v7198 = vadd.f32 %v7118, %v7165
        %v7199 = vadd.f32 %v7119, %v7167
        %v7200 = vadd.f32 %v7120, %v7169
        %v7201 = vadd.f32 %v7121, %v7171
        %v7202 = vadd.f32 %v7122, %v7173
        %v7203 = vadd.f32 %v7123, %v7175
        %v7204 = vadd.f32 %v7124, %v7177
        %v7205 = vadd.f32 %v7125, %v7179
        %v7206 = vadd.f32 %v7126, %v7181
        %v7207 = vadd.f32 %v7127, %v7183
        %s7208 = sld [smem:[#allocation5 + $0x36]]
        %v7209 = vstv %s7208
        %v7210 = vmul.f32 %v539, %v7209
        %v7211 = vmul.f32 %v540, %v7209
        %v7212 = vmul.f32 %v541, %v7209
        %v7213 = vmul.f32 %v542, %v7209
        %v7214 = vmul.f32 %v543, %v7209
        %v7215 = vmul.f32 %v544, %v7209
        %v7216 = vmul.f32 %v545, %v7209
        %v7217 = vmul.f32 %v546, %v7209
        %v7218 = vmul.f32 %v547, %v7209
        %v7219 = vmul.f32 %v548, %v7209
        %v7220 = vmul.f32 %v549, %v7209
        %v7221 = vmul.f32 %v550, %v7209
        %v7222 = vadd.f32 %v7196, %v7210
        %v7223 = vadd.f32 %v7197, %v7211
        %v7224 = vadd.f32 %v7198, %v7212
        %v7225 = vadd.f32 %v7199, %v7213
        %v7226 = vadd.f32 %v7200, %v7214
        %v7227 = vadd.f32 %v7201, %v7215
        %v7228 = vadd.f32 %v7202, %v7216
        %v7229 = vadd.f32 %v7203, %v7217
        %v7230 = vadd.f32 %v7204, %v7218
        %v7231 = vadd.f32 %v7205, %v7219
        %v7232 = vadd.f32 %v7206, %v7220
        %v7233 = vadd.f32 %v7207, %v7221
        %s7234 = sld [smem:[#allocation5 + $0x41]]
        %v7235 = vstv %s7234
        %v7236 = vmul.f32 %v539, %v7235
        %v7237 = vmul.f32 %v540, %v7235
        %v7238 = vmul.f32 %v541, %v7235
        %v7239 = vmul.f32 %v542, %v7235
        %v7240 = vmul.f32 %v543, %v7235
        %v7241 = vmul.f32 %v544, %v7235
        %v7242 = vmul.f32 %v545, %v7235
        %v7243 = vmul.f32 %v546, %v7235
        %v7244 = vmul.f32 %v547, %v7235
        %v7245 = vmul.f32 %v548, %v7235
        %v7246 = vmul.f32 %v549, %v7235
        %v7247 = vmul.f32 %v550, %v7235
        %v7260 = vrot.slane %v7236, 2
        %v7261 = vrot.slane %v7238, 2
        %v7262 = vsel %vm210, %v7260, %v7261
        %v7263 = vrot.slane %v7237, 2
        %v7264 = vrot.slane %v7239, 2
        %v7265 = vsel %vm210, %v7263, %v7264
        %v7266 = vrot.slane %v7240, 2
        %v7267 = vsel %vm210, %v7261, %v7266
        %v7268 = vrot.slane %v7241, 2
        %v7269 = vsel %vm210, %v7264, %v7268
        %v7270 = vrot.slane %v7242, 2
        %v7271 = vsel %vm210, %v7266, %v7270
        %v7272 = vrot.slane %v7243, 2
        %v7273 = vsel %vm210, %v7268, %v7272
        %v7274 = vrot.slane %v7244, 2
        %v7275 = vsel %vm210, %v7270, %v7274
        %v7276 = vrot.slane %v7245, 2
        %v7277 = vsel %vm210, %v7272, %v7276
        %v7278 = vrot.slane %v7246, 2
        %v7279 = vsel %vm210, %v7274, %v7278
        %v7280 = vrot.slane %v7247, 2
        %v7281 = vsel %vm210, %v7276, %v7280
        %v7294 = vadd.f32 %v7222, %v7262
        %v7295 = vadd.f32 %v7223, %v7265
        %v7296 = vadd.f32 %v7224, %v7267
        %v7297 = vadd.f32 %v7225, %v7269
        %v7298 = vadd.f32 %v7226, %v7271
        %v7299 = vadd.f32 %v7227, %v7273
        %v7300 = vadd.f32 %v7228, %v7275
        %v7301 = vadd.f32 %v7229, %v7277
        %v7302 = vadd.f32 %v7230, %v7279
        %v7303 = vadd.f32 %v7231, %v7281
        %v7304 = vadd.f32 %v7232, %v7278
        %v7305 = vadd.f32 %v7233, %v7280
        %s7306 = sld [smem:[#allocation5 + $0x4c]]
        %v7307 = vstv %s7306
        %v7308 = vmul.f32 %v539, %v7307
        %v7309 = vmul.f32 %v540, %v7307
        %v7310 = vmul.f32 %v541, %v7307
        %v7311 = vmul.f32 %v542, %v7307
        %v7312 = vmul.f32 %v543, %v7307
        %v7313 = vmul.f32 %v544, %v7307
        %v7314 = vmul.f32 %v545, %v7307
        %v7315 = vmul.f32 %v546, %v7307
        %v7316 = vmul.f32 %v547, %v7307
        %v7317 = vmul.f32 %v548, %v7307
        %v7318 = vmul.f32 %v549, %v7307
        %v7319 = vmul.f32 %v550, %v7307
        %v7332 = vrot.slane %v7308, 4
        %v7333 = vrot.slane %v7310, 4
        %v7334 = vsel %vm248, %v7332, %v7333
        %v7335 = vrot.slane %v7309, 4
        %v7336 = vrot.slane %v7311, 4
        %v7337 = vsel %vm248, %v7335, %v7336
        %v7338 = vrot.slane %v7312, 4
        %v7339 = vsel %vm248, %v7333, %v7338
        %v7340 = vrot.slane %v7313, 4
        %v7341 = vsel %vm248, %v7336, %v7340
        %v7342 = vrot.slane %v7314, 4
        %v7343 = vsel %vm248, %v7338, %v7342
        %v7344 = vrot.slane %v7315, 4
        %v7345 = vsel %vm248, %v7340, %v7344
        %v7346 = vrot.slane %v7316, 4
        %v7347 = vsel %vm248, %v7342, %v7346
        %v7348 = vrot.slane %v7317, 4
        %v7349 = vsel %vm248, %v7344, %v7348
        %v7350 = vrot.slane %v7318, 4
        %v7351 = vsel %vm248, %v7346, %v7350
        %v7352 = vrot.slane %v7319, 4
        %v7353 = vsel %vm248, %v7348, %v7352
        %v7366 = vadd.f32 %v7294, %v7334
        %v7367 = vadd.f32 %v7295, %v7337
        %v7368 = vadd.f32 %v7296, %v7339
        %v7369 = vadd.f32 %v7297, %v7341
        %v7370 = vadd.f32 %v7298, %v7343
        %v7371 = vadd.f32 %v7299, %v7345
        %v7372 = vadd.f32 %v7300, %v7347
        %v7373 = vadd.f32 %v7301, %v7349
        %v7374 = vadd.f32 %v7302, %v7351
        %v7375 = vadd.f32 %v7303, %v7353
        %v7376 = vadd.f32 %v7304, %v7350
        %v7377 = vadd.f32 %v7305, %v7352
        %s7378 = sld [smem:[#allocation5 + $0x57]]
        %v7379 = vstv %s7378
        %v7380 = vmul.f32 %v539, %v7379
        %v7381 = vmul.f32 %v540, %v7379
        %v7382 = vmul.f32 %v541, %v7379
        %v7383 = vmul.f32 %v542, %v7379
        %v7384 = vmul.f32 %v543, %v7379
        %v7385 = vmul.f32 %v544, %v7379
        %v7386 = vmul.f32 %v545, %v7379
        %v7387 = vmul.f32 %v546, %v7379
        %v7388 = vmul.f32 %v547, %v7379
        %v7389 = vmul.f32 %v548, %v7379
        %v7390 = vmul.f32 %v549, %v7379
        %v7391 = vmul.f32 %v550, %v7379
        %v7392 = vmul.f32 %v551, %v7379
        %v7393 = vmul.f32 %v552, %v7379
        %v7408 = vrot.slane %v7380, 6
        %v7409 = vrot.slane %v7382, 6
        %v7410 = vsel %vm288, %v7408, %v7409
        %v7411 = vrot.slane %v7381, 6
        %v7412 = vrot.slane %v7383, 6
        %v7413 = vsel %vm288, %v7411, %v7412
        %v7414 = vrot.slane %v7384, 6
        %v7415 = vsel %vm288, %v7409, %v7414
        %v7416 = vrot.slane %v7385, 6
        %v7417 = vsel %vm288, %v7412, %v7416
        %v7418 = vrot.slane %v7386, 6
        %v7419 = vsel %vm288, %v7414, %v7418
        %v7420 = vrot.slane %v7387, 6
        %v7421 = vsel %vm288, %v7416, %v7420
        %v7422 = vrot.slane %v7388, 6
        %v7423 = vsel %vm288, %v7418, %v7422
        %v7424 = vrot.slane %v7389, 6
        %v7425 = vsel %vm288, %v7420, %v7424
        %v7426 = vrot.slane %v7390, 6
        %v7427 = vsel %vm288, %v7422, %v7426
        %v7428 = vrot.slane %v7391, 6
        %v7429 = vsel %vm288, %v7424, %v7428
        %v7430 = vrot.slane %v7392, 6
        %v7431 = vsel %vm288, %v7426, %v7430
        %v7432 = vrot.slane %v7393, 6
        %v7433 = vsel %vm288, %v7428, %v7432
        %v7446 = vadd.f32 %v7366, %v7410
        %v7447 = vadd.f32 %v7367, %v7413
        %v7448 = vadd.f32 %v7368, %v7415
        %v7449 = vadd.f32 %v7369, %v7417
        %v7450 = vadd.f32 %v7370, %v7419
        %v7451 = vadd.f32 %v7371, %v7421
        %v7452 = vadd.f32 %v7372, %v7423
        %v7453 = vadd.f32 %v7373, %v7425
        %v7454 = vadd.f32 %v7374, %v7427
        %v7455 = vadd.f32 %v7375, %v7429
        %v7456 = vadd.f32 %v7376, %v7431
        %v7457 = vadd.f32 %v7377, %v7433
        %s7458 = sld [smem:[#allocation5 + $0x62]]
        %v7459 = vstv %s7458
        %v7460 = vmul.f32 %v541, %v7459
        %v7461 = vmul.f32 %v542, %v7459
        %v7462 = vmul.f32 %v543, %v7459
        %v7463 = vmul.f32 %v544, %v7459
        %v7464 = vmul.f32 %v545, %v7459
        %v7465 = vmul.f32 %v546, %v7459
        %v7466 = vmul.f32 %v547, %v7459
        %v7467 = vmul.f32 %v548, %v7459
        %v7468 = vmul.f32 %v549, %v7459
        %v7469 = vmul.f32 %v550, %v7459
        %v7470 = vmul.f32 %v551, %v7459
        %v7471 = vmul.f32 %v552, %v7459
        %v7472 = vadd.f32 %v7446, %v7460
        %v7473 = vadd.f32 %v7447, %v7461
        %v7474 = vadd.f32 %v7448, %v7462
        %v7475 = vadd.f32 %v7449, %v7463
        %v7476 = vadd.f32 %v7450, %v7464
        %v7477 = vadd.f32 %v7451, %v7465
        %v7478 = vadd.f32 %v7452, %v7466
        %v7479 = vadd.f32 %v7453, %v7467
        %v7480 = vadd.f32 %v7454, %v7468
        %v7481 = vadd.f32 %v7455, %v7469
        %v7482 = vadd.f32 %v7456, %v7470
        %v7483 = vadd.f32 %v7457, %v7471
        %s7484 = sld [smem:[#allocation5 + $0x6d]]
        %v7485 = vstv %s7484
        %v7486 = vmul.f32 %v541, %v7485
        %v7487 = vmul.f32 %v542, %v7485
        %v7488 = vmul.f32 %v543, %v7485
        %v7489 = vmul.f32 %v544, %v7485
        %v7490 = vmul.f32 %v545, %v7485
        %v7491 = vmul.f32 %v546, %v7485
        %v7492 = vmul.f32 %v547, %v7485
        %v7493 = vmul.f32 %v548, %v7485
        %v7494 = vmul.f32 %v549, %v7485
        %v7495 = vmul.f32 %v550, %v7485
        %v7496 = vmul.f32 %v551, %v7485
        %v7497 = vmul.f32 %v552, %v7485
        %v7510 = vrot.slane %v7486, 2
        %v7511 = vrot.slane %v7488, 2
        %v7512 = vsel %vm210, %v7510, %v7511
        %v7513 = vrot.slane %v7487, 2
        %v7514 = vrot.slane %v7489, 2
        %v7515 = vsel %vm210, %v7513, %v7514
        %v7516 = vrot.slane %v7490, 2
        %v7517 = vsel %vm210, %v7511, %v7516
        %v7518 = vrot.slane %v7491, 2
        %v7519 = vsel %vm210, %v7514, %v7518
        %v7520 = vrot.slane %v7492, 2
        %v7521 = vsel %vm210, %v7516, %v7520
        %v7522 = vrot.slane %v7493, 2
        %v7523 = vsel %vm210, %v7518, %v7522
        %v7524 = vrot.slane %v7494, 2
        %v7525 = vsel %vm210, %v7520, %v7524
        %v7526 = vrot.slane %v7495, 2
        %v7527 = vsel %vm210, %v7522, %v7526
        %v7528 = vrot.slane %v7496, 2
        %v7529 = vsel %vm210, %v7524, %v7528
        %v7530 = vrot.slane %v7497, 2
        %v7531 = vsel %vm210, %v7526, %v7530
        %v7544 = vadd.f32 %v7472, %v7512
        %v7545 = vadd.f32 %v7473, %v7515
        %v7546 = vadd.f32 %v7474, %v7517
        %v7547 = vadd.f32 %v7475, %v7519
        %v7548 = vadd.f32 %v7476, %v7521
        %v7549 = vadd.f32 %v7477, %v7523
        %v7550 = vadd.f32 %v7478, %v7525
        %v7551 = vadd.f32 %v7479, %v7527
        %v7552 = vadd.f32 %v7480, %v7529
        %v7553 = vadd.f32 %v7481, %v7531
        %v7554 = vadd.f32 %v7482, %v7528
        %v7555 = vadd.f32 %v7483, %v7530
        %s7556 = sld [smem:[#allocation5 + $0x78]]
        %v7557 = vstv %s7556
        %v7558 = vmul.f32 %v541, %v7557
        %v7559 = vmul.f32 %v542, %v7557
        %v7560 = vmul.f32 %v543, %v7557
        %v7561 = vmul.f32 %v544, %v7557
        %v7562 = vmul.f32 %v545, %v7557
        %v7563 = vmul.f32 %v546, %v7557
        %v7564 = vmul.f32 %v547, %v7557
        %v7565 = vmul.f32 %v548, %v7557
        %v7566 = vmul.f32 %v549, %v7557
        %v7567 = vmul.f32 %v550, %v7557
        %v7568 = vmul.f32 %v551, %v7557
        %v7569 = vmul.f32 %v552, %v7557
        %v7582 = vrot.slane %v7558, 4
        %v7583 = vrot.slane %v7560, 4
        %v7584 = vsel %vm248, %v7582, %v7583
        %v7585 = vrot.slane %v7559, 4
        %v7586 = vrot.slane %v7561, 4
        %v7587 = vsel %vm248, %v7585, %v7586
        %v7588 = vrot.slane %v7562, 4
        %v7589 = vsel %vm248, %v7583, %v7588
        %v7590 = vrot.slane %v7563, 4
        %v7591 = vsel %vm248, %v7586, %v7590
        %v7592 = vrot.slane %v7564, 4
        %v7593 = vsel %vm248, %v7588, %v7592
        %v7594 = vrot.slane %v7565, 4
        %v7595 = vsel %vm248, %v7590, %v7594
        %v7596 = vrot.slane %v7566, 4
        %v7597 = vsel %vm248, %v7592, %v7596
        %v7598 = vrot.slane %v7567, 4
        %v7599 = vsel %vm248, %v7594, %v7598
        %v7600 = vrot.slane %v7568, 4
        %v7601 = vsel %vm248, %v7596, %v7600
        %v7602 = vrot.slane %v7569, 4
        %v7603 = vsel %vm248, %v7598, %v7602
        %v7616 = vadd.f32 %v7544, %v7584
        %v7617 = vadd.f32 %v7545, %v7587
        %v7618 = vadd.f32 %v7546, %v7589
        %v7619 = vadd.f32 %v7547, %v7591
        %v7620 = vadd.f32 %v7548, %v7593
        %v7621 = vadd.f32 %v7549, %v7595
        %v7622 = vadd.f32 %v7550, %v7597
        %v7623 = vadd.f32 %v7551, %v7599
        %v7624 = vadd.f32 %v7552, %v7601
        %v7625 = vadd.f32 %v7553, %v7603
        %v7626 = vadd.f32 %v7554, %v7600
        %v7627 = vadd.f32 %v7555, %v7602
        %7640 = vrot.lane.b32.xlu0 %v7616, 108
        %v7641 = vpop.permute.xlu0 %7640
        %7642 = vrot.lane.b32.xlu0 %v7617, 108
        %v7643 = vpop.permute.xlu0 %7642
        %7644 = vrot.lane.b32.xlu0 %v7618, 108
        %v7645 = vpop.permute.xlu0 %7644
        %7646 = vrot.lane.b32.xlu0 %v7619, 108
        %v7647 = vpop.permute.xlu0 %7646
        %7648 = vrot.lane.b32.xlu0 %v7620, 108
        %v7649 = vpop.permute.xlu0 %7648
        %7650 = vrot.lane.b32.xlu0 %v7621, 108
        %v7651 = vpop.permute.xlu0 %7650
        %7652 = vrot.lane.b32.xlu0 %v7622, 108
        %v7653 = vpop.permute.xlu0 %7652
        %7654 = vrot.lane.b32.xlu0 %v7623, 108
        %v7655 = vpop.permute.xlu0 %7654
        %7656 = vrot.lane.b32.xlu0 %v7624, 108
        %v7657 = vpop.permute.xlu0 %7656
        %7658 = vrot.lane.b32.xlu0 %v7625, 108
        %v7659 = vpop.permute.xlu0 %7658
        %7660 = vrot.lane.b32.xlu0 %v7626, 108
        %v7661 = vpop.permute.xlu0 %7660
        %7662 = vrot.lane.b32.xlu0 %v7627, 108
        %v7663 = vpop.permute.xlu0 %7662
        %vm7664 = vcmask 883712
        %v7665 = vsel %vm7664, %v7641, %v7643
        %v7666 = vsel %vm7664, %v7645, %v7647
        %v7667 = vsel %vm7664, %v7649, %v7651
        %v7668 = vsel %vm7664, %v7653, %v7655
        %v7669 = vsel %vm7664, %v7657, %v7659
        %v7670 = vsel %vm7664, %v7661, %v7663
        %v7677 = vadd.f32 %v6964, %v7665
        %v7678 = vadd.f32 %v6965, %v7666
        %v7679 = vadd.f32 %v6966, %v7667
        %v7680 = vadd.f32 %v6967, %v7668
        %v7681 = vadd.f32 %v6968, %v7669
        %v7682 = vadd.f32 %v6969, %v7670
        %v7683 = vtanh.pop %v7677
        %v7684 = vtanh.pop %v7678
        %v7685 = vtanh.pop %v7679
        %v7686 = vtanh.pop %v7680
        %v7687 = vtanh.pop %v7681
        %v7688 = vtanh.pop %v7682
        %7689 = vst [vmem:[%s179] sm:$0xff] %v7683
        %7690 = vst [vmem:[%s179 + $0x8] sm:$0xff] %v7684
        %7691 = vst [vmem:[%s179 + $0x10] sm:$0xff] %v7685
        %7692 = vst [vmem:[%s179 + $0x18] sm:$0xff] %v7686
        %7693 = vst [vmem:[%s179 + $0x20] sm:$0xff] %v7687
        %7694 = vst [vmem:[%s179 + $0x28] sm:$0xf] %v7688
        %p7695 = scmp.lt.s32.totalorder %s17, 1
        %s7696 = scalar_select %p7695, %s17, 1
        %s7697 = smul.addr %s7696, 6
        %s7698 = smul.addr %s7697, 8
        %s7699 = scalar_lea.vmem %s2, %s7698
        // Predicated region
        $region37: #{tpu_custom_call.1} parent=27 // pred_check
          %p7700 = pneg %p82
        $region38: #{tpu_custom_call.1} parent=27 // pred_check_branch
          %7702 = sbr.rel (%p7700) target = $region40
        $region39: #{tpu_custom_call.1} parent=27 // pred_region
          _
        $region40: #{tpu_custom_call.1} parent=27 // pred_fallthru
          _
      $region28: #{tpu_custom_call.1} parent=5 // pred_fallthru
        _
      %p7703 = scmp.le.s32.totalorder 2, %s12
      // Predicated region
      $region41: #{tpu_custom_call.1} parent=5 // pred_check
        %p7704 = pneg %p7703
      $region42: #{tpu_custom_call.1} parent=5 // pred_check_branch
        %7706 = sbr.rel (%p7704) target = $region44
      $region43: #{tpu_custom_call.1} parent=5 // pred_region
        %s7707 = ssub.s32 %s12, 2
        // Predicated region
        $region45: #{tpu_custom_call.1} parent=43 // pred_check
          %p7708 = pneg %p88
        $region46: #{tpu_custom_call.1} parent=43 // pred_check_branch
          %7710 = sbr.rel (%p7708) target = $region48
        $region47: #{tpu_custom_call.1} parent=43 // pred_region
          %p7711 = scmp.lt.s32.totalorder %s18, 1
          %s7712 = scalar_select %p7711, %s18, 1
          %s7713 = smul.addr %s7712, 6
          %s7714 = smul.addr %s7713, 8
          %s7715 = scalar_lea.vmem %s2, %s7714
        $region48: #{tpu_custom_call.1} parent=43 // pred_fallthru
          _
      $region44: #{tpu_custom_call.1} parent=5 // pred_fallthru
        _
    $region6: #{tpu_custom_call.1} parent=1 // loop_footer
      %s16 = sadd.s32 1, %s12
    $region7: #{tpu_custom_call.1} parent=1 // loop_footer_branch
      %11 = sbr.rel target = $region3
    $region8: #{tpu_custom_call.1} parent=1 // loop_exit
      _
    %7716 = vsyncpa [#allocation3], 1
    %s7717 = scalar_lea.sflag [#allocation3], 1
    %7718 = vsyncpa %s7717, 1
    %7719 = vsyncpa [#allocation4], 1
    %s7720 = scalar_lea.sflag [#allocation4], 1
    %7721 = vsyncpa %s7720, 1

</llo_original>
